<compile_context>
chip_gen: v7x
topology: tpu7x:2x2x1
jax: 0.10.0
libtpu: 0.0.40
codegen_flags: <defaults>
</compile_context>

<pallas_src>
import functools

import jax
import jax.numpy as jnp
from jax.experimental import pallas as pl
from jax.experimental.pallas import tpu as pltpu

_LANE = 128


def _round_up(x, m):
    return (x + m - 1) // m * m


def _pick_tile_n(n, max_tile=4096):
    """Lane-dim tile for an n that is a multiple of 128: largest multiple of
    128 that divides n exactly, <= max_tile, preferring >= 2 grid steps so
    both v7x TensorCores get work."""
    cands = [t for t in range(_LANE, min(n, max_tile) + 1, _LANE) if n % t == 0]
    if not cands:
        return n
    multi = [t for t in cands if t < n]
    return max(multi) if multi else max(cands)


def _vmem_limit(block_bytes):
    """Scoped-VMEM limit with headroom for double-buffered pipeline blocks.
    Capped at 48 MiB (safe under v7x's 64 MiB physical)."""
    return int(min(max(4 * block_bytes + (8 << 20), 24 << 20), 48 << 20))


# ---------------------------------------------------------------------------
# Pallas kernels (channel-first: sublanes = channels, lanes = flattened grid)
# ---------------------------------------------------------------------------
def _cf_linear_kernel(x_ref, w_ref, b_ref, o_ref, *, relu):
    # o = [relu](W @ x + b);  x:(Cin,Tn) (bf16 or f32)  W:(Cout,Cin)  b:(Cout,1)
    x = x_ref[...].astype(jnp.float32)
    y = jnp.dot(w_ref[...], x, preferred_element_type=jnp.float32)
    y = y + b_ref[...]
    if relu:
        y = jnp.maximum(y, 0.0)
    o_ref[...] = y.astype(o_ref.dtype)


def _cf_res_linear_relu_kernel(spec_ref, x_ref, w_ref, b_ref, o_ref):
    # o = relu( spectral_conv(x) + W_1x1 @ x + b )   (the FNO block body)
    x = x_ref[...].astype(jnp.float32)
    y = jnp.dot(w_ref[...], x, preferred_element_type=jnp.float32)
    y = y + b_ref[...] + spec_ref[...]
    o_ref[...] = jnp.maximum(y, 0.0).astype(o_ref.dtype)


def _cf_mlp_kernel(x_ref, w1_ref, b1_ref, w2_ref, b2_ref, o_ref):
    # fused fc1 + fc2:  h = relu(W1 @ x + b1) ;  o = W2 @ h + b2
    x = x_ref[...].astype(jnp.float32)
    h = jnp.dot(w1_ref[...], x, preferred_element_type=jnp.float32)
    h = jnp.maximum(h + b1_ref[...], 0.0)
    y = jnp.dot(w2_ref[...], h, preferred_element_type=jnp.float32)
    o_ref[...] = (y + b2_ref[...]).astype(o_ref.dtype)


def _spectral_kernel(x_ref, w_ref, o_ref, *, cin):
    # Complex per-mode channel mixing on the VPU (per-mode matrices are tiny;
    # the MXU would be pure issue/drain overhead).  Lane dim = B*M (lane-dense),
    # real/imag stacked on the leading axis, Cout tiled by the grid.
    #   out[o, n] = sum_i x[i, n] * w[i, o, n]   (complex, n = b*M + m)
    xr = x_ref[0]                       # (Cin, Tn)
    xi = x_ref[1]
    wr = w_ref[0]                       # (Cin, Tc, Tn)
    wi = w_ref[1]
    acc_r = jnp.zeros(o_ref.shape[1:], jnp.float32)   # (Tc, Tn)
    acc_i = jnp.zeros(o_ref.shape[1:], jnp.float32)
    for i in range(cin):                # static, fully unrolled
        xri = xr[i:i + 1, :]            # (1, Tn)
        xii = xi[i:i + 1, :]
        acc_r = acc_r + xri * wr[i] - xii * wi[i]
        acc_i = acc_i + xri * wi[i] + xii * wr[i]
    o_ref[0] = acc_r
    o_ref[1] = acc_i


# ---------------------------------------------------------------------------
# Wrappers
# ---------------------------------------------------------------------------
def pallas_cf_linear(x, wt, b, *, relu=False, residual=None,
                     out_dtype=jnp.bfloat16):
    """y = relu?( residual? + W @ x + b ), lanes (flattened grid) tiled.

    x: (Cin, N), wt: (Cout, Cin), b: (Cout, 1), residual: (Cout, N) f32 or None.
    If `residual` is given, ReLU is always applied (FNO block semantics).
    N is padded up to a multiple of 128 (result sliced back) so there is never
    a full-extent fallback block.
    """
    cin, n = x.shape
    cout = wt.shape[0]
    n_pad = _round_up(n, _LANE)
    if n_pad != n:
        x = jnp.pad(x, ((0, 0), (0, n_pad - n)))
        if residual is not None:
            residual = jnp.pad(residual, ((0, 0), (0, n_pad - n)))
    tile_n = _pick_tile_n(n_pad, max_tile=4096)
    grid = (n_pad // tile_n,)

    x_spec = pl.BlockSpec((cin, tile_n), lambda i: (0, i))
    o_spec = pl.BlockSpec((cout, tile_n), lambda i: (0, i))
    w_spec = pl.BlockSpec((cout, cin), lambda i: (0, 0))
    b_spec = pl.BlockSpec((cout, 1), lambda i: (0, 0))

    block_bytes = (cin * tile_n * x.dtype.itemsize
                   + cout * tile_n * jnp.dtype(out_dtype).itemsize
                   + cout * cin * 4 + cout * 4)
    io_aliases = {}
    if residual is None:
        kernel = functools.partial(_cf_linear_kernel, relu=relu)
        in_specs = [x_spec, w_spec, b_spec]
        args = (x, wt, b)
    else:
        kernel = _cf_res_linear_relu_kernel
        in_specs = [o_spec, x_spec, w_spec, b_spec]
        args = (residual, x, wt, b)
        block_bytes += cout * tile_n * residual.dtype.itemsize
        # Alias the bf16 activation slab into the output slab (same shape,
        # dtype and block specs) -> no extra (width, N) HBM allocation/layer.
        if cin == cout and x.dtype == jnp.dtype(out_dtype):
            io_aliases = {1: 0}

    out = pl.pallas_call(
        kernel,
        out_shape=jax.ShapeDtypeStruct((cout, n_pad), out_dtype),
        grid=grid,
        in_specs=in_specs,
        out_specs=o_spec,
        input_output_aliases=io_aliases,
        compiler_params=pltpu.CompilerParams(
            dimension_semantics=("parallel",),
            vmem_limit_bytes=_vmem_limit(block_bytes)),
    )(*args)
    return out if n_pad == n else out[:, :n]


def pallas_cf_mlp(x, w1t, b1, w2t, b2):
    """Fused fc1+fc2 per lane tile:  h = relu(W1@x + b1);  o = W2@h + b2."""
    cin, n = x.shape
    hid = w1t.shape[0]
    cout = w2t.shape[0]
    n_pad = _round_up(n, _LANE)
    if n_pad != n:
        x = jnp.pad(x, ((0, 0), (0, n_pad - n)))
    # Smaller lane tile: keeps the (hid, tile_n) f32 hidden temp modest while
    # still leaving >= 2 grid steps for v7x's two TensorCores.
    tile_n = _pick_tile_n(n_pad, max_tile=512)
    grid = (n_pad // tile_n,)
    block_bytes = (cin * tile_n * x.dtype.itemsize + hid * tile_n * 4
                   + cout * tile_n * 4 + hid * cin * 4 + cout * hid * 4)
    out = pl.pallas_call(
        _cf_mlp_kernel,
        out_shape=jax.ShapeDtypeStruct((cout, n_pad), jnp.float32),
        grid=grid,
        in_specs=[pl.BlockSpec((cin, tile_n), lambda i: (0, i)),
                  pl.BlockSpec((hid, cin), lambda i: (0, 0)),
                  pl.BlockSpec((hid, 1), lambda i: (0, 0)),
                  pl.BlockSpec((cout, hid), lambda i: (0, 0)),
                  pl.BlockSpec((cout, 1), lambda i: (0, 0))],
        out_specs=pl.BlockSpec((cout, tile_n), lambda i: (0, i)),
        compiler_params=pltpu.CompilerParams(
            dimension_semantics=("parallel",),
            vmem_limit_bytes=_vmem_limit(block_bytes)),
    )(x, w1t, b1, w2t, b2)
    return out if n_pad == n else out[:, :n]


def pallas_spectral_mul(x_stack, w_stack):
    """Complex channel mix for all retained modes, lane-dense.

    x_stack: (2, Cin, B*M) [real, imag];  w_stack: (2, Cin, Cout, B*M)
    -> (2, Cout, B*M).  Grid tiles Cout (and lanes when large) so there are
    >= 2 parallel grid steps.
    """
    _, cin, bm = x_stack.shape
    cout = w_stack.shape[2]
    tc = 8 if (cout % 8 == 0 and cout > 8) else cout
    tn = _pick_tile_n(bm, max_tile=2048) if bm % _LANE == 0 else bm
    grid = (cout // tc, bm // tn)
    return pl.pallas_call(
        functools.partial(_spectral_kernel, cin=cin),
        out_shape=jax.ShapeDtypeStruct((2, cout, bm), jnp.float32),
        grid=grid,
        in_specs=[pl.BlockSpec((2, cin, tn), lambda j, k: (0, 0, k)),
                  pl.BlockSpec((2, cin, tc, tn), lambda j, k: (0, 0, j, k))],
        out_specs=pl.BlockSpec((2, tc, tn), lambda j, k: (0, j, k)),
        compiler_params=pltpu.CompilerParams(
            dimension_semantics=("parallel", "parallel")),
    )(x_stack, w_stack)


def spectral_conv3d_cf(h5, w_stack, clamped_modes):
    """SpectralConv3d.forward, channel-first.

    h5: (C, B, D1, D2, D3) f32;  w_stack: (2, C, Cout, B*M) pre-tiled at prep.
    """
    C, B, D1, D2, D3 = h5.shape
    m1, m2, m3 = clamped_modes
    M = m1 * m2 * m3
    cout = w_stack.shape[2]
    # TODO(synk): 3-D rfftn/irfftn has no practical Pallas TPU equivalent; stays in XLA.
    hf = jnp.fft.rfftn(h5, axes=(2, 3, 4))              # (C, B, D1, D2, D3//2+1)
    hf_low = hf[:, :, :m1, :m2, :m3].reshape(C, B * M)  # lane index = b*M + m
    x_stack = jnp.stack([jnp.real(hf_low), jnp.imag(hf_low)], axis=0)

    o = pallas_spectral_mul(x_stack, w_stack)           # (2, Cout, B*M)

    out_low = jax.lax.complex(o[0], o[1]).reshape(cout, B, m1, m2, m3)
    d3r = hf.shape[4]
    out_ft = jnp.pad(out_low,
                     ((0, 0), (0, 0), (0, D1 - m1), (0, D2 - m2), (0, d3r - m3)))
    out = jnp.fft.irfftn(out_ft, s=(D1, D2, D3), axes=(2, 3, 4))
    return out.astype(jnp.float32)


@functools.partial(jax.jit, static_argnames=("modes",))
def fno3d_forward(x, kp, *, modes):
    """FNO3D.forward.  x: (B, D1, D2, D3, 4) -> (B, D1, D2, D3, out_channels)."""
    B, D1, D2, D3, cin0 = x.shape
    width = kp["fc0_wt"].shape[0]
    n = B * D1 * D2 * D3

    # channel-first flattened slab (C, N) — the kernel-friendly layout.
    # (cin0=4 uses only half the sublanes of each DMA; padding it would cost
    #  an extra XLA pass over the data, so it is left as a full-dim block.)
    h = jnp.transpose(x, (4, 0, 1, 2, 3)).reshape(cin0, n)

    # fc0: f32 in -> bf16 activation slab (HBM-bound pointwise path in bf16)
    h = pallas_cf_linear(h, kp["fc0_wt"], kp["fc0_b"],
                         out_dtype=jnp.bfloat16)                     # (width, N)

    # 4 x ( relu( SpectralConv3d(h) + Conv3d_1x1(h) ) ); FFT path stays f32.
    for layer in range(len(kp["spec_w"])):
        spec = spectral_conv3d_cf(
            h.astype(jnp.float32).reshape(width, B, D1, D2, D3),
            kp["spec_w"][layer], modes)
        h = pallas_cf_linear(h, kp["w_wt"][layer], kp["w_b"][layer],
                             residual=spec.reshape(width, n),
                             out_dtype=jnp.bfloat16)

    # fc1 (+ relu) and fc2 fused into one kernel; final output in f32.
    out = pallas_cf_mlp(h, kp["fc1_wt"], kp["fc1_b"], kp["fc2_wt"], kp["fc2_b"])
    cout = out.shape[0]
    return jnp.transpose(out.reshape(cout, B, D1, D2, D3), (1, 2, 3, 4, 0))


# ---------------------------------------------------------------------------
# Parameter init (canonical layout) + one-time relayout into kernel layout
# ---------------------------------------------------------------------------
def init_params(key, modes, width, out_channels=1, in_features=4, n_layers=4):
    m1, m2, m3 = modes
    keys = list(jax.random.split(key, 8 + 4 * n_layers))
    ki = iter(keys)

    def dense(k, fin, fout):
        return jax.random.normal(k, (fin, fout), jnp.float32) / jnp.sqrt(fin)

    def bias(k, f):
        return 0.1 * jax.random.normal(k, (f,), jnp.float32)

    scale = 1.0 / (width * width)
    p = {
        "fc0_w": dense(next(ki), in_features, width),
        "fc0_b": bias(next(ki), width),
        "fc1_w": dense(next(ki), width, 128),
        "fc1_b": bias(next(ki), 128),
        "fc2_w": dense(next(ki), 128, out_channels),
        "fc2_b": bias(next(ki), out_channels),
        "spec_wr": [], "spec_wi": [], "w_w": [], "w_b": [],
    }
    for _ in range(n_layers):
        p["spec_wr"].append(scale * jax.random.normal(
            next(ki), (width, width, m1, m2, m3), jnp.float32))
        p["spec_wi"].append(scale * jax.random.normal(
            next(ki), (width, width, m1, m2, m3), jnp.float32))
        p["w_w"].append(dense(next(ki), width, width))
        p["w_b"].append(bias(next(ki), width))
    return p


def prepare_params(params, modes, spatial_shape, batch):
    """One-time relayout: transposed dense weights (Cout,Cin), (Cout,1) biases,
    spectral weights sliced to the retained modes, real/imag stacked and
    pre-tiled along batch to (2, Cin, Cout, B*M) so the kernel's lane dim is
    lane-dense (B*M)."""
    D1, D2, D3 = spatial_shape
    m1 = min(modes[0], D1)
    m2 = min(modes[1], D2)
    m3 = min(modes[2], D3 // 2 + 1)
    M = m1 * m2 * m3

    def col(b):
        return jnp.asarray(b, jnp.float32).reshape(-1, 1)

    def spec_stack(wr, wi):
        cin, cout = wr.shape[:2]
        wr = wr[:, :, :m1, :m2, :m3].reshape(cin, cout, M)
        wi = wi[:, :, :m1, :m2, :m3].reshape(cin, cout, M)
        w = jnp.stack([wr, wi], axis=0)                       # (2,Cin,Cout,M)
        w = jnp.broadcast_to(w[:, :, :, None, :], (2, cin, cout, batch, M))
        return jnp.asarray(w.reshape(2, cin, cout, batch * M))  # lane = b*M + m

    kp = {
        "fc0_wt": params["fc0_w"].T,
        "fc0_b": col(params["fc0_b"]),
        "fc1_wt": params["fc1_w"].T,
        "fc1_b": col(params["fc1_b"]),
        "fc2_wt": params["fc2_w"].T,
        "fc2_b": col(params["fc2_b"]),
        "w_wt": [w.T for w in params["w_w"]],
        "w_b": [col(b) for b in params["w_b"]],
        "spec_w": [spec_stack(wr, wi)
                   for wr, wi in zip(params["spec_wr"], params["spec_wi"])],
    }
    return kp, (m1, m2, m3)


# ---------------------------------------------------------------------------
# Pure-JAX reference (channel-last, HIGHEST precision, f32)
# ---------------------------------------------------------------------------
def reference_forward(x, p, modes):
    hp = jax.lax.Precision.HIGHEST

    def spec(h, wr, wi):
        B, D1, D2, D3, C = h.shape
        hf = jnp.fft.rfftn(h, axes=(1, 2, 3))
        m1 = min(modes[0], hf.shape[1])
        m2 = min(modes[1], hf.shape[2])
        m3 = min(modes[2], hf.shape[3])
        w = (wr + 1j * wi)[:, :, :m1, :m2, :m3]
        low = jnp.einsum("bxyzi,ioxyz->bxyzo", hf[:, :m1, :m2, :m3, :], w,
                         precision=hp)
        out_ft = jnp.zeros(hf.shape[:-1] + (w.shape[1],), jnp.complex64)
        out_ft = out_ft.at[:, :m1, :m2, :m3, :].set(low)
        return jnp.fft.irfftn(out_ft, s=(D1, D2, D3),
                              axes=(1, 2, 3)).astype(jnp.float32)

    h = jnp.dot(x, p["fc0_w"], precision=hp) + p["fc0_b"]
    for layer in range(4):
        s = spec(h, p["spec_wr"][layer], p["spec_wi"][layer])
        wpart = jnp.dot(h, p["w_w"][layer], precision=hp) + p["w_b"][layer]
        h = jax.nn.relu(s + wpart)
    h = jax.nn.relu(jnp.dot(h, p["fc1_w"], precision=hp) + p["fc1_b"])
    return jnp.dot(h, p["fc2_w"], precision=hp) + p["fc2_b"]


if __name__ == "__main__":
    key = jax.random.PRNGKey(0)
    modes = (4, 4, 4)          # modes1, modes2, modes3
    width = 16
    out_channels = 1
    B, D1, D2, D3 = 2, 8, 8, 8

    kparam_key, kx = jax.random.split(key)
    params = init_params(kparam_key, modes, width, out_channels=out_channels)
    x = jax.random.normal(kx, (B, D1, D2, D3, 4), jnp.float32)

    kparams, clamped_modes = prepare_params(params, modes, (D1, D2, D3), B)

    out = fno3d_forward(x, kparams, modes=clamped_modes)
    out = jax.block_until_ready(out)
    assert out.shape == (B, D1, D2, D3, out_channels), out.shape

    ref = jax.block_until_ready(reference_forward(x, params, modes))
    err = float(jnp.max(jnp.abs(out - ref)))
    # bf16 activation slab + default-precision MXU vs HIGHEST-precision f32 ref.
    if not (err < 6e-2):
        raise AssertionError(f"mismatch vs pure-JAX reference: max abs err {err}")

    print("KERNEL_OK")
</pallas_src>

<mosaic_0001>
module attributes {stable_mosaic.version = 11 : i64} {
  func.func @_cf_linear_kernel(%arg0: i32, %arg1: memref<4x512xf32, #tpu.memory_space<vmem>>, %arg2: memref<16x4xf32, #tpu.memory_space<vmem>>, %arg3: memref<16x1xf32, #tpu.memory_space<vmem>>, %arg4: memref<16x512xbf16, #tpu.memory_space<vmem>>) attributes {dimension_semantics = [#tpu.dimension_semantics<parallel>], iteration_bounds = array<i64: 2>, scalar_prefetch = 0 : i64, scratch_operands = 0 : i64, tpu.core_type = #tpu.core_type<tc>, window_params = [{transform_indices = @transform_0, window_bounds = array<i64: 4, 512>}, {pipeline_mode = #tpu.pipeline_mode<synchronous>, transform_indices = @transform_1, window_bounds = array<i64: 16, 4>}, {pipeline_mode = #tpu.pipeline_mode<synchronous>, transform_indices = @transform_2, window_bounds = array<i64: 16, 1>}, {transform_indices = @transform_3, window_bounds = array<i64: 16, 512>}]} {
    %c0 = arith.constant 0 : index
    %c0_0 = arith.constant 0 : index
    %0 = vector.load %arg1[%c0, %c0_0] : memref<4x512xf32, #tpu.memory_space<vmem>>, vector<4x512xf32>
    %c0_1 = arith.constant 0 : index
    %c0_2 = arith.constant 0 : index
    %1 = vector.load %arg2[%c0_1, %c0_2] : memref<16x4xf32, #tpu.memory_space<vmem>>, vector<16x4xf32>
    %cst = arith.constant dense<0.000000e+00> : vector<16x512xf32>
    %2 = tpu.matmul %1, %0, %cst {dimension_numbers = #tpu.dot_dimension_numbers<[1], [0], [0], [1], [0, 0, 1, 1], [], []>} : vector<16x4xf32>, vector<4x512xf32>, vector<16x512xf32> -> vector<16x512xf32>
    %c0_3 = arith.constant 0 : index
    %c0_4 = arith.constant 0 : index
    %3 = vector.load %arg3[%c0_3, %c0_4] : memref<16x1xf32, #tpu.memory_space<vmem>>, vector<16x1xf32>
    %4 = vector.broadcast %3 : vector<16x1xf32> to vector<16x512xf32>
    %5 = arith.addf %2, %4 : vector<16x512xf32>
    %6 = arith.truncf %5 : vector<16x512xf32> to vector<16x512xbf16>
    %c0_5 = arith.constant 0 : index
    %c0_6 = arith.constant 0 : index
    %7 = vector.load %arg4[%c0_5, %c0_6] : memref<16x512xbf16, #tpu.memory_space<vmem>>, vector<16x512xbf16>
    tpu.vector_store %arg4[%c0_5, %c0_6], %6 {strides = array<i32>} : memref<16x512xbf16, #tpu.memory_space<vmem>>, vector<16x512xbf16>,
    return
  }
  func.func @transform_0(%arg0: i32) -> (i32, i32) {
    %c0_i32 = arith.constant 0 : i32
    %c0_i32_0 = arith.constant 0 : i32
    return %c0_i32, %arg0 : i32, i32
  }
  func.func @transform_1(%arg0: i32) -> (i32, i32) {
    %c0_i32 = arith.constant 0 : i32
    %c0_i32_0 = arith.constant 0 : i32
    %c0_i32_1 = arith.constant 0 : i32
    return %c0_i32, %c0_i32_0 : i32, i32
  }
  func.func @transform_2(%arg0: i32) -> (i32, i32) {
    %c0_i32 = arith.constant 0 : i32
    %c0_i32_0 = arith.constant 0 : i32
    %c0_i32_1 = arith.constant 0 : i32
    return %c0_i32, %c0_i32_0 : i32, i32
  }
  func.func @transform_3(%arg0: i32) -> (i32, i32) {
    %c0_i32 = arith.constant 0 : i32
    %c0_i32_0 = arith.constant 0 : i32
    return %c0_i32, %arg0 : i32, i32
  }
}

module attributes {stable_mosaic.version = 11 : i64} {
  func.func @_spectral_kernel(%arg0: i32, %arg1: i32, %arg2: memref<2x16x128xf32, #tpu.memory_space<vmem>>, %arg3: memref<2x16x8x128xf32, #tpu.memory_space<vmem>>, %arg4: memref<2x8x128xf32, #tpu.memory_space<vmem>>) attributes {dimension_semantics = [#tpu.dimension_semantics<parallel>, #tpu.dimension_semantics<parallel>], iteration_bounds = array<i64: 2, 1>, scalar_prefetch = 0 : i64, scratch_operands = 0 : i64, tpu.core_type = #tpu.core_type<tc>, window_params = [{transform_indices = @transform_0, window_bounds = array<i64: 2, 16, 128>}, {transform_indices = @transform_1, window_bounds = array<i64: 2, 16, 8, 128>}, {transform_indices = @transform_2, window_bounds = array<i64: 2, 8, 128>}]} {
    %c0 = arith.constant 0 : index
    %c0_0 = arith.constant 0 : index
    %c0_1 = arith.constant 0 : index
    %0 = vector.load %arg2[%c0, %c0_0, %c0_1] : memref<2x16x128xf32, #tpu.memory_space<vmem>>, vector<1x16x128xf32>
    %1 = vector.shape_cast %0 : vector<1x16x128xf32> to vector<16x128xf32>
    %c1 = arith.constant 1 : index
    %c0_2 = arith.constant 0 : index
    %c0_3 = arith.constant 0 : index
    %2 = vector.load %arg2[%c1, %c0_2, %c0_3] : memref<2x16x128xf32, #tpu.memory_space<vmem>>, vector<1x16x128xf32>
    %3 = vector.shape_cast %2 : vector<1x16x128xf32> to vector<16x128xf32>
    %c0_4 = arith.constant 0 : index
    %c0_5 = arith.constant 0 : index
    %c0_6 = arith.constant 0 : index
    %c0_7 = arith.constant 0 : index
    %4 = vector.load %arg3[%c0_4, %c0_5, %c0_6, %c0_7] : memref<2x16x8x128xf32, #tpu.memory_space<vmem>>, vector<1x16x8x128xf32>
    %5 = vector.shape_cast %4 : vector<1x16x8x128xf32> to vector<16x8x128xf32>
    %c1_8 = arith.constant 1 : index
    %c0_9 = arith.constant 0 : index
    %c0_10 = arith.constant 0 : index
    %c0_11 = arith.constant 0 : index
    %6 = vector.load %arg3[%c1_8, %c0_9, %c0_10, %c0_11] : memref<2x16x8x128xf32, #tpu.memory_space<vmem>>, vector<1x16x8x128xf32>
    %7 = vector.shape_cast %6 : vector<1x16x8x128xf32> to vector<16x8x128xf32>
    %cst = arith.constant 0.000000e+00 : f32
    %8 = vector.broadcast %cst : f32 to vector<8x128xf32>
    %cst_12 = arith.constant 0.000000e+00 : f32
    %9 = vector.broadcast %cst_12 : f32 to vector<8x128xf32>
    %10 = vector.extract_strided_slice %1 {offsets = [0, 0], sizes = [1, 128], strides = [1, 1]} : vector<16x128xf32> to vector<1x128xf32>
    %11 = vector.extract_strided_slice %3 {offsets = [0, 0], sizes = [1, 128], strides = [1, 1]} : vector<16x128xf32> to vector<1x128xf32>
    %12 = vector.extract_strided_slice %5 {offsets = [0, 0, 0], sizes = [1, 8, 128], strides = [1, 1, 1]} : vector<16x8x128xf32> to vector<1x8x128xf32>
    %13 = vector.shape_cast %12 : vector<1x8x128xf32> to vector<8x128xf32>
    %14 = vector.broadcast %10 : vector<1x128xf32> to vector<8x128xf32>
    %15 = arith.mulf %14, %13 : vector<8x128xf32>
    %16 = arith.addf %8, %15 : vector<8x128xf32>
    %17 = vector.extract_strided_slice %7 {offsets = [0, 0, 0], sizes = [1, 8, 128], strides = [1, 1, 1]} : vector<16x8x128xf32> to vector<1x8x128xf32>
    %18 = vector.shape_cast %17 : vector<1x8x128xf32> to vector<8x128xf32>
    %19 = vector.broadcast %11 : vector<1x128xf32> to vector<8x128xf32>
    %20 = arith.mulf %19, %18 : vector<8x128xf32>
    %21 = arith.subf %16, %20 : vector<8x128xf32>
    %22 = vector.extract_strided_slice %7 {offsets = [0, 0, 0], sizes = [1, 8, 128], strides = [1, 1, 1]} : vector<16x8x128xf32> to vector<1x8x128xf32>
    %23 = vector.shape_cast %22 : vector<1x8x128xf32> to vector<8x128xf32>
    %24 = vector.broadcast %10 : vector<1x128xf32> to vector<8x128xf32>
    %25 = arith.mulf %24, %23 : vector<8x128xf32>
    %26 = arith.addf %9, %25 : vector<8x128xf32>
    %27 = vector.extract_strided_slice %5 {offsets = [0, 0, 0], sizes = [1, 8, 128], strides = [1, 1, 1]} : vector<16x8x128xf32> to vector<1x8x128xf32>
    %28 = vector.shape_cast %27 : vector<1x8x128xf32> to vector<8x128xf32>
    %29 = vector.broadcast %11 : vector<1x128xf32> to vector<8x128xf32>
    %30 = arith.mulf %29, %28 : vector<8x128xf32>
    %31 = arith.addf %26, %30 : vector<8x128xf32>
    %32 = vector.extract_strided_slice %1 {offsets = [1, 0], sizes = [1, 128], strides = [1, 1]} : vector<16x128xf32> to vector<1x128xf32>
    %33 = vector.extract_strided_slice %3 {offsets = [1, 0], sizes = [1, 128], strides = [1, 1]} : vector<16x128xf32> to vector<1x128xf32>
    %34 = vector.extract_strided_slice %5 {offsets = [1, 0, 0], sizes = [1, 8, 128], strides = [1, 1, 1]} : vector<16x8x128xf32> to vector<1x8x128xf32>
    %35 = vector.shape_cast %34 : vector<1x8x128xf32> to vector<8x128xf32>
    %36 = vector.broadcast %32 : vector<1x128xf32> to vector<8x128xf32>
    %37 = arith.mulf %36, %35 : vector<8x128xf32>
    %38 = arith.addf %21, %37 : vector<8x128xf32>
    %39 = vector.extract_strided_slice %7 {offsets = [1, 0, 0], sizes = [1, 8, 128], strides = [1, 1, 1]} : vector<16x8x128xf32> to vector<1x8x128xf32>
    %40 = vector.shape_cast %39 : vector<1x8x128xf32> to vector<8x128xf32>
    %41 = vector.broadcast %33 : vector<1x128xf32> to vector<8x128xf32>
    %42 = arith.mulf %41, %40 : vector<8x128xf32>
    %43 = arith.subf %38, %42 : vector<8x128xf32>
    %44 = vector.extract_strided_slice %7 {offsets = [1, 0, 0], sizes = [1, 8, 128], strides = [1, 1, 1]} : vector<16x8x128xf32> to vector<1x8x128xf32>
    %45 = vector.shape_cast %44 : vector<1x8x128xf32> to vector<8x128xf32>
    %46 = vector.broadcast %32 : vector<1x128xf32> to vector<8x128xf32>
    %47 = arith.mulf %46, %45 : vector<8x128xf32>
    %48 = arith.addf %31, %47 : vector<8x128xf32>
    %49 = vector.extract_strided_slice %5 {offsets = [1, 0, 0], sizes = [1, 8, 128], strides = [1, 1, 1]} : vector<16x8x128xf32> to vector<1x8x128xf32>
    %50 = vector.shape_cast %49 : vector<1x8x128xf32> to vector<8x128xf32>
    %51 = vector.broadcast %33 : vector<1x128xf32> to vector<8x128xf32>
    %52 = arith.mulf %51, %50 : vector<8x128xf32>
    %53 = arith.addf %48, %52 : vector<8x128xf32>
    %54 = vector.extract_strided_slice %1 {offsets = [2, 0], sizes = [1, 128], strides = [1, 1]} : vector<16x128xf32> to vector<1x128xf32>
    %55 = vector.extract_strided_slice %3 {offsets = [2, 0], sizes = [1, 128], strides = [1, 1]} : vector<16x128xf32> to vector<1x128xf32>
    %56 = vector.extract_strided_slice %5 {offsets = [2, 0, 0], sizes = [1, 8, 128], strides = [1, 1, 1]} : vector<16x8x128xf32> to vector<1x8x128xf32>
    %57 = vector.shape_cast %56 : vector<1x8x128xf32> to vector<8x128xf32>
    %58 = vector.broadcast %54 : vector<1x128xf32> to vector<8x128xf32>
    %59 = arith.mulf %58, %57 : vector<8x128xf32>
    %60 = arith.addf %43, %59 : vector<8x128xf32>
    %61 = vector.extract_strided_slice %7 {offsets = [2, 0, 0], sizes = [1, 8, 128], strides = [1, 1, 1]} : vector<16x8x128xf32> to vector<1x8x128xf32>
    %62 = vector.shape_cast %61 : vector<1x8x128xf32> to vector<8x128xf32>
    %63 = vector.broadcast %55 : vector<1x128xf32> to vector<8x128xf32>
    %64 = arith.mulf %63, %62 : vector<8x128xf32>
    %65 = arith.subf %60, %64 : vector<8x128xf32>
    %66 = vector.extract_strided_slice %7 {offsets = [2, 0, 0], sizes = [1, 8, 128], strides = [1, 1, 1]} : vector<16x8x128xf32> to vector<1x8x128xf32>
    %67 = vector.shape_cast %66 : vector<1x8x128xf32> to vector<8x128xf32>
    %68 = vector.broadcast %54 : vector<1x128xf32> to vector<8x128xf32>
    %69 = arith.mulf %68, %67 : vector<8x128xf32>
    %70 = arith.addf %53, %69 : vector<8x128xf32>
    %71 = vector.extract_strided_slice %5 {offsets = [2, 0, 0], sizes = [1, 8, 128], strides = [1, 1, 1]} : vector<16x8x128xf32> to vector<1x8x128xf32>
    %72 = vector.shape_cast %71 : vector<1x8x128xf32> to vector<8x128xf32>
    %73 = vector.broadcast %55 : vector<1x128xf32> to vector<8x128xf32>
    %74 = arith.mulf %73, %72 : vector<8x128xf32>
    %75 = arith.addf %70, %74 : vector<8x128xf32>
    %76 = vector.extract_strided_slice %1 {offsets = [3, 0], sizes = [1, 128], strides = [1, 1]} : vector<16x128xf32> to vector<1x128xf32>
    %77 = vector.extract_strided_slice %3 {offsets = [3, 0], sizes = [1, 128], strides = [1, 1]} : vector<16x128xf32> to vector<1x128xf32>
    %78 = vector.extract_strided_slice %5 {offsets = [3, 0, 0], sizes = [1, 8, 128], strides = [1, 1, 1]} : vector<16x8x128xf32> to vector<1x8x128xf32>
    %79 = vector.shape_cast %78 : vector<1x8x128xf32> to vector<8x128xf32>
    %80 = vector.broadcast %76 : vector<1x128xf32> to vector<8x128xf32>
    %81 = arith.mulf %80, %79 : vector<8x128xf32>
    %82 = arith.addf %65, %81 : vector<8x128xf32>
    %83 = vector.extract_strided_slice %7 {offsets = [3, 0, 0], sizes = [1, 8, 128], strides = [1, 1, 1]} : vector<16x8x128xf32> to vector<1x8x128xf32>
    %84 = vector.shape_cast %83 : vector<1x8x128xf32> to vector<8x128xf32>
    %85 = vector.broadcast %77 : vector<1x128xf32> to vector<8x128xf32>
    %86 = arith.mulf %85, %84 : vector<8x128xf32>
    %87 = arith.subf %82, %86 : vector<8x128xf32>
    %88 = vector.extract_strided_slice %7 {offsets = [3, 0, 0], sizes = [1, 8, 128], strides = [1, 1, 1]} : vector<16x8x128xf32> to vector<1x8x128xf32>
    %89 = vector.shape_cast %88 : vector<1x8x128xf32> to vector<8x128xf32>
    %90 = vector.broadcast %76 : vector<1x128xf32> to vector<8x128xf32>
    %91 = arith.mulf %90, %89 : vector<8x128xf32>
    %92 = arith.addf %75, %91 : vector<8x128xf32>
    %93 = vector.extract_strided_slice %5 {offsets = [3, 0, 0], sizes = [1, 8, 128], strides = [1, 1, 1]} : vector<16x8x128xf32> to vector<1x8x128xf32>
    %94 = vector.shape_cast %93 : vector<1x8x128xf32> to vector<8x128xf32>
    %95 = vector.broadcast %77 : vector<1x128xf32> to vector<8x128xf32>
    %96 = arith.mulf %95, %94 : vector<8x128xf32>
    %97 = arith.addf %92, %96 : vector<8x128xf32>
    %98 = vector.extract_strided_slice %1 {offsets = [4, 0], sizes = [1, 128], strides = [1, 1]} : vector<16x128xf32> to vector<1x128xf32>
    %99 = vector.extract_strided_slice %3 {offsets = [4, 0], sizes = [1, 128], strides = [1, 1]} : vector<16x128xf32> to vector<1x128xf32>
    %100 = vector.extract_strided_slice %5 {offsets = [4, 0, 0], sizes = [1, 8, 128], strides = [1, 1, 1]} : vector<16x8x128xf32> to vector<1x8x128xf32>
    %101 = vector.shape_cast %100 : vector<1x8x128xf32> to vector<8x128xf32>
    %102 = vector.broadcast %98 : vector<1x128xf32> to vector<8x128xf32>
    %103 = arith.mulf %102, %101 : vector<8x128xf32>
    %104 = arith.addf %87, %103 : vector<8x128xf32>
    %105 = vector.extract_strided_slice %7 {offsets = [4, 0, 0], sizes = [1, 8, 128], strides = [1, 1, 1]} : vector<16x8x128xf32> to vector<1x8x128xf32>
    %106 = vector.shape_cast %105 : vector<1x8x128xf32> to vector<8x128xf32>
    %107 = vector.broadcast %99 : vector<1x128xf32> to vector<8x128xf32>
    %108 = arith.mulf %107, %106 : vector<8x128xf32>
    %109 = arith.subf %104, %108 : vector<8x128xf32>
    %110 = vector.extract_strided_slice %7 {offsets = [4, 0, 0], sizes = [1, 8, 128], strides = [1, 1, 1]} : vector<16x8x128xf32> to vector<1x8x128xf32>
    %111 = vector.shape_cast %110 : vector<1x8x128xf32> to vector<8x128xf32>
    %112 = vector.broadcast %98 : vector<1x128xf32> to vector<8x128xf32>
    %113 = arith.mulf %112, %111 : vector<8x128xf32>
    %114 = arith.addf %97, %113 : vector<8x128xf32>
    %115 = vector.extract_strided_slice %5 {offsets = [4, 0, 0], sizes = [1, 8, 128], strides = [1, 1, 1]} : vector<16x8x128xf32> to vector<1x8x128xf32>
    %116 = vector.shape_cast %115 : vector<1x8x128xf32> to vector<8x128xf32>
    %117 = vector.broadcast %99 : vector<1x128xf32> to vector<8x128xf32>
    %118 = arith.mulf %117, %116 : vector<8x128xf32>
    %119 = arith.addf %114, %118 : vector<8x128xf32>
    %120 = vector.extract_strided_slice %1 {offsets = [5, 0], sizes = [1, 128], strides = [1, 1]} : vector<16x128xf32> to vector<1x128xf32>
    %121 = vector.extract_strided_slice %3 {offsets = [5, 0], sizes = [1, 128], strides = [1, 1]} : vector<16x128xf32> to vector<1x128xf32>
    %122 = vector.extract_strided_slice %5 {offsets = [5, 0, 0], sizes = [1, 8, 128], strides = [1, 1, 1]} : vector<16x8x128xf32> to vector<1x8x128xf32>
    %123 = vector.shape_cast %122 : vector<1x8x128xf32> to vector<8x128xf32>
    %124 = vector.broadcast %120 : vector<1x128xf32> to vector<8x128xf32>
    %125 = arith.mulf %124, %123 : vector<8x128xf32>
    %126 = arith.addf %109, %125 : vector<8x128xf32>
    %127 = vector.extract_strided_slice %7 {offsets = [5, 0, 0], sizes = [1, 8, 128], strides = [1, 1, 1]} : vector<16x8x128xf32> to vector<1x8x128xf32>
    %128 = vector.shape_cast %127 : vector<1x8x128xf32> to vector<8x128xf32>
    %129 = vector.broadcast %121 : vector<1x128xf32> to vector<8x128xf32>
    %130 = arith.mulf %129, %128 : vector<8x128xf32>
    %131 = arith.subf %126, %130 : vector<8x128xf32>
    %132 = vector.extract_strided_slice %7 {offsets = [5, 0, 0], sizes = [1, 8, 128], strides = [1, 1, 1]} : vector<16x8x128xf32> to vector<1x8x128xf32>
    %133 = vector.shape_cast %132 : vector<1x8x128xf32> to vector<8x128xf32>
    %134 = vector.broadcast %120 : vector<1x128xf32> to vector<8x128xf32>
    %135 = arith.mulf %134, %133 : vector<8x128xf32>
    %136 = arith.addf %119, %135 : vector<8x128xf32>
    %137 = vector.extract_strided_slice %5 {offsets = [5, 0, 0], sizes = [1, 8, 128], strides = [1, 1, 1]} : vector<16x8x128xf32> to vector<1x8x128xf32>
    %138 = vector.shape_cast %137 : vector<1x8x128xf32> to vector<8x128xf32>
    %139 = vector.broadcast %121 : vector<1x128xf32> to vector<8x128xf32>
    %140 = arith.mulf %139, %138 : vector<8x128xf32>
    %141 = arith.addf %136, %140 : vector<8x128xf32>
    %142 = vector.extract_strided_slice %1 {offsets = [6, 0], sizes = [1, 128], strides = [1, 1]} : vector<16x128xf32> to vector<1x128xf32>
    %143 = vector.extract_strided_slice %3 {offsets = [6, 0], sizes = [1, 128], strides = [1, 1]} : vector<16x128xf32> to vector<1x128xf32>
    %144 = vector.extract_strided_slice %5 {offsets = [6, 0, 0], sizes = [1, 8, 128], strides = [1, 1, 1]} : vector<16x8x128xf32> to vector<1x8x128xf32>
    %145 = vector.shape_cast %144 : vector<1x8x128xf32> to vector<8x128xf32>
    %146 = vector.broadcast %142 : vector<1x128xf32> to vector<8x128xf32>
    %147 = arith.mulf %146, %145 : vector<8x128xf32>
    %148 = arith.addf %131, %147 : vector<8x128xf32>
    %149 = vector.extract_strided_slice %7 {offsets = [6, 0, 0], sizes = [1, 8, 128], strides = [1, 1, 1]} : vector<16x8x128xf32> to vector<1x8x128xf32>
    %150 = vector.shape_cast %149 : vector<1x8x128xf32> to vector<8x128xf32>
    %151 = vector.broadcast %143 : vector<1x128xf32> to vector<8x128xf32>
    %152 = arith.mulf %151, %150 : vector<8x128xf32>
    %153 = arith.subf %148, %152 : vector<8x128xf32>
    %154 = vector.extract_strided_slice %7 {offsets = [6, 0, 0], sizes = [1, 8, 128], strides = [1, 1, 1]} : vector<16x8x128xf32> to vector<1x8x128xf32>
    %155 = vector.shape_cast %154 : vector<1x8x128xf32> to vector<8x128xf32>
    %156 = vector.broadcast %142 : vector<1x128xf32> to vector<8x128xf32>
    %157 = arith.mulf %156, %155 : vector<8x128xf32>
    %158 = arith.addf %141, %157 : vector<8x128xf32>
    %159 = vector.extract_strided_slice %5 {offsets = [6, 0, 0], sizes = [1, 8, 128], strides = [1, 1, 1]} : vector<16x8x128xf32> to vector<1x8x128xf32>
    %160 = vector.shape_cast %159 : vector<1x8x128xf32> to vector<8x128xf32>
    %161 = vector.broadcast %143 : vector<1x128xf32> to vector<8x128xf32>
    %162 = arith.mulf %161, %160 : vector<8x128xf32>
    %163 = arith.addf %158, %162 : vector<8x128xf32>
    %164 = vector.extract_strided_slice %1 {offsets = [7, 0], sizes = [1, 128], strides = [1, 1]} : vector<16x128xf32> to vector<1x128xf32>
    %165 = vector.extract_strided_slice %3 {offsets = [7, 0], sizes = [1, 128], strides = [1, 1]} : vector<16x128xf32> to vector<1x128xf32>
    %166 = vector.extract_strided_slice %5 {offsets = [7, 0, 0], sizes = [1, 8, 128], strides = [1, 1, 1]} : vector<16x8x128xf32> to vector<1x8x128xf32>
    %167 = vector.shape_cast %166 : vector<1x8x128xf32> to vector<8x128xf32>
    %168 = vector.broadcast %164 : vector<1x128xf32> to vector<8x128xf32>
    %169 = arith.mulf %168, %167 : vector<8x128xf32>
    %170 = arith.addf %153, %169 : vector<8x128xf32>
    %171 = vector.extract_strided_slice %7 {offsets = [7, 0, 0], sizes = [1, 8, 128], strides = [1, 1, 1]} : vector<16x8x128xf32> to vector<1x8x128xf32>
    %172 = vector.shape_cast %171 : vector<1x8x128xf32> to vector<8x128xf32>
    %173 = vector.broadcast %165 : vector<1x128xf32> to vector<8x128xf32>
    %174 = arith.mulf %173, %172 : vector<8x128xf32>
    %175 = arith.subf %170, %174 : vector<8x128xf32>
    %176 = vector.extract_strided_slice %7 {offsets = [7, 0, 0], sizes = [1, 8, 128], strides = [1, 1, 1]} : vector<16x8x128xf32> to vector<1x8x128xf32>
    %177 = vector.shape_cast %176 : vector<1x8x128xf32> to vector<8x128xf32>
    %178 = vector.broadcast %164 : vector<1x128xf32> to vector<8x128xf32>
    %179 = arith.mulf %178, %177 : vector<8x128xf32>
    %180 = arith.addf %163, %179 : vector<8x128xf32>
    %181 = vector.extract_strided_slice %5 {offsets = [7, 0, 0], sizes = [1, 8, 128], strides = [1, 1, 1]} : vector<16x8x128xf32> to vector<1x8x128xf32>
    %182 = vector.shape_cast %181 : vector<1x8x128xf32> to vector<8x128xf32>
    %183 = vector.broadcast %165 : vector<1x128xf32> to vector<8x128xf32>
    %184 = arith.mulf %183, %182 : vector<8x128xf32>
    %185 = arith.addf %180, %184 : vector<8x128xf32>
    %186 = vector.extract_strided_slice %1 {offsets = [8, 0], sizes = [1, 128], strides = [1, 1]} : vector<16x128xf32> to vector<1x128xf32>
    %187 = vector.extract_strided_slice %3 {offsets = [8, 0], sizes = [1, 128], strides = [1, 1]} : vector<16x128xf32> to vector<1x128xf32>
    %188 = vector.extract_strided_slice %5 {offsets = [8, 0, 0], sizes = [1, 8, 128], strides = [1, 1, 1]} : vector<16x8x128xf32> to vector<1x8x128xf32>
    %189 = vector.shape_cast %188 : vector<1x8x128xf32> to vector<8x128xf32>
    %190 = vector.broadcast %186 : vector<1x128xf32> to vector<8x128xf32>
    %191 = arith.mulf %190, %189 : vector<8x128xf32>
    %192 = arith.addf %175, %191 : vector<8x128xf32>
    %193 = vector.extract_strided_slice %7 {offsets = [8, 0, 0], sizes = [1, 8, 128], strides = [1, 1, 1]} : vector<16x8x128xf32> to vector<1x8x128xf32>
    %194 = vector.shape_cast %193 : vector<1x8x128xf32> to vector<8x128xf32>
    %195 = vector.broadcast %187 : vector<1x128xf32> to vector<8x128xf32>
    %196 = arith.mulf %195, %194 : vector<8x128xf32>
    %197 = arith.subf %192, %196 : vector<8x128xf32>
    %198 = vector.extract_strided_slice %7 {offsets = [8, 0, 0], sizes = [1, 8, 128], strides = [1, 1, 1]} : vector<16x8x128xf32> to vector<1x8x128xf32>
    %199 = vector.shape_cast %198 : vector<1x8x128xf32> to vector<8x128xf32>
    %200 = vector.broadcast %186 : vector<1x128xf32> to vector<8x128xf32>
    %201 = arith.mulf %200, %199 : vector<8x128xf32>
    %202 = arith.addf %185, %201 : vector<8x128xf32>
    %203 = vector.extract_strided_slice %5 {offsets = [8, 0, 0], sizes = [1, 8, 128], strides = [1, 1, 1]} : vector<16x8x128xf32> to vector<1x8x128xf32>
    %204 = vector.shape_cast %203 : vector<1x8x128xf32> to vector<8x128xf32>
    %205 = vector.broadcast %187 : vector<1x128xf32> to vector<8x128xf32>
    %206 = arith.mulf %205, %204 : vector<8x128xf32>
    %207 = arith.addf %202, %206 : vector<8x128xf32>
    %208 = vector.extract_strided_slice %1 {offsets = [9, 0], sizes = [1, 128], strides = [1, 1]} : vector<16x128xf32> to vector<1x128xf32>
    %209 = vector.extract_strided_slice %3 {offsets = [9, 0], sizes = [1, 128], strides = [1, 1]} : vector<16x128xf32> to vector<1x128xf32>
    %210 = vector.extract_strided_slice %5 {offsets = [9, 0, 0], sizes = [1, 8, 128], strides = [1, 1, 1]} : vector<16x8x128xf32> to vector<1x8x128xf32>
    %211 = vector.shape_cast %210 : vector<1x8x128xf32> to vector<8x128xf32>
    %212 = vector.broadcast %208 : vector<1x128xf32> to vector<8x128xf32>
    %213 = arith.mulf %212, %211 : vector<8x128xf32>
    %214 = arith.addf %197, %213 : vector<8x128xf32>
    %215 = vector.extract_strided_slice %7 {offsets = [9, 0, 0], sizes = [1, 8, 128], strides = [1, 1, 1]} : vector<16x8x128xf32> to vector<1x8x128xf32>
    %216 = vector.shape_cast %215 : vector<1x8x128xf32> to vector<8x128xf32>
    %217 = vector.broadcast %209 : vector<1x128xf32> to vector<8x128xf32>
    %218 = arith.mulf %217, %216 : vector<8x128xf32>
    %219 = arith.subf %214, %218 : vector<8x128xf32>
    %220 = vector.extract_strided_slice %7 {offsets = [9, 0, 0], sizes = [1, 8, 128], strides = [1, 1, 1]} : vector<16x8x128xf32> to vector<1x8x128xf32>
    %221 = vector.shape_cast %220 : vector<1x8x128xf32> to vector<8x128xf32>
    %222 = vector.broadcast %208 : vector<1x128xf32> to vector<8x128xf32>
    %223 = arith.mulf %222, %221 : vector<8x128xf32>
    %224 = arith.addf %207, %223 : vector<8x128xf32>
    %225 = vector.extract_strided_slice %5 {offsets = [9, 0, 0], sizes = [1, 8, 128], strides = [1, 1, 1]} : vector<16x8x128xf32> to vector<1x8x128xf32>
    %226 = vector.shape_cast %225 : vector<1x8x128xf32> to vector<8x128xf32>
    %227 = vector.broadcast %209 : vector<1x128xf32> to vector<8x128xf32>
    %228 = arith.mulf %227, %226 : vector<8x128xf32>
    %229 = arith.addf %224, %228 : vector<8x128xf32>
    %230 = vector.extract_strided_slice %1 {offsets = [10, 0], sizes = [1, 128], strides = [1, 1]} : vector<16x128xf32> to vector<1x128xf32>
    %231 = vector.extract_strided_slice %3 {offsets = [10, 0], sizes = [1, 128], strides = [1, 1]} : vector<16x128xf32> to vector<1x128xf32>
    %232 = vector.extract_strided_slice %5 {offsets = [10, 0, 0], sizes = [1, 8, 128], strides = [1, 1, 1]} : vector<16x8x128xf32> to vector<1x8x128xf32>
    %233 = vector.shape_cast %232 : vector<1x8x128xf32> to vector<8x128xf32>
    %234 = vector.broadcast %230 : vector<1x128xf32> to vector<8x128xf32>
    %235 = arith.mulf %234, %233 : vector<8x128xf32>
    %236 = arith.addf %219, %235 : vector<8x128xf32>
    %237 = vector.extract_strided_slice %7 {offsets = [10, 0, 0], sizes = [1, 8, 128], strides = [1, 1, 1]} : vector<16x8x128xf32> to vector<1x8x128xf32>
    %238 = vector.shape_cast %237 : vector<1x8x128xf32> to vector<8x128xf32>
    %239 = vector.broadcast %231 : vector<1x128xf32> to vector<8x128xf32>
    %240 = arith.mulf %239, %238 : vector<8x128xf32>
    %241 = arith.subf %236, %240 : vector<8x128xf32>
    %242 = vector.extract_strided_slice %7 {offsets = [10, 0, 0], sizes = [1, 8, 128], strides = [1, 1, 1]} : vector<16x8x128xf32> to vector<1x8x128xf32>
    %243 = vector.shape_cast %242 : vector<1x8x128xf32> to vector<8x128xf32>
    %244 = vector.broadcast %230 : vector<1x128xf32> to vector<8x128xf32>
    %245 = arith.mulf %244, %243 : vector<8x128xf32>
    %246 = arith.addf %229, %245 : vector<8x128xf32>
    %247 = vector.extract_strided_slice %5 {offsets = [10, 0, 0], sizes = [1, 8, 128], strides = [1, 1, 1]} : vector<16x8x128xf32> to vector<1x8x128xf32>
    %248 = vector.shape_cast %247 : vector<1x8x128xf32> to vector<8x128xf32>
    %249 = vector.broadcast %231 : vector<1x128xf32> to vector<8x128xf32>
    %250 = arith.mulf %249, %248 : vector<8x128xf32>
    %251 = arith.addf %246, %250 : vector<8x128xf32>
    %252 = vector.extract_strided_slice %1 {offsets = [11, 0], sizes = [1, 128], strides = [1, 1]} : vector<16x128xf32> to vector<1x128xf32>
    %253 = vector.extract_strided_slice %3 {offsets = [11, 0], sizes = [1, 128], strides = [1, 1]} : vector<16x128xf32> to vector<1x128xf32>
    %254 = vector.extract_strided_slice %5 {offsets = [11, 0, 0], sizes = [1, 8, 128], strides = [1, 1, 1]} : vector<16x8x128xf32> to vector<1x8x128xf32>
    %255 = vector.shape_cast %254 : vector<1x8x128xf32> to vector<8x128xf32>
    %256 = vector.broadcast %252 : vector<1x128xf32> to vector<8x128xf32>
    %257 = arith.mulf %256, %255 : vector<8x128xf32>
    %258 = arith.addf %241, %257 : vector<8x128xf32>
    %259 = vector.extract_strided_slice %7 {offsets = [11, 0, 0], sizes = [1, 8, 128], strides = [1, 1, 1]} : vector<16x8x128xf32> to vector<1x8x128xf32>
    %260 = vector.shape_cast %259 : vector<1x8x128xf32> to vector<8x128xf32>
    %261 = vector.broadcast %253 : vector<1x128xf32> to vector<8x128xf32>
    %262 = arith.mulf %261, %260 : vector<8x128xf32>
    %263 = arith.subf %258, %262 : vector<8x128xf32>
    %264 = vector.extract_strided_slice %7 {offsets = [11, 0, 0], sizes = [1, 8, 128], strides = [1, 1, 1]} : vector<16x8x128xf32> to vector<1x8x128xf32>
    %265 = vector.shape_cast %264 : vector<1x8x128xf32> to vector<8x128xf32>
    %266 = vector.broadcast %252 : vector<1x128xf32> to vector<8x128xf32>
    %267 = arith.mulf %266, %265 : vector<8x128xf32>
    %268 = arith.addf %251, %267 : vector<8x128xf32>
    %269 = vector.extract_strided_slice %5 {offsets = [11, 0, 0], sizes = [1, 8, 128], strides = [1, 1, 1]} : vector<16x8x128xf32> to vector<1x8x128xf32>
    %270 = vector.shape_cast %269 : vector<1x8x128xf32> to vector<8x128xf32>
    %271 = vector.broadcast %253 : vector<1x128xf32> to vector<8x128xf32>
    %272 = arith.mulf %271, %270 : vector<8x128xf32>
    %273 = arith.addf %268, %272 : vector<8x128xf32>
    %274 = vector.extract_strided_slice %1 {offsets = [12, 0], sizes = [1, 128], strides = [1, 1]} : vector<16x128xf32> to vector<1x128xf32>
    %275 = vector.extract_strided_slice %3 {offsets = [12, 0], sizes = [1, 128], strides = [1, 1]} : vector<16x128xf32> to vector<1x128xf32>
    %276 = vector.extract_strided_slice %5 {offsets = [12, 0, 0], sizes = [1, 8, 128], strides = [1, 1, 1]} : vector<16x8x128xf32> to vector<1x8x128xf32>
    %277 = vector.shape_cast %276 : vector<1x8x128xf32> to vector<8x128xf32>
    %278 = vector.broadcast %274 : vector<1x128xf32> to vector<8x128xf32>
    %279 = arith.mulf %278, %277 : vector<8x128xf32>
    %280 = arith.addf %263, %279 : vector<8x128xf32>
    %281 = vector.extract_strided_slice %7 {offsets = [12, 0, 0], sizes = [1, 8, 128], strides = [1, 1, 1]} : vector<16x8x128xf32> to vector<1x8x128xf32>
    %282 = vector.shape_cast %281 : vector<1x8x128xf32> to vector<8x128xf32>
    %283 = vector.broadcast %275 : vector<1x128xf32> to vector<8x128xf32>
    %284 = arith.mulf %283, %282 : vector<8x128xf32>
    %285 = arith.subf %280, %284 : vector<8x128xf32>
    %286 = vector.extract_strided_slice %7 {offsets = [12, 0, 0], sizes = [1, 8, 128], strides = [1, 1, 1]} : vector<16x8x128xf32> to vector<1x8x128xf32>
    %287 = vector.shape_cast %286 : vector<1x8x128xf32> to vector<8x128xf32>
    %288 = vector.broadcast %274 : vector<1x128xf32> to vector<8x128xf32>
    %289 = arith.mulf %288, %287 : vector<8x128xf32>
    %290 = arith.addf %273, %289 : vector<8x128xf32>
    %291 = vector.extract_strided_slice %5 {offsets = [12, 0, 0], sizes = [1, 8, 128], strides = [1, 1, 1]} : vector<16x8x128xf32> to vector<1x8x128xf32>
    %292 = vector.shape_cast %291 : vector<1x8x128xf32> to vector<8x128xf32>
    %293 = vector.broadcast %275 : vector<1x128xf32> to vector<8x128xf32>
    %294 = arith.mulf %293, %292 : vector<8x128xf32>
    %295 = arith.addf %290, %294 : vector<8x128xf32>
    %296 = vector.extract_strided_slice %1 {offsets = [13, 0], sizes = [1, 128], strides = [1, 1]} : vector<16x128xf32> to vector<1x128xf32>
    %297 = vector.extract_strided_slice %3 {offsets = [13, 0], sizes = [1, 128], strides = [1, 1]} : vector<16x128xf32> to vector<1x128xf32>
    %298 = vector.extract_strided_slice %5 {offsets = [13, 0, 0], sizes = [1, 8, 128], strides = [1, 1, 1]} : vector<16x8x128xf32> to vector<1x8x128xf32>
    %299 = vector.shape_cast %298 : vector<1x8x128xf32> to vector<8x128xf32>
    %300 = vector.broadcast %296 : vector<1x128xf32> to vector<8x128xf32>
    %301 = arith.mulf %300, %299 : vector<8x128xf32>
    %302 = arith.addf %285, %301 : vector<8x128xf32>
    %303 = vector.extract_strided_slice %7 {offsets = [13, 0, 0], sizes = [1, 8, 128], strides = [1, 1, 1]} : vector<16x8x128xf32> to vector<1x8x128xf32>
    %304 = vector.shape_cast %303 : vector<1x8x128xf32> to vector<8x128xf32>
    %305 = vector.broadcast %297 : vector<1x128xf32> to vector<8x128xf32>
    %306 = arith.mulf %305, %304 : vector<8x128xf32>
    %307 = arith.subf %302, %306 : vector<8x128xf32>
    %308 = vector.extract_strided_slice %7 {offsets = [13, 0, 0], sizes = [1, 8, 128], strides = [1, 1, 1]} : vector<16x8x128xf32> to vector<1x8x128xf32>
    %309 = vector.shape_cast %308 : vector<1x8x128xf32> to vector<8x128xf32>
    %310 = vector.broadcast %296 : vector<1x128xf32> to vector<8x128xf32>
    %311 = arith.mulf %310, %309 : vector<8x128xf32>
    %312 = arith.addf %295, %311 : vector<8x128xf32>
    %313 = vector.extract_strided_slice %5 {offsets = [13, 0, 0], sizes = [1, 8, 128], strides = [1, 1, 1]} : vector<16x8x128xf32> to vector<1x8x128xf32>
    %314 = vector.shape_cast %313 : vector<1x8x128xf32> to vector<8x128xf32>
    %315 = vector.broadcast %297 : vector<1x128xf32> to vector<8x128xf32>
    %316 = arith.mulf %315, %314 : vector<8x128xf32>
    %317 = arith.addf %312, %316 : vector<8x128xf32>
    %318 = vector.extract_strided_slice %1 {offsets = [14, 0], sizes = [1, 128], strides = [1, 1]} : vector<16x128xf32> to vector<1x128xf32>
    %319 = vector.extract_strided_slice %3 {offsets = [14, 0], sizes = [1, 128], strides = [1, 1]} : vector<16x128xf32> to vector<1x128xf32>
    %320 = vector.extract_strided_slice %5 {offsets = [14, 0, 0], sizes = [1, 8, 128], strides = [1, 1, 1]} : vector<16x8x128xf32> to vector<1x8x128xf32>
    %321 = vector.shape_cast %320 : vector<1x8x128xf32> to vector<8x128xf32>
    %322 = vector.broadcast %318 : vector<1x128xf32> to vector<8x128xf32>
    %323 = arith.mulf %322, %321 : vector<8x128xf32>
    %324 = arith.addf %307, %323 : vector<8x128xf32>
    %325 = vector.extract_strided_slice %7 {offsets = [14, 0, 0], sizes = [1, 8, 128], strides = [1, 1, 1]} : vector<16x8x128xf32> to vector<1x8x128xf32>
    %326 = vector.shape_cast %325 : vector<1x8x128xf32> to vector<8x128xf32>
    %327 = vector.broadcast %319 : vector<1x128xf32> to vector<8x128xf32>
    %328 = arith.mulf %327, %326 : vector<8x128xf32>
    %329 = arith.subf %324, %328 : vector<8x128xf32>
    %330 = vector.extract_strided_slice %7 {offsets = [14, 0, 0], sizes = [1, 8, 128], strides = [1, 1, 1]} : vector<16x8x128xf32> to vector<1x8x128xf32>
    %331 = vector.shape_cast %330 : vector<1x8x128xf32> to vector<8x128xf32>
    %332 = vector.broadcast %318 : vector<1x128xf32> to vector<8x128xf32>
    %333 = arith.mulf %332, %331 : vector<8x128xf32>
    %334 = arith.addf %317, %333 : vector<8x128xf32>
    %335 = vector.extract_strided_slice %5 {offsets = [14, 0, 0], sizes = [1, 8, 128], strides = [1, 1, 1]} : vector<16x8x128xf32> to vector<1x8x128xf32>
    %336 = vector.shape_cast %335 : vector<1x8x128xf32> to vector<8x128xf32>
    %337 = vector.broadcast %319 : vector<1x128xf32> to vector<8x128xf32>
    %338 = arith.mulf %337, %336 : vector<8x128xf32>
    %339 = arith.addf %334, %338 : vector<8x128xf32>
    %340 = vector.extract_strided_slice %1 {offsets = [15, 0], sizes = [1, 128], strides = [1, 1]} : vector<16x128xf32> to vector<1x128xf32>
    %341 = vector.extract_strided_slice %3 {offsets = [15, 0], sizes = [1, 128], strides = [1, 1]} : vector<16x128xf32> to vector<1x128xf32>
    %342 = vector.extract_strided_slice %5 {offsets = [15, 0, 0], sizes = [1, 8, 128], strides = [1, 1, 1]} : vector<16x8x128xf32> to vector<1x8x128xf32>
    %343 = vector.shape_cast %342 : vector<1x8x128xf32> to vector<8x128xf32>
    %344 = vector.broadcast %340 : vector<1x128xf32> to vector<8x128xf32>
    %345 = arith.mulf %344, %343 : vector<8x128xf32>
    %346 = arith.addf %329, %345 : vector<8x128xf32>
    %347 = vector.extract_strided_slice %7 {offsets = [15, 0, 0], sizes = [1, 8, 128], strides = [1, 1, 1]} : vector<16x8x128xf32> to vector<1x8x128xf32>
    %348 = vector.shape_cast %347 : vector<1x8x128xf32> to vector<8x128xf32>
    %349 = vector.broadcast %341 : vector<1x128xf32> to vector<8x128xf32>
    %350 = arith.mulf %349, %348 : vector<8x128xf32>
    %351 = arith.subf %346, %350 : vector<8x128xf32>
    %352 = vector.extract_strided_slice %7 {offsets = [15, 0, 0], sizes = [1, 8, 128], strides = [1, 1, 1]} : vector<16x8x128xf32> to vector<1x8x128xf32>
    %353 = vector.shape_cast %352 : vector<1x8x128xf32> to vector<8x128xf32>
    %354 = vector.broadcast %340 : vector<1x128xf32> to vector<8x128xf32>
    %355 = arith.mulf %354, %353 : vector<8x128xf32>
    %356 = arith.addf %339, %355 : vector<8x128xf32>
    %357 = vector.extract_strided_slice %5 {offsets = [15, 0, 0], sizes = [1, 8, 128], strides = [1, 1, 1]} : vector<16x8x128xf32> to vector<1x8x128xf32>
    %358 = vector.shape_cast %357 : vector<1x8x128xf32> to vector<8x128xf32>
    %359 = vector.broadcast %341 : vector<1x128xf32> to vector<8x128xf32>
    %360 = arith.mulf %359, %358 : vector<8x128xf32>
    %361 = arith.addf %356, %360 : vector<8x128xf32>
    %c0_13 = arith.constant 0 : index
    %c0_14 = arith.constant 0 : index
    %c0_15 = arith.constant 0 : index
    %362 = vector.load %arg4[%c0_13, %c0_14, %c0_15] : memref<2x8x128xf32, #tpu.memory_space<vmem>>, vector<1x8x128xf32>
    %363 = vector.shape_cast %362 : vector<1x8x128xf32> to vector<8x128xf32>
    %364 = vector.shape_cast %351 : vector<8x128xf32> to vector<1x8x128xf32>
    tpu.vector_store %arg4[%c0_13, %c0_14, %c0_15], %364 {strides = array<i32>} : memref<2x8x128xf32, #tpu.memory_space<vmem>>, vector<1x8x128xf32>,
    %c1_16 = arith.constant 1 : index
    %c0_17 = arith.constant 0 : index
    %c0_18 = arith.constant 0 : index
    %365 = vector.load %arg4[%c1_16, %c0_17, %c0_18] : memref<2x8x128xf32, #tpu.memory_space<vmem>>, vector<1x8x128xf32>
    %366 = vector.shape_cast %365 : vector<1x8x128xf32> to vector<8x128xf32>
    %367 = vector.shape_cast %361 : vector<8x128xf32> to vector<1x8x128xf32>
    tpu.vector_store %arg4[%c1_16, %c0_17, %c0_18], %367 {strides = array<i32>} : memref<2x8x128xf32, #tpu.memory_space<vmem>>, vector<1x8x128xf32>,
    return
  }
  func.func @transform_0(%arg0: i32, %arg1: i32) -> (i32, i32, i32) {
    %c0_i32 = arith.constant 0 : i32
    %c0_i32_0 = arith.constant 0 : i32
    %c0_i32_1 = arith.constant 0 : i32
    return %c0_i32, %c0_i32_0, %arg1 : i32, i32, i32
  }
  func.func @transform_1(%arg0: i32, %arg1: i32) -> (i32, i32, i32, i32) {
    %c0_i32 = arith.constant 0 : i32
    %c0_i32_0 = arith.constant 0 : i32
    %c0_i32_1 = arith.constant 0 : i32
    return %c0_i32, %c0_i32_0, %arg0, %arg1 : i32, i32, i32, i32
  }
  func.func @transform_2(%arg0: i32, %arg1: i32) -> (i32, i32, i32) {
    %c0_i32 = arith.constant 0 : i32
    %c0_i32_0 = arith.constant 0 : i32
    return %c0_i32, %arg0, %arg1 : i32, i32, i32
  }
}

module attributes {stable_mosaic.version = 11 : i64} {
  func.func @_cf_res_linear_relu_kernel(%arg0: i32, %arg1: memref<16x512xf32, #tpu.memory_space<vmem>>, %arg2: memref<16x512xbf16, #tpu.memory_space<vmem>>, %arg3: memref<16x16xf32, #tpu.memory_space<vmem>>, %arg4: memref<16x1xf32, #tpu.memory_space<vmem>>, %arg5: memref<16x512xbf16, #tpu.memory_space<vmem>>) attributes {dimension_semantics = [#tpu.dimension_semantics<parallel>], iteration_bounds = array<i64: 2>, scalar_prefetch = 0 : i64, scratch_operands = 0 : i64, tpu.core_type = #tpu.core_type<tc>, window_params = [{transform_indices = @transform_0, window_bounds = array<i64: 16, 512>}, {transform_indices = @transform_1, window_bounds = array<i64: 16, 512>}, {pipeline_mode = #tpu.pipeline_mode<synchronous>, transform_indices = @transform_2, window_bounds = array<i64: 16, 16>}, {pipeline_mode = #tpu.pipeline_mode<synchronous>, transform_indices = @transform_3, window_bounds = array<i64: 16, 1>}, {transform_indices = @transform_4, window_bounds = array<i64: 16, 512>}]} {
    %c0 = arith.constant 0 : index
    %c0_0 = arith.constant 0 : index
    %0 = vector.load %arg2[%c0, %c0_0] : memref<16x512xbf16, #tpu.memory_space<vmem>>, vector<16x512xbf16>
    %1 = arith.extf %0 : vector<16x512xbf16> to vector<16x512xf32>
    %c0_1 = arith.constant 0 : index
    %c0_2 = arith.constant 0 : index
    %2 = vector.load %arg3[%c0_1, %c0_2] : memref<16x16xf32, #tpu.memory_space<vmem>>, vector<16x16xf32>
    %cst = arith.constant dense<0.000000e+00> : vector<16x512xf32>
    %3 = tpu.matmul %2, %1, %cst {dimension_numbers = #tpu.dot_dimension_numbers<[1], [0], [0], [1], [0, 0, 1, 1], [], []>} : vector<16x16xf32>, vector<16x512xf32>, vector<16x512xf32> -> vector<16x512xf32>
    %c0_3 = arith.constant 0 : index
    %c0_4 = arith.constant 0 : index
    %4 = vector.load %arg4[%c0_3, %c0_4] : memref<16x1xf32, #tpu.memory_space<vmem>>, vector<16x1xf32>
    %5 = vector.broadcast %4 : vector<16x1xf32> to vector<16x512xf32>
    %6 = arith.addf %3, %5 : vector<16x512xf32>
    %c0_5 = arith.constant 0 : index
    %c0_6 = arith.constant 0 : index
    %7 = vector.load %arg1[%c0_5, %c0_6] : memref<16x512xf32, #tpu.memory_space<vmem>>, vector<16x512xf32>
    %8 = arith.addf %6, %7 : vector<16x512xf32>
    %cst_7 = arith.constant 0.000000e+00 : f32
    %9 = vector.broadcast %cst_7 : f32 to vector<16x512xf32>
    %10 = arith.maximumf %8, %9 : vector<16x512xf32>
    %11 = arith.truncf %10 : vector<16x512xf32> to vector<16x512xbf16>
    %c0_8 = arith.constant 0 : index
    %c0_9 = arith.constant 0 : index
    %12 = vector.load %arg5[%c0_8, %c0_9] : memref<16x512xbf16, #tpu.memory_space<vmem>>, vector<16x512xbf16>
    tpu.vector_store %arg5[%c0_8, %c0_9], %11 {strides = array<i32>} : memref<16x512xbf16, #tpu.memory_space<vmem>>, vector<16x512xbf16>,
    return
  }
  func.func @transform_0(%arg0: i32) -> (i32, i32) {
    %c0_i32 = arith.constant 0 : i32
    %c0_i32_0 = arith.constant 0 : i32
    return %c0_i32, %arg0 : i32, i32
  }
  func.func @transform_1(%arg0: i32) -> (i32, i32) {
    %c0_i32 = arith.constant 0 : i32
    %c0_i32_0 = arith.constant 0 : i32
    return %c0_i32, %arg0 : i32, i32
  }
  func.func @transform_2(%arg0: i32) -> (i32, i32) {
    %c0_i32 = arith.constant 0 : i32
    %c0_i32_0 = arith.constant 0 : i32
    %c0_i32_1 = arith.constant 0 : i32
    return %c0_i32, %c0_i32_0 : i32, i32
  }
  func.func @transform_3(%arg0: i32) -> (i32, i32) {
    %c0_i32 = arith.constant 0 : i32
    %c0_i32_0 = arith.constant 0 : i32
    %c0_i32_1 = arith.constant 0 : i32
    return %c0_i32, %c0_i32_0 : i32, i32
  }
  func.func @transform_4(%arg0: i32) -> (i32, i32) {
    %c0_i32 = arith.constant 0 : i32
    %c0_i32_0 = arith.constant 0 : i32
    return %c0_i32, %arg0 : i32, i32
  }
}

module attributes {stable_mosaic.version = 11 : i64} {
  func.func @_cf_mlp_kernel(%arg0: i32, %arg1: memref<16x512xbf16, #tpu.memory_space<vmem>>, %arg2: memref<128x16xf32, #tpu.memory_space<vmem>>, %arg3: memref<128x1xf32, #tpu.memory_space<vmem>>, %arg4: memref<1x128xf32, #tpu.memory_space<vmem>>, %arg5: memref<1x1xf32, #tpu.memory_space<vmem>>, %arg6: memref<1x512xf32, #tpu.memory_space<vmem>>) attributes {dimension_semantics = [#tpu.dimension_semantics<parallel>], iteration_bounds = array<i64: 2>, scalar_prefetch = 0 : i64, scratch_operands = 0 : i64, tpu.core_type = #tpu.core_type<tc>, window_params = [{transform_indices = @transform_0, window_bounds = array<i64: 16, 512>}, {pipeline_mode = #tpu.pipeline_mode<synchronous>, transform_indices = @transform_1, window_bounds = array<i64: 128, 16>}, {pipeline_mode = #tpu.pipeline_mode<synchronous>, transform_indices = @transform_2, window_bounds = array<i64: 128, 1>}, {pipeline_mode = #tpu.pipeline_mode<synchronous>, transform_indices = @transform_3, window_bounds = array<i64: 1, 128>}, {pipeline_mode = #tpu.pipeline_mode<synchronous>, transform_indices = @transform_4, window_bounds = array<i64: 1, 1>}, {transform_indices = @transform_5, window_bounds = array<i64: 1, 512>}]} {
    %c0 = arith.constant 0 : index
    %c0_0 = arith.constant 0 : index
    %0 = vector.load %arg1[%c0, %c0_0] : memref<16x512xbf16, #tpu.memory_space<vmem>>, vector<16x512xbf16>
    %1 = arith.extf %0 : vector<16x512xbf16> to vector<16x512xf32>
    %c0_1 = arith.constant 0 : index
    %c0_2 = arith.constant 0 : index
    %2 = vector.load %arg2[%c0_1, %c0_2] : memref<128x16xf32, #tpu.memory_space<vmem>>, vector<128x16xf32>
    %cst = arith.constant dense<0.000000e+00> : vector<128x512xf32>
    %3 = tpu.matmul %2, %1, %cst {dimension_numbers = #tpu.dot_dimension_numbers<[1], [0], [0], [1], [0, 0, 1, 1], [], []>} : vector<128x16xf32>, vector<16x512xf32>, vector<128x512xf32> -> vector<128x512xf32>
    %c0_3 = arith.constant 0 : index
    %c0_4 = arith.constant 0 : index
    %4 = vector.load %arg3[%c0_3, %c0_4] : memref<128x1xf32, #tpu.memory_space<vmem>>, vector<128x1xf32>
    %5 = vector.broadcast %4 : vector<128x1xf32> to vector<128x512xf32>
    %6 = arith.addf %3, %5 : vector<128x512xf32>
    %cst_5 = arith.constant 0.000000e+00 : f32
    %7 = vector.broadcast %cst_5 : f32 to vector<128x512xf32>
    %8 = arith.maximumf %6, %7 : vector<128x512xf32>
    %c0_6 = arith.constant 0 : index
    %c0_7 = arith.constant 0 : index
    %9 = vector.load %arg4[%c0_6, %c0_7] : memref<1x128xf32, #tpu.memory_space<vmem>>, vector<1x128xf32>
    %cst_8 = arith.constant dense<0.000000e+00> : vector<1x512xf32>
    %10 = tpu.matmul %9, %8, %cst_8 {dimension_numbers = #tpu.dot_dimension_numbers<[1], [0], [0], [1], [0, 0, 1, 1], [], []>} : vector<1x128xf32>, vector<128x512xf32>, vector<1x512xf32> -> vector<1x512xf32>
    %c0_9 = arith.constant 0 : index
    %c0_10 = arith.constant 0 : index
    %11 = vector.load %arg5[%c0_9, %c0_10] : memref<1x1xf32, #tpu.memory_space<vmem>>, vector<1x1xf32>
    %12 = vector.broadcast %11 : vector<1x1xf32> to vector<1x512xf32>
    %13 = arith.addf %10, %12 : vector<1x512xf32>
    %c0_11 = arith.constant 0 : index
    %c0_12 = arith.constant 0 : index
    %14 = vector.load %arg6[%c0_11, %c0_12] : memref<1x512xf32, #tpu.memory_space<vmem>>, vector<1x512xf32>
    tpu.vector_store %arg6[%c0_11, %c0_12], %13 {strides = array<i32>} : memref<1x512xf32, #tpu.memory_space<vmem>>, vector<1x512xf32>,
    return
  }
  func.func @transform_0(%arg0: i32) -> (i32, i32) {
    %c0_i32 = arith.constant 0 : i32
    %c0_i32_0 = arith.constant 0 : i32
    return %c0_i32, %arg0 : i32, i32
  }
  func.func @transform_1(%arg0: i32) -> (i32, i32) {
    %c0_i32 = arith.constant 0 : i32
    %c0_i32_0 = arith.constant 0 : i32
    %c0_i32_1 = arith.constant 0 : i32
    return %c0_i32, %c0_i32_0 : i32, i32
  }
  func.func @transform_2(%arg0: i32) -> (i32, i32) {
    %c0_i32 = arith.constant 0 : i32
    %c0_i32_0 = arith.constant 0 : i32
    %c0_i32_1 = arith.constant 0 : i32
    return %c0_i32, %c0_i32_0 : i32, i32
  }
  func.func @transform_3(%arg0: i32) -> (i32, i32) {
    %c0_i32 = arith.constant 0 : i32
    %c0_i32_0 = arith.constant 0 : i32
    %c0_i32_1 = arith.constant 0 : i32
    return %c0_i32, %c0_i32_0 : i32, i32
  }
  func.func @transform_4(%arg0: i32) -> (i32, i32) {
    %c0_i32 = arith.constant 0 : i32
    %c0_i32_0 = arith.constant 0 : i32
    %c0_i32_1 = arith.constant 0 : i32
    return %c0_i32, %c0_i32_0 : i32, i32
  }
  func.func @transform_5(%arg0: i32) -> (i32, i32) {
    %c0_i32 = arith.constant 0 : i32
    %c0_i32_0 = arith.constant 0 : i32
    return %c0_i32, %arg0 : i32, i32
  }
}

</mosaic_0001>

<llo_original>
// kernel: fno3d_forward.10
$region0: #{fno3d_forward.10}
  #allocation0 [shape = 'u32[]', space=smem, size = 0x4, offset = 0x4, fixed_abs, tag = 'smem constant byte address 0x4 - core index']
  #allocation1 [shape = 'u32[144,128]{1,0:T(1,128)}', space=vmem, size = 0x12000, scoped, tag = 'internal scratch']
  %s0 = inlined_call_operand.vmem [shape: f32[4,1024], index: 0, kind: input, shape index: {}]
  %s1 = inlined_call_operand.vmem [shape: f32[16,4], index: 1, kind: input, shape index: {}]
  %s2 = inlined_call_operand.vmem [shape: f32[16,1], index: 2, kind: input, shape index: {}]
  %s3 = inlined_call_operand.vmem [shape: bf16[16,1024], index: 3, kind: output, shape index: {}]
  %s4 = sld [smem:[#allocation0]]
  $region64: #{fno3d_forward.10} parent=0
    _
  %s6 = ssub.s32 1, %s4
  %s7 = scalar_select 0, %s6, %s4
  $region1: #{fno3d_forward.10} parent=0
    #allocation2 [shape = 'u8[32768]{0}', space=vmem, size = 0x8000, scoped, tag = 'output window, operand 0']
    loop: start=0, step=1, limit=4
    $region2: #{fno3d_forward.10} parent=1 // loop_pre_header
      _
    $region3: #{fno3d_forward.10} parent=1 // loop_header
      %s9 = sphi 0, %s13
      %p10 = scmp.ge.s32.totalorder %s9, 4
      %s19 = sphi 0, %s21
      %s22 = sphi 0, %s19
      %s23 = sphi 0, %s22
      %s39 = sphi 0, %s23
      %s43 = sphi 0, %s43
      %s45 = sphi 0, %s43
      %s46 = sphi 0, %s45
      %s60 = sphi 0, %s46
      %s64 = sphi 0, %s64
      %s66 = sphi 0, %s64
      %s67 = sphi 0, %s66
      %s81 = sphi 0, %s67
      %s87 = sphi 0, %s89
      %s90 = sphi 0, %s87
      %s91 = sphi 0, %s90
      %s107 = sphi 0, %s91
    $region4: #{fno3d_forward.10} parent=1 // loop_header_branch
      %12 = sbr.rel (%p10) target = $region8
    $region5: #{fno3d_forward.10} parent=1 // loop_body
      %s14 = ssub.s32 %s9, 1
      %s15 = ssub.s32 %s9, 2
      %s16 = sadd.s32 %s9, 1
      %s17 = ssub.s32 %s9, %s16
      %p18 = scmp.eq.s32.totalorder %s17, 0
      %s20 = sadd.s32 %s19, 1
      %s21 = scalar_select %p18, %s19, %s20
      %p24 = pneg %p18
      %p25 = scmp.eq.s32.totalorder %s9, 1
      %p26 = por %p24, %p25
      %p27 = scmp.ne.s32.totalorder %s19, %s22
      %p28 = scmp.eq.s32.totalorder %s9, 0
      %p29 = por %p27, %p28
      %p30 = scmp.ne.s32.totalorder %s19, %s22
      %p31 = scmp.eq.s32.totalorder %s14, 1
      %p32 = por %p30, %p31
      %p33 = scmp.ne.s32.totalorder %s22, %s23
      %p34 = scmp.eq.s32.totalorder %s14, 0
      %p35 = por %p33, %p34
      %p36 = scmp.ne.s32.totalorder %s22, %s23
      %p37 = scmp.eq.s32.totalorder %s15, 1
      %p38 = por %p36, %p37
      %p40 = scmp.ne.s32.totalorder %s23, %s39
      %p41 = scmp.eq.s32.totalorder %s15, 0
      %p42 = por %p40, %p41
      %s44 = sadd.s32 %s43, 1
      %p47 = scmp.eq.s32.totalorder %s9, 1
      %p48 = scmp.ne.s32.totalorder %s43, %s45
      %p49 = scmp.eq.s32.totalorder %s9, 0
      %p50 = por %p48, %p49
      %p51 = scmp.ne.s32.totalorder %s43, %s45
      %p52 = scmp.eq.s32.totalorder %s14, 1
      %p53 = por %p51, %p52
      %p54 = scmp.ne.s32.totalorder %s45, %s46
      %p55 = scmp.eq.s32.totalorder %s14, 0
      %p56 = por %p54, %p55
      %p57 = scmp.ne.s32.totalorder %s45, %s46
      %p58 = scmp.eq.s32.totalorder %s15, 1
      %p59 = por %p57, %p58
      %p61 = scmp.ne.s32.totalorder %s46, %s60
      %p62 = scmp.eq.s32.totalorder %s15, 0
      %p63 = por %p61, %p62
      %s65 = sadd.s32 %s64, 1
      %p68 = scmp.eq.s32.totalorder %s9, 1
      %p69 = scmp.ne.s32.totalorder %s64, %s66
      %p70 = scmp.eq.s32.totalorder %s9, 0
      %p71 = por %p69, %p70
      %p72 = scmp.ne.s32.totalorder %s64, %s66
      %p73 = scmp.eq.s32.totalorder %s14, 1
      %p74 = por %p72, %p73
      %p75 = scmp.ne.s32.totalorder %s66, %s67
      %p76 = scmp.eq.s32.totalorder %s14, 0
      %p77 = por %p75, %p76
      %p78 = scmp.ne.s32.totalorder %s66, %s67
      %p79 = scmp.eq.s32.totalorder %s15, 1
      %p80 = por %p78, %p79
      %p82 = scmp.ne.s32.totalorder %s67, %s81
      %p83 = scmp.eq.s32.totalorder %s15, 0
      %p84 = por %p82, %p83
      %s85 = ssub.s32 %s9, %s16
      %p86 = scmp.eq.s32.totalorder %s85, 0
      %s88 = sadd.s32 %s87, 1
      %s89 = scalar_select %p86, %s87, %s88
      %p92 = pneg %p86
      %p93 = scmp.eq.s32.totalorder %s9, 1
      %p94 = por %p92, %p93
      %p95 = scmp.ne.s32.totalorder %s87, %s90
      %p96 = scmp.eq.s32.totalorder %s9, 0
      %p97 = por %p95, %p96
      %p98 = scmp.ne.s32.totalorder %s87, %s90
      %p99 = scmp.eq.s32.totalorder %s14, 1
      %p100 = por %p98, %p99
      %p101 = scmp.ne.s32.totalorder %s90, %s91
      %p102 = scmp.eq.s32.totalorder %s14, 0
      %p103 = por %p101, %p102
      %p104 = scmp.ne.s32.totalorder %s90, %s91
      %p105 = scmp.eq.s32.totalorder %s15, 1
      %p106 = por %p104, %p105
      %p108 = scmp.ne.s32.totalorder %s91, %s107
      %p109 = scmp.eq.s32.totalorder %s15, 0
      %p110 = por %p108, %p109
      %p111 = scmp.le.s32.totalorder 1, %s9
      %p112 = scmp.lt.s32.totalorder %s9, 3
      %p113 = pnand %p111, %p112
      %p114 = pneg %p113
      // Predicated region
      $region9: #{fno3d_forward.10} parent=5 // pred_check
        _
      $region10: #{fno3d_forward.10} parent=5 // pred_check_branch
        %116 = sbr.rel (%p113) target = $region12
      $region11: #{fno3d_forward.10} parent=5 // pred_region
        %s117 = ssub.s32 %s9, 1
        // Predicated region
        $region13: #{fno3d_forward.10} parent=11 // pred_check
          %p118 = pneg %p56
        $region14: #{fno3d_forward.10} parent=11 // pred_check_branch
          %120 = sbr.rel (%p118) target = $region16
        $region15: #{fno3d_forward.10} parent=11 // pred_region
          _
        $region16: #{fno3d_forward.10} parent=11 // pred_fallthru
          _
        // Predicated region
        $region17: #{fno3d_forward.10} parent=11 // pred_check
          %p121 = pneg %p77
        $region18: #{fno3d_forward.10} parent=11 // pred_check_branch
          %123 = sbr.rel (%p121) target = $region20
        $region19: #{fno3d_forward.10} parent=11 // pred_region
          _
        $region20: #{fno3d_forward.10} parent=11 // pred_fallthru
          _
      $region12: #{fno3d_forward.10} parent=5 // pred_fallthru
        _
      %p124 = scmp.lt.s32.totalorder %s9, 2
      // Predicated region
      $region21: #{fno3d_forward.10} parent=5 // pred_check
        %p125 = pneg %p124
      $region22: #{fno3d_forward.10} parent=5 // pred_check_branch
        %127 = sbr.rel (%p125) target = $region24
      $region23: #{fno3d_forward.10} parent=5 // pred_region
        // Predicated region
        $region25: #{fno3d_forward.10} parent=23 // pred_check
          %p128 = pneg %p29
        $region26: #{fno3d_forward.10} parent=23 // pred_check_branch
          %130 = sbr.rel (%p128) target = $region28
        $region27: #{fno3d_forward.10} parent=23 // pred_region
          %s131 = smul.u32 4, %s9
          %p132 = scmp.lt.s32.totalorder %s131, 7
          %s133 = scalar_select %p132, %s131, 7
          %s134 = smul.addr %s133, 4
          %s135 = scalar_lea.vmem %s0, %s134
          %s136 = smul.u32 4, %s9
        $region28: #{fno3d_forward.10} parent=23 // pred_fallthru
          _
      $region24: #{fno3d_forward.10} parent=5 // pred_fallthru
        _
      %p137 = scmp.le.s32.totalorder 1, %s9
      %p138 = scmp.lt.s32.totalorder %s9, 3
      %p139 = pnand %p137, %p138
      %p140 = pneg %p139
      // Predicated region
      $region29: #{fno3d_forward.10} parent=5 // pred_check
        _
      $region30: #{fno3d_forward.10} parent=5 // pred_check_branch
        %142 = sbr.rel (%p139) target = $region32
      $region31: #{fno3d_forward.10} parent=5 // pred_region
        %s143 = ssub.s32 %s9, 1
        %s144 = smul.u32 4, %s14
        %p145 = scmp.lt.s32.totalorder %s144, 7
        %s146 = scalar_select %p145, %s144, 7
        %s147 = smul.addr %s146, 4
        %s148 = scalar_lea.vmem %s0, %s147
        %p149 = pneg %p35
        %p150 = pneg %p32
        %p151 = pneg %p56
        %p152 = pneg %p53
        %p153 = pneg %p77
        %p154 = pneg %p74
        %p155 = pneg %p103
        %p156 = pneg %p100
        %s157 = sand.u32 %s90, 1
        %s158 = sand.u32 %s90, 1
        %s159 = smul.addr %s158, 32
        %s160 = scalar_lea.vmem [#allocation2], %s159
        %s161 = smul.u32 4, %s14
        %p162 = scmp.lt.s32.totalorder %s161, 7
        %s163 = scalar_select %p162, %s161, 7
        %s164 = smul.addr %s163, 4
        %s165 = scalar_lea.vmem %s0, %s164
        %s166 = smul.u32 4, %s14
        %s167 = smul.u32 4, %s14
        %v168 = vld [vmem:[%s165] sm:$0xff]
        %v169 = vld [vmem:[%s165 + $0x8] sm:$0xff]
        %v170 = vld [vmem:[%s1] sm:$0xff]
        %v171 = vld [vmem:[%s1 + $0x8] sm:$0xff]
        %v172 = vld [vmem:[%s2] sm:$0xff]
        %v173 = vld [vmem:[%s2 + $0x8] sm:$0xff]
        %175 = vset.pattern.permute.xlu0 0
        %176 = vperm.xlu0 %175, %v172
        %v177 = vpop.permute.xlu0 %176
        %180 = vset.pattern.permute.xlu0 0
        %181 = vperm.xlu0 %180, %v173
        %v182 = vpop.permute.xlu0 %181
        %v186 = vcombine.high %v168, %v168
        %v187 = vcombine.high %v169, %v169
        %vm188 = vcmask 31744
        %v190 = vsel %vm188, %v170, 0
        %v193 = vsel %vm188, %v171, 0
        %vm195 = vcmask 1043456
        %v196 = vsel %vm195, %v168, 0
        %v198 = vsel %vm195, %v186, 0
        %v200 = vsel %vm195, %v169, 0
        %v202 = vsel %vm195, %v187, 0
        %204 = vmatprep.subr.mxu0 %v198
        %205 = vmatpush1.msra.mxu0 %v196
        %206 = vmatprep.subr.mxu0 0.0
        %207 = vmatpush1.msra.mxu0 0.0
        %208 = vmatprep.subr.mxu0 0.0
        %209 = vmatpush1.msra.mxu0 0.0
        %210 = vmatprep.subr.mxu0 0.0
        %211 = vmatpush1.msra.mxu0 0.0
        %212 = vmatprep.subr.mxu0 0.0
        %213 = vmatpush1.msra.mxu0 0.0
        %214 = vmatprep.subr.mxu0 0.0
        %215 = vmatpush1.msra.mxu0 0.0
        %216 = vmatprep.subr.mxu0 0.0
        %217 = vmatpush1.msra.mxu0 0.0
        %218 = vmatprep.subr.mxu0 0.0
        %219 = vmatpush1.msra.mxu0 0.0
        %220 = vmatprep.subr.mxu0 0.0
        %221 = vmatpush1.msra.mxu0 0.0
        %222 = vmatprep.subr.mxu0 0.0
        %223 = vmatpush1.msra.mxu0 0.0
        %224 = vmatprep.subr.mxu0 0.0
        %225 = vmatpush1.msra.mxu0 0.0
        %226 = vmatprep.subr.mxu0 0.0
        %227 = vmatpush1.msra.mxu0 0.0
        %228 = vmatprep.subr.mxu0 0.0
        %229 = vmatpush1.msra.mxu0 0.0
        %230 = vmatprep.subr.mxu0 0.0
        %231 = vmatpush1.msra.mxu0 0.0
        %232 = vmatprep.subr.mxu0 0.0
        %233 = vmatpush1.msra.mxu0 0.0
        %234 = vmatprep.subr.mxu0 0.0
        %235 = vmatpush1.msra.mxu0 0.0
        %236 = vmatprep.subr.mxu0 0.0
        %237 = vmatpush1.msra.mxu0 0.0
        %238 = vmatprep.subr.mxu0 0.0
        %239 = vmatpush1.msra.mxu0 0.0
        %240 = vmatprep.subr.mxu0 0.0
        %241 = vmatpush1.msra.mxu0 0.0
        %242 = vmatprep.subr.mxu0 0.0
        %243 = vmatpush1.msra.mxu0 0.0
        %244 = vmatprep.subr.mxu0 0.0
        %245 = vmatpush1.msra.mxu0 0.0
        %246 = vmatprep.subr.mxu0 0.0
        %247 = vmatpush1.msra.mxu0 0.0
        %248 = vmatprep.subr.mxu0 0.0
        %249 = vmatpush1.msra.mxu0 0.0
        %250 = vmatprep.subr.mxu0 0.0
        %251 = vmatpush1.msra.mxu0 0.0
        %252 = vmatprep.subr.mxu0 0.0
        %253 = vmatpush1.msra.mxu0 0.0
        %254 = vmatprep.subr.mxu0 0.0
        %255 = vmatpush1.msra.mxu0 0.0
        %256 = vmatprep.subr.mxu0 0.0
        %257 = vmatpush1.msra.mxu0 0.0
        %258 = vmatprep.subr.mxu0 0.0
        %259 = vmatpush1.msra.mxu0 0.0
        %260 = vmatprep.subr.mxu0 0.0
        %261 = vmatpush1.msra.mxu0 0.0
        %262 = vmatprep.subr.mxu0 0.0
        %263 = vmatpush1.msra.mxu0 0.0
        %264 = vmatprep.subr.mxu0 0.0
        %265 = vmatpush1.msra.mxu0 0.0
        %266 = vmatprep.subr.mxu0 0.0
        %267 = vmatpush1.msra.mxu0 0.0
        %268 = vmatprep.mubr.f32.mxu0 0.0
        %269 = vmatmul.mubr.f32.gmra.mrb[0].mxu0 %v190
        %v270 = vpop.f32.mrb[0].mxu0
        %v271 = vadd.f32 %v177, %v270
        %v272 = vpop.f32.mrb[0].mxu0
        %v273 = vadd.f32 %v177, %v272
        %274 = vmatprep.mubr.f32.mxu0 0.0
        %275 = vmatmul.mubr.f32.gmra.mrb[0].mxu0 %v193
        %v276 = vpop.f32.mrb[0].mxu0
        %v277 = vadd.f32 %v182, %v276
        %v278 = vpop.f32.mrb[0].mxu0
        %v279 = vadd.f32 %v182, %v278
        %280 = vdwg.mxu0
        %281 = vmatprep.subr.mxu0 %v202
        %282 = vmatpush1.msra.mxu0 %v200
        %283 = vmatprep.subr.mxu0 0.0
        %284 = vmatpush1.msra.mxu0 0.0
        %285 = vmatprep.subr.mxu0 0.0
        %286 = vmatpush1.msra.mxu0 0.0
        %287 = vmatprep.subr.mxu0 0.0
        %288 = vmatpush1.msra.mxu0 0.0
        %289 = vmatprep.subr.mxu0 0.0
        %290 = vmatpush1.msra.mxu0 0.0
        %291 = vmatprep.subr.mxu0 0.0
        %292 = vmatpush1.msra.mxu0 0.0
        %293 = vmatprep.subr.mxu0 0.0
        %294 = vmatpush1.msra.mxu0 0.0
        %295 = vmatprep.subr.mxu0 0.0
        %296 = vmatpush1.msra.mxu0 0.0
        %297 = vmatprep.subr.mxu0 0.0
        %298 = vmatpush1.msra.mxu0 0.0
        %299 = vmatprep.subr.mxu0 0.0
        %300 = vmatpush1.msra.mxu0 0.0
        %301 = vmatprep.subr.mxu0 0.0
        %302 = vmatpush1.msra.mxu0 0.0
        %303 = vmatprep.subr.mxu0 0.0
        %304 = vmatpush1.msra.mxu0 0.0
        %305 = vmatprep.subr.mxu0 0.0
        %306 = vmatpush1.msra.mxu0 0.0
        %307 = vmatprep.subr.mxu0 0.0
        %308 = vmatpush1.msra.mxu0 0.0
        %309 = vmatprep.subr.mxu0 0.0
        %310 = vmatpush1.msra.mxu0 0.0
        %311 = vmatprep.subr.mxu0 0.0
        %312 = vmatpush1.msra.mxu0 0.0
        %313 = vmatprep.subr.mxu0 0.0
        %314 = vmatpush1.msra.mxu0 0.0
        %315 = vmatprep.subr.mxu0 0.0
        %316 = vmatpush1.msra.mxu0 0.0
        %317 = vmatprep.subr.mxu0 0.0
        %318 = vmatpush1.msra.mxu0 0.0
        %319 = vmatprep.subr.mxu0 0.0
        %320 = vmatpush1.msra.mxu0 0.0
        %321 = vmatprep.subr.mxu0 0.0
        %322 = vmatpush1.msra.mxu0 0.0
        %323 = vmatprep.subr.mxu0 0.0
        %324 = vmatpush1.msra.mxu0 0.0
        %325 = vmatprep.subr.mxu0 0.0
        %326 = vmatpush1.msra.mxu0 0.0
        %327 = vmatprep.subr.mxu0 0.0
        %328 = vmatpush1.msra.mxu0 0.0
        %329 = vmatprep.subr.mxu0 0.0
        %330 = vmatpush1.msra.mxu0 0.0
        %331 = vmatprep.subr.mxu0 0.0
        %332 = vmatpush1.msra.mxu0 0.0
        %333 = vmatprep.subr.mxu0 0.0
        %334 = vmatpush1.msra.mxu0 0.0
        %335 = vmatprep.subr.mxu0 0.0
        %336 = vmatpush1.msra.mxu0 0.0
        %337 = vmatprep.subr.mxu0 0.0
        %338 = vmatpush1.msra.mxu0 0.0
        %339 = vmatprep.subr.mxu0 0.0
        %340 = vmatpush1.msra.mxu0 0.0
        %341 = vmatprep.subr.mxu0 0.0
        %342 = vmatpush1.msra.mxu0 0.0
        %343 = vmatprep.subr.mxu0 0.0
        %344 = vmatpush1.msra.mxu0 0.0
        %345 = vmatprep.mubr.f32.mxu0 0.0
        %346 = vmatmul.mubr.f32.gmra.mrb[0].mxu0 %v190
        %v347 = vpop.f32.mrb[0].mxu0
        %v348 = vadd.f32 %v177, %v347
        %v349 = vpop.f32.mrb[0].mxu0
        %v350 = vadd.f32 %v177, %v349
        %351 = vmatprep.mubr.f32.mxu0 0.0
        %352 = vmatmul.mubr.f32.gmra.mrb[0].mxu0 %v193
        %v353 = vpop.f32.mrb[0].mxu0
        %v354 = vadd.f32 %v182, %v353
        %v355 = vpop.f32.mrb[0].mxu0
        %v356 = vadd.f32 %v182, %v355
        %357 = vdwg.mxu0
        %v358 = vpack.c.bf16 %v277, %v271
        %v359 = vpack.c.bf16 %v279, %v273
        %v360 = vpack.c.bf16 %v354, %v348
        %v361 = vpack.c.bf16 %v356, %v350
        %v366 = vunpack.c.l.b16 %v358
        %v367 = vunpack.c.l.b16 %v359
        %v368 = vunpack.c.l.b16 %v360
        %v369 = vunpack.c.l.b16 %v361
        %v370 = vunpack.c.h.b16 %v358
        %v371 = vunpack.c.h.b16 %v359
        %v372 = vunpack.c.h.b16 %v360
        %v373 = vunpack.c.h.b16 %v361
        %v374 = vpack.c.b16 %v367, %v366
        %v375 = vpack.c.b16 %v369, %v368
        %v376 = vpack.c.b16 %v371, %v370
        %v377 = vpack.c.b16 %v373, %v372
        %382 = vst [vmem:[%s160] sm:$0xff] %v374
        %383 = vst [vmem:[%s160 + $0x8] sm:$0xff] %v375
        %384 = vst [vmem:[%s160 + $0x10] sm:$0xff] %v376
        %385 = vst [vmem:[%s160 + $0x18] sm:$0xff] %v377
        %s386 = sand.u32 %s90, 1
        %s387 = sand.u32 %s90, 1
        %s388 = smul.addr %s387, 32
        %s389 = scalar_lea.vmem [#allocation2], %s388
        // Predicated region
        $region33: #{fno3d_forward.10} parent=31 // pred_check
          %p390 = pneg %p100
        $region34: #{fno3d_forward.10} parent=31 // pred_check_branch
          %392 = sbr.rel (%p390) target = $region36
        $region35: #{fno3d_forward.10} parent=31 // pred_region
          %s393 = smul.u32 4, %s14
          %s394 = smul.addr %s393, 4
          %s395 = scalar_lea.vmem %s3, %s394
          // Predicated region
          $region37: #{fno3d_forward.10} parent=35 // pred_check
            _
          $region38: #{fno3d_forward.10} parent=35 // pred_check_branch
            %397 = sbr.rel (0) target = $region40
          $region39: #{fno3d_forward.10} parent=35 // pred_region
            // Predicated region
            $region41: #{fno3d_forward.10} parent=39 // pred_check
              _
            $region42: #{fno3d_forward.10} parent=39 // pred_check_branch
              %399 = sbr.rel (0) target = $region44
            $region43: #{fno3d_forward.10} parent=39 // pred_region
              loop: start=0, step=1, limit=1
              $region45: #{fno3d_forward.10} parent=43 // loop_pre_header
                _
              $region46: #{fno3d_forward.10} parent=43 // loop_header
                %s401 = sphi 0, %s405
                %p402 = scmp.ge.s32.totalorder %s401, 1
                %s406 = sphi %s389, %s389
                %s407 = sphi %s395, %s395
              $region47: #{fno3d_forward.10} parent=43 // loop_header_branch
                %404 = sbr.rel (%p402) target = $region51
              $region48: #{fno3d_forward.10} parent=43 // loop_body
                %v408 = vld [vmem:[%s406] sm:$0xff]
                %409 = vst [vmem:[%s407] sm:$0xff] %v408
                %v410 = vld [vmem:[%s406 + $0x8] sm:$0xff]
                %411 = vst [vmem:[%s407 + $0x8] sm:$0xff] %v410
                %v412 = vld [vmem:[%s406 + $0x10] sm:$0xff]
                %413 = vst [vmem:[%s407 + $0x20] sm:$0xff] %v412
                %v414 = vld [vmem:[%s406 + $0x18] sm:$0xff]
                %415 = vst [vmem:[%s407 + $0x28] sm:$0xff] %v414
              $region49: #{fno3d_forward.10} parent=43 // loop_footer
                %s405 = sadd.s32 1, %s401
              $region50: #{fno3d_forward.10} parent=43 // loop_footer_branch
                %400 = sbr.rel target = $region46
              $region51: #{fno3d_forward.10} parent=43 // loop_exit
                _
            $region44: #{fno3d_forward.10} parent=39 // pred_fallthru
              _
            // Predicated region
            $region52: #{fno3d_forward.10} parent=39 // pred_check
              _
            $region53: #{fno3d_forward.10} parent=39 // pred_check_branch
              %417 = sbr.rel target = $region55
            $region54: #{fno3d_forward.10} parent=39 // pred_region
              _
            $region55: #{fno3d_forward.10} parent=39 // pred_fallthru
              _
          $region40: #{fno3d_forward.10} parent=35 // pred_fallthru
            _
          %418 = vnop
        $region36: #{fno3d_forward.10} parent=31 // pred_fallthru
          _
      $region32: #{fno3d_forward.10} parent=5 // pred_fallthru
        _
      %p419 = scmp.le.s32.totalorder 2, %s9
      // Predicated region
      $region56: #{fno3d_forward.10} parent=5 // pred_check
        %p420 = pneg %p419
      $region57: #{fno3d_forward.10} parent=5 // pred_check_branch
        %422 = sbr.rel (%p420) target = $region59
      $region58: #{fno3d_forward.10} parent=5 // pred_region
        %s423 = ssub.s32 %s9, 2
        // Predicated region
        $region60: #{fno3d_forward.10} parent=58 // pred_check
          %p424 = pneg %p106
        $region61: #{fno3d_forward.10} parent=58 // pred_check_branch
          %426 = sbr.rel (%p424) target = $region63
        $region62: #{fno3d_forward.10} parent=58 // pred_region
          %s427 = sand.u32 %s91, 1
          %s428 = sand.u32 %s91, 1
          %s429 = smul.addr %s428, 32
          %s430 = scalar_lea.vmem [#allocation2], %s429
        $region63: #{fno3d_forward.10} parent=58 // pred_fallthru
          _
      $region59: #{fno3d_forward.10} parent=5 // pred_fallthru
        _
    $region6: #{fno3d_forward.10} parent=1 // loop_footer
      %s13 = sadd.s32 1, %s9
    $region7: #{fno3d_forward.10} parent=1 // loop_footer_branch
      %8 = sbr.rel target = $region3
    $region8: #{fno3d_forward.10} parent=1 // loop_exit
      _

// kernel: fno3d_forward.11
$region0: #{fno3d_forward.11}
  #allocation0 [shape = 'u32[]', space=smem, size = 0x4, offset = 0x4, fixed_abs, tag = 'smem constant byte address 0x4 - core index']
  #allocation1 [shape = 'u32[144,128]{1,0:T(1,128)}', space=vmem, size = 0x12000, scoped, tag = 'internal scratch']
  %s0 = inlined_call_operand.vmem [shape: f32[2,16,128], index: 0, kind: input, shape index: {}]
  %s1 = inlined_call_operand.vmem [shape: f32[2,16,16,128], index: 1, kind: input, shape index: {}]
  %s2 = inlined_call_operand.vmem [shape: f32[2,16,128], index: 2, kind: output, shape index: {}]
  %s3 = sld [smem:[#allocation0]]
  $region113: #{fno3d_forward.11} parent=0
    _
  %s5 = ssub.s32 1, %s3
  %s6 = scalar_select 0, %s5, %s3
  $region1: #{fno3d_forward.11} parent=0
    #allocation2 [shape = 'u8[262144]{0}', space=vmem, size = 0x40000, scoped, tag = 'input window, operand 1']
    #allocation3 [shape = 'u8[16384]{0}', space=vmem, size = 0x4000, scoped, tag = 'output window, operand 0']
    loop: start=0, step=1, limit=4
    $region2: #{fno3d_forward.11} parent=1 // loop_pre_header
      _
    $region3: #{fno3d_forward.11} parent=1 // loop_header
      %s8 = sphi 0, %s12
      %p9 = scmp.ge.s32.totalorder %s8, 4
      %s15 = sphi 0, %s27
      %s16 = sphi 0, %s23
      %s17 = sphi 0, %s15
      %s18 = sphi 0, %s16
      %s19 = sphi 0, %s17
      %s20 = sphi 0, %s18
      %s30 = sphi 0, %s32
      %s33 = sphi 0, %s30
      %s34 = sphi 0, %s33
      %s50 = sphi 0, %s34
      %s58 = sphi 0, %s60
      %s61 = sphi 0, %s58
      %s62 = sphi 0, %s61
      %s78 = sphi 0, %s62
      %s86 = sphi 0, %s88
      %s89 = sphi 0, %s86
      %s90 = sphi 0, %s89
      %s106 = sphi 0, %s90
    $region4: #{fno3d_forward.11} parent=1 // loop_header_branch
      %11 = sbr.rel (%p9) target = $region8
    $region5: #{fno3d_forward.11} parent=1 // loop_body
      %s13 = ssub.s32 %s8, 1
      %s14 = ssub.s32 %s8, 2
      %s21 = sadd.s32 1, %s16
      %p22 = scmp.ge.s32.totalorder %s21, 1
      %s23 = scalar_select %p22, 0, %s21
      %s24 = sadd.s32 1, %s15
      %s25 = scalar_select %p22, %s24, %s15
      %p26 = scmp.ge.s32.totalorder %s25, 2
      %s27 = scalar_select %p26, 0, %s25
      %s28 = ssub.s32 %s16, %s23
      %p29 = scmp.eq.s32.totalorder %s28, 0
      %s31 = sadd.s32 %s30, 1
      %s32 = scalar_select %p29, %s30, %s31
      %p35 = pneg %p29
      %p36 = scmp.eq.s32.totalorder %s8, 1
      %p37 = por %p35, %p36
      %p38 = scmp.ne.s32.totalorder %s30, %s33
      %p39 = scmp.eq.s32.totalorder %s8, 0
      %p40 = por %p38, %p39
      %p41 = scmp.ne.s32.totalorder %s30, %s33
      %p42 = scmp.eq.s32.totalorder %s13, 1
      %p43 = por %p41, %p42
      %p44 = scmp.ne.s32.totalorder %s33, %s34
      %p45 = scmp.eq.s32.totalorder %s13, 0
      %p46 = por %p44, %p45
      %p47 = scmp.ne.s32.totalorder %s33, %s34
      %p48 = scmp.eq.s32.totalorder %s14, 1
      %p49 = por %p47, %p48
      %p51 = scmp.ne.s32.totalorder %s34, %s50
      %p52 = scmp.eq.s32.totalorder %s14, 0
      %p53 = por %p51, %p52
      %s54 = ssub.s32 %s15, %s27
      %s55 = ssub.s32 %s16, %s23
      %s56 = sor.u32 %s54, %s55
      %p57 = scmp.eq.s32.totalorder %s56, 0
      %s59 = sadd.s32 %s58, 1
      %s60 = scalar_select %p57, %s58, %s59
      %p63 = pneg %p57
      %p64 = scmp.eq.s32.totalorder %s8, 1
      %p65 = por %p63, %p64
      %p66 = scmp.ne.s32.totalorder %s58, %s61
      %p67 = scmp.eq.s32.totalorder %s8, 0
      %p68 = por %p66, %p67
      %p69 = scmp.ne.s32.totalorder %s58, %s61
      %p70 = scmp.eq.s32.totalorder %s13, 1
      %p71 = por %p69, %p70
      %p72 = scmp.ne.s32.totalorder %s61, %s62
      %p73 = scmp.eq.s32.totalorder %s13, 0
      %p74 = por %p72, %p73
      %p75 = scmp.ne.s32.totalorder %s61, %s62
      %p76 = scmp.eq.s32.totalorder %s14, 1
      %p77 = por %p75, %p76
      %p79 = scmp.ne.s32.totalorder %s62, %s78
      %p80 = scmp.eq.s32.totalorder %s14, 0
      %p81 = por %p79, %p80
      %s82 = ssub.s32 %s15, %s27
      %s83 = ssub.s32 %s16, %s23
      %s84 = sor.u32 %s82, %s83
      %p85 = scmp.eq.s32.totalorder %s84, 0
      %s87 = sadd.s32 %s86, 1
      %s88 = scalar_select %p85, %s86, %s87
      %p91 = pneg %p85
      %p92 = scmp.eq.s32.totalorder %s8, 1
      %p93 = por %p91, %p92
      %p94 = scmp.ne.s32.totalorder %s86, %s89
      %p95 = scmp.eq.s32.totalorder %s8, 0
      %p96 = por %p94, %p95
      %p97 = scmp.ne.s32.totalorder %s86, %s89
      %p98 = scmp.eq.s32.totalorder %s13, 1
      %p99 = por %p97, %p98
      %p100 = scmp.ne.s32.totalorder %s89, %s90
      %p101 = scmp.eq.s32.totalorder %s13, 0
      %p102 = por %p100, %p101
      %p103 = scmp.ne.s32.totalorder %s89, %s90
      %p104 = scmp.eq.s32.totalorder %s14, 1
      %p105 = por %p103, %p104
      %p107 = scmp.ne.s32.totalorder %s90, %s106
      %p108 = scmp.eq.s32.totalorder %s14, 0
      %p109 = por %p107, %p108
      %p110 = scmp.le.s32.totalorder 1, %s8
      %p111 = scmp.lt.s32.totalorder %s8, 3
      %p112 = pnand %p110, %p111
      %p113 = pneg %p112
      // Predicated region
      $region9: #{fno3d_forward.11} parent=5 // pred_check
        _
      $region10: #{fno3d_forward.11} parent=5 // pred_check_branch
        %115 = sbr.rel (%p112) target = $region12
      $region11: #{fno3d_forward.11} parent=5 // pred_region
        %s116 = ssub.s32 %s8, 1
        // Predicated region
        $region13: #{fno3d_forward.11} parent=11 // pred_check
          %p117 = pneg %p46
        $region14: #{fno3d_forward.11} parent=11 // pred_check_branch
          %119 = sbr.rel (%p117) target = $region16
        $region15: #{fno3d_forward.11} parent=11 // pred_region
          %p120 = scmp.lt.s32.totalorder %s18, 0
          %s121 = scalar_select %p120, %s18, 0
          %s122 = smul.addr %s121, 8
          %s123 = scalar_lea.vmem %s0, %s122
        $region16: #{fno3d_forward.11} parent=11 // pred_fallthru
          _
      $region12: #{fno3d_forward.11} parent=5 // pred_fallthru
        _
      %p124 = scmp.lt.s32.totalorder %s8, 2
      // Predicated region
      $region17: #{fno3d_forward.11} parent=5 // pred_check
        %p125 = pneg %p124
      $region18: #{fno3d_forward.11} parent=5 // pred_check_branch
        %127 = sbr.rel (%p125) target = $region20
      $region19: #{fno3d_forward.11} parent=5 // pred_region
        // Predicated region
        $region21: #{fno3d_forward.11} parent=19 // pred_check
          %p128 = pneg %p68
        $region22: #{fno3d_forward.11} parent=19 // pred_check_branch
          %130 = sbr.rel (%p128) target = $region24
        $region23: #{fno3d_forward.11} parent=19 // pred_region
          %s131 = sand.u32 %s58, 1
          %s132 = sand.u32 %s58, 1
          %s133 = smul.addr %s132, 256
          %s134 = scalar_lea.vmem [#allocation2], %s133
          %s135 = sadd.s32 %s16, %s15
          %s136 = smul.addr %s135, 8
          %s137 = scalar_lea.vmem %s1, %s136
          // Predicated region
          $region25: #{fno3d_forward.11} parent=23 // pred_check
            _
          $region26: #{fno3d_forward.11} parent=23 // pred_check_branch
            %139 = sbr.rel (0) target = $region28
          $region27: #{fno3d_forward.11} parent=23 // pred_region
            // Predicated region
            $region29: #{fno3d_forward.11} parent=27 // pred_check
              _
            $region30: #{fno3d_forward.11} parent=27 // pred_check_branch
              %141 = sbr.rel (0) target = $region32
            $region31: #{fno3d_forward.11} parent=27 // pred_region
              // Predicated region
              $region44: #{fno3d_forward.11} parent=31 // pred_check
                _
              $region45: #{fno3d_forward.11} parent=31 // pred_check_branch
                %218 = sbr.rel (0) target = $region47
              $region46: #{fno3d_forward.11} parent=31 // pred_region
                loop: start=0, step=1, limit=1
                $region48: #{fno3d_forward.11} parent=46 // loop_pre_header
                  _
                $region49: #{fno3d_forward.11} parent=46 // loop_header
                  %s220 = sphi 0, %s224
                  %p221 = scmp.ge.s32.totalorder %s220, 1
                  %s225 = sphi %s137, %s137
                  %s226 = sphi %s134, %s134
                $region50: #{fno3d_forward.11} parent=46 // loop_header_branch
                  %223 = sbr.rel (%p221) target = $region54
                $region51: #{fno3d_forward.11} parent=46 // loop_body
                  %v227 = vld [vmem:[%s225] sm:$0xff]
                  %228 = vst [vmem:[%s226] sm:$0xff] %v227
                  %v229 = vld [vmem:[%s225 + $0x10] sm:$0xff]
                  %230 = vst [vmem:[%s226 + $0x8] sm:$0xff] %v229
                  %v231 = vld [vmem:[%s225 + $0x20] sm:$0xff]
                  %232 = vst [vmem:[%s226 + $0x10] sm:$0xff] %v231
                  %v233 = vld [vmem:[%s225 + $0x30] sm:$0xff]
                  %234 = vst [vmem:[%s226 + $0x18] sm:$0xff] %v233
                  %v235 = vld [vmem:[%s225 + $0x40] sm:$0xff]
                  %236 = vst [vmem:[%s226 + $0x20] sm:$0xff] %v235
                  %v237 = vld [vmem:[%s225 + $0x50] sm:$0xff]
                  %238 = vst [vmem:[%s226 + $0x28] sm:$0xff] %v237
                  %v239 = vld [vmem:[%s225 + $0x60] sm:$0xff]
                  %240 = vst [vmem:[%s226 + $0x30] sm:$0xff] %v239
                  %v241 = vld [vmem:[%s225 + $0x70] sm:$0xff]
                  %242 = vst [vmem:[%s226 + $0x38] sm:$0xff] %v241
                  %v243 = vld [vmem:[%s225 + $0x80] sm:$0xff]
                  %244 = vst [vmem:[%s226 + $0x40] sm:$0xff] %v243
                  %v245 = vld [vmem:[%s225 + $0x90] sm:$0xff]
                  %246 = vst [vmem:[%s226 + $0x48] sm:$0xff] %v245
                  %v247 = vld [vmem:[%s225 + $0xa0] sm:$0xff]
                  %248 = vst [vmem:[%s226 + $0x50] sm:$0xff] %v247
                  %v249 = vld [vmem:[%s225 + $0xb0] sm:$0xff]
                  %250 = vst [vmem:[%s226 + $0x58] sm:$0xff] %v249
                  %v251 = vld [vmem:[%s225 + $0xc0] sm:$0xff]
                  %252 = vst [vmem:[%s226 + $0x60] sm:$0xff] %v251
                  %v253 = vld [vmem:[%s225 + $0xd0] sm:$0xff]
                  %254 = vst [vmem:[%s226 + $0x68] sm:$0xff] %v253
                  %v255 = vld [vmem:[%s225 + $0xe0] sm:$0xff]
                  %256 = vst [vmem:[%s226 + $0x70] sm:$0xff] %v255
                  %v257 = vld [vmem:[%s225 + $0xf0] sm:$0xff]
                  %258 = vst [vmem:[%s226 + $0x78] sm:$0xff] %v257
                  %v259 = vld [vmem:[%s225 + $0x100] sm:$0xff]
                  %260 = vst [vmem:[%s226 + $0x80] sm:$0xff] %v259
                  %v261 = vld [vmem:[%s225 + $0x110] sm:$0xff]
                  %262 = vst [vmem:[%s226 + $0x88] sm:$0xff] %v261
                  %v263 = vld [vmem:[%s225 + $0x120] sm:$0xff]
                  %264 = vst [vmem:[%s226 + $0x90] sm:$0xff] %v263
                  %v265 = vld [vmem:[%s225 + $0x130] sm:$0xff]
                  %266 = vst [vmem:[%s226 + $0x98] sm:$0xff] %v265
                  %v267 = vld [vmem:[%s225 + $0x140] sm:$0xff]
                  %268 = vst [vmem:[%s226 + $0xa0] sm:$0xff] %v267
                  %v269 = vld [vmem:[%s225 + $0x150] sm:$0xff]
                  %270 = vst [vmem:[%s226 + $0xa8] sm:$0xff] %v269
                  %v271 = vld [vmem:[%s225 + $0x160] sm:$0xff]
                  %272 = vst [vmem:[%s226 + $0xb0] sm:$0xff] %v271
                  %v273 = vld [vmem:[%s225 + $0x170] sm:$0xff]
                  %274 = vst [vmem:[%s226 + $0xb8] sm:$0xff] %v273
                  %v275 = vld [vmem:[%s225 + $0x180] sm:$0xff]
                  %276 = vst [vmem:[%s226 + $0xc0] sm:$0xff] %v275
                  %v277 = vld [vmem:[%s225 + $0x190] sm:$0xff]
                  %278 = vst [vmem:[%s226 + $0xc8] sm:$0xff] %v277
                  %v279 = vld [vmem:[%s225 + $0x1a0] sm:$0xff]
                  %280 = vst [vmem:[%s226 + $0xd0] sm:$0xff] %v279
                  %v281 = vld [vmem:[%s225 + $0x1b0] sm:$0xff]
                  %282 = vst [vmem:[%s226 + $0xd8] sm:$0xff] %v281
                  %v283 = vld [vmem:[%s225 + $0x1c0] sm:$0xff]
                  %284 = vst [vmem:[%s226 + $0xe0] sm:$0xff] %v283
                  %v285 = vld [vmem:[%s225 + $0x1d0] sm:$0xff]
                  %286 = vst [vmem:[%s226 + $0xe8] sm:$0xff] %v285
                  %v287 = vld [vmem:[%s225 + $0x1e0] sm:$0xff]
                  %288 = vst [vmem:[%s226 + $0xf0] sm:$0xff] %v287
                  %v289 = vld [vmem:[%s225 + $0x1f0] sm:$0xff]
                  %290 = vst [vmem:[%s226 + $0xf8] sm:$0xff] %v289
                $region52: #{fno3d_forward.11} parent=46 // loop_footer
                  %s224 = sadd.s32 1, %s220
                $region53: #{fno3d_forward.11} parent=46 // loop_footer_branch
                  %219 = sbr.rel target = $region49
                $region54: #{fno3d_forward.11} parent=46 // loop_exit
                  _
              $region47: #{fno3d_forward.11} parent=31 // pred_fallthru
                _
              // Predicated region
              $region55: #{fno3d_forward.11} parent=31 // pred_check
                _
              $region56: #{fno3d_forward.11} parent=31 // pred_check_branch
                %292 = sbr.rel target = $region58
              $region57: #{fno3d_forward.11} parent=31 // pred_region
                _
              $region58: #{fno3d_forward.11} parent=31 // pred_fallthru
                _
            $region32: #{fno3d_forward.11} parent=27 // pred_fallthru
              _
            // Predicated region
            $region33: #{fno3d_forward.11} parent=27 // pred_check
              _
            $region34: #{fno3d_forward.11} parent=27 // pred_check_branch
              %143 = sbr.rel target = $region36
            $region35: #{fno3d_forward.11} parent=27 // pred_region
              loop: start=0, step=1, limit=1
              $region37: #{fno3d_forward.11} parent=35 // loop_pre_header
                _
              $region38: #{fno3d_forward.11} parent=35 // loop_header
                %s146 = sphi 0, %s150
                %p147 = scmp.ge.s32.totalorder %s146, 1
                %s151 = sphi %s137, %s137
                %s152 = sphi %s134, %s134
              $region39: #{fno3d_forward.11} parent=35 // loop_header_branch
                %149 = sbr.rel (%p147) target = $region43
              $region40: #{fno3d_forward.11} parent=35 // loop_body
                %v153 = vld [vmem:[%s151] sm:$0xff]
                %154 = vst [vmem:[%s152] sm:$0xff] %v153
                %v155 = vld [vmem:[%s151 + $0x10] sm:$0xff]
                %156 = vst [vmem:[%s152 + $0x8] sm:$0xff] %v155
                %v157 = vld [vmem:[%s151 + $0x20] sm:$0xff]
                %158 = vst [vmem:[%s152 + $0x10] sm:$0xff] %v157
                %v159 = vld [vmem:[%s151 + $0x30] sm:$0xff]
                %160 = vst [vmem:[%s152 + $0x18] sm:$0xff] %v159
                %v161 = vld [vmem:[%s151 + $0x40] sm:$0xff]
                %162 = vst [vmem:[%s152 + $0x20] sm:$0xff] %v161
                %v163 = vld [vmem:[%s151 + $0x50] sm:$0xff]
                %164 = vst [vmem:[%s152 + $0x28] sm:$0xff] %v163
                %v165 = vld [vmem:[%s151 + $0x60] sm:$0xff]
                %166 = vst [vmem:[%s152 + $0x30] sm:$0xff] %v165
                %v167 = vld [vmem:[%s151 + $0x70] sm:$0xff]
                %168 = vst [vmem:[%s152 + $0x38] sm:$0xff] %v167
                %v169 = vld [vmem:[%s151 + $0x80] sm:$0xff]
                %170 = vst [vmem:[%s152 + $0x40] sm:$0xff] %v169
                %v171 = vld [vmem:[%s151 + $0x90] sm:$0xff]
                %172 = vst [vmem:[%s152 + $0x48] sm:$0xff] %v171
                %v173 = vld [vmem:[%s151 + $0xa0] sm:$0xff]
                %174 = vst [vmem:[%s152 + $0x50] sm:$0xff] %v173
                %v175 = vld [vmem:[%s151 + $0xb0] sm:$0xff]
                %176 = vst [vmem:[%s152 + $0x58] sm:$0xff] %v175
                %v177 = vld [vmem:[%s151 + $0xc0] sm:$0xff]
                %178 = vst [vmem:[%s152 + $0x60] sm:$0xff] %v177
                %v179 = vld [vmem:[%s151 + $0xd0] sm:$0xff]
                %180 = vst [vmem:[%s152 + $0x68] sm:$0xff] %v179
                %v181 = vld [vmem:[%s151 + $0xe0] sm:$0xff]
                %182 = vst [vmem:[%s152 + $0x70] sm:$0xff] %v181
                %v183 = vld [vmem:[%s151 + $0xf0] sm:$0xff]
                %184 = vst [vmem:[%s152 + $0x78] sm:$0xff] %v183
                %v185 = vld [vmem:[%s151 + $0x100] sm:$0xff]
                %186 = vst [vmem:[%s152 + $0x80] sm:$0xff] %v185
                %v187 = vld [vmem:[%s151 + $0x110] sm:$0xff]
                %188 = vst [vmem:[%s152 + $0x88] sm:$0xff] %v187
                %v189 = vld [vmem:[%s151 + $0x120] sm:$0xff]
                %190 = vst [vmem:[%s152 + $0x90] sm:$0xff] %v189
                %v191 = vld [vmem:[%s151 + $0x130] sm:$0xff]
                %192 = vst [vmem:[%s152 + $0x98] sm:$0xff] %v191
                %v193 = vld [vmem:[%s151 + $0x140] sm:$0xff]
                %194 = vst [vmem:[%s152 + $0xa0] sm:$0xff] %v193
                %v195 = vld [vmem:[%s151 + $0x150] sm:$0xff]
                %196 = vst [vmem:[%s152 + $0xa8] sm:$0xff] %v195
                %v197 = vld [vmem:[%s151 + $0x160] sm:$0xff]
                %198 = vst [vmem:[%s152 + $0xb0] sm:$0xff] %v197
                %v199 = vld [vmem:[%s151 + $0x170] sm:$0xff]
                %200 = vst [vmem:[%s152 + $0xb8] sm:$0xff] %v199
                %v201 = vld [vmem:[%s151 + $0x180] sm:$0xff]
                %202 = vst [vmem:[%s152 + $0xc0] sm:$0xff] %v201
                %v203 = vld [vmem:[%s151 + $0x190] sm:$0xff]
                %204 = vst [vmem:[%s152 + $0xc8] sm:$0xff] %v203
                %v205 = vld [vmem:[%s151 + $0x1a0] sm:$0xff]
                %206 = vst [vmem:[%s152 + $0xd0] sm:$0xff] %v205
                %v207 = vld [vmem:[%s151 + $0x1b0] sm:$0xff]
                %208 = vst [vmem:[%s152 + $0xd8] sm:$0xff] %v207
                %v209 = vld [vmem:[%s151 + $0x1c0] sm:$0xff]
                %210 = vst [vmem:[%s152 + $0xe0] sm:$0xff] %v209
                %v211 = vld [vmem:[%s151 + $0x1d0] sm:$0xff]
                %212 = vst [vmem:[%s152 + $0xe8] sm:$0xff] %v211
                %v213 = vld [vmem:[%s151 + $0x1e0] sm:$0xff]
                %214 = vst [vmem:[%s152 + $0xf0] sm:$0xff] %v213
                %v215 = vld [vmem:[%s151 + $0x1f0] sm:$0xff]
                %216 = vst [vmem:[%s152 + $0xf8] sm:$0xff] %v215
              $region41: #{fno3d_forward.11} parent=35 // loop_footer
                %s150 = sadd.s32 1, %s146
              $region42: #{fno3d_forward.11} parent=35 // loop_footer_branch
                %145 = sbr.rel target = $region38
              $region43: #{fno3d_forward.11} parent=35 // loop_exit
                _
            $region36: #{fno3d_forward.11} parent=27 // pred_fallthru
              _
          $region28: #{fno3d_forward.11} parent=23 // pred_fallthru
            _
          %293 = vnop
        $region24: #{fno3d_forward.11} parent=19 // pred_fallthru
          _
      $region20: #{fno3d_forward.11} parent=5 // pred_fallthru
        _
      %p294 = scmp.le.s32.totalorder 1, %s8
      %p295 = scmp.lt.s32.totalorder %s8, 3
      %p296 = pnand %p294, %p295
      %p297 = pneg %p296
      // Predicated region
      $region59: #{fno3d_forward.11} parent=5 // pred_check
        _
      $region60: #{fno3d_forward.11} parent=5 // pred_check_branch
        %299 = sbr.rel (%p296) target = $region62
      $region61: #{fno3d_forward.11} parent=5 // pred_region
        %s300 = ssub.s32 %s8, 1
        %s301 = sand.u32 %s61, 1
        %s302 = sand.u32 %s61, 1
        %s303 = smul.addr %s302, 256
        %s304 = scalar_lea.vmem [#allocation2], %s303
        // Predicated region
        $region63: #{fno3d_forward.11} parent=61 // pred_check
          %p305 = pneg %p74
        $region64: #{fno3d_forward.11} parent=61 // pred_check_branch
          %307 = sbr.rel (%p305) target = $region66
        $region65: #{fno3d_forward.11} parent=61 // pred_region
          _
        $region66: #{fno3d_forward.11} parent=61 // pred_fallthru
          _
        %p308 = scmp.lt.s32.totalorder %s18, 0
        %s309 = scalar_select %p308, %s18, 0
        %s310 = smul.addr %s309, 8
        %s311 = scalar_lea.vmem %s0, %s310
        %p312 = pneg %p46
        %p313 = pneg %p43
        %s314 = sand.u32 %s61, 1
        %s315 = sand.u32 %s61, 1
        %s316 = smul.addr %s315, 256
        %s317 = scalar_lea.vmem [#allocation2], %s316
        %p318 = pneg %p74
        %p319 = pneg %p71
        %p320 = pneg %p102
        %p321 = pneg %p99
        %s322 = sand.u32 %s89, 1
        %s323 = sand.u32 %s89, 1
        %s324 = smul.addr %s323, 16
        %s325 = scalar_lea.vmem [#allocation3], %s324
        %p326 = scmp.lt.s32.totalorder %s18, 0
        %s327 = scalar_select %p326, %s18, 0
        %s328 = smul.addr %s327, 8
        %s329 = scalar_lea.vmem %s0, %s328
        %v330 = vld [vmem:[%s329] sm:$0xff]
        %v331 = vld [vmem:[%s329 + $0x8] sm:$0xff]
        %s332 = scalar_lea.vmem %s329, 16
        %v333 = vld [vmem:[%s332] sm:$0xff]
        %v334 = vld [vmem:[%s332 + $0x8] sm:$0xff]
        %v335 = vld [vmem:[%s304] sm:$0xff]
        %v336 = vld [vmem:[%s304 + $0x8] sm:$0xff]
        %v337 = vld [vmem:[%s304 + $0x10] sm:$0xff]
        %v338 = vld [vmem:[%s304 + $0x18] sm:$0xff]
        %v339 = vld [vmem:[%s304 + $0x20] sm:$0xff]
        %v340 = vld [vmem:[%s304 + $0x28] sm:$0xff]
        %v341 = vld [vmem:[%s304 + $0x30] sm:$0xff]
        %v342 = vld [vmem:[%s304 + $0x38] sm:$0xff]
        %v343 = vld [vmem:[%s304 + $0x40] sm:$0xff]
        %v344 = vld [vmem:[%s304 + $0x48] sm:$0xff]
        %v345 = vld [vmem:[%s304 + $0x50] sm:$0xff]
        %v346 = vld [vmem:[%s304 + $0x58] sm:$0xff]
        %v347 = vld [vmem:[%s304 + $0x60] sm:$0xff]
        %v348 = vld [vmem:[%s304 + $0x68] sm:$0xff]
        %v349 = vld [vmem:[%s304 + $0x70] sm:$0xff]
        %v350 = vld [vmem:[%s304 + $0x78] sm:$0xff]
        %s351 = scalar_lea.vmem %s304, 128 [#allocation2]
        %v352 = vld [vmem:[%s351] sm:$0xff]
        %v353 = vld [vmem:[%s351 + $0x8] sm:$0xff]
        %v354 = vld [vmem:[%s351 + $0x10] sm:$0xff]
        %v355 = vld [vmem:[%s351 + $0x18] sm:$0xff]
        %v356 = vld [vmem:[%s351 + $0x20] sm:$0xff]
        %v357 = vld [vmem:[%s351 + $0x28] sm:$0xff]
        %v358 = vld [vmem:[%s351 + $0x30] sm:$0xff]
        %v359 = vld [vmem:[%s351 + $0x38] sm:$0xff]
        %v360 = vld [vmem:[%s351 + $0x40] sm:$0xff]
        %v361 = vld [vmem:[%s351 + $0x48] sm:$0xff]
        %v362 = vld [vmem:[%s351 + $0x50] sm:$0xff]
        %v363 = vld [vmem:[%s351 + $0x58] sm:$0xff]
        %v364 = vld [vmem:[%s351 + $0x60] sm:$0xff]
        %v365 = vld [vmem:[%s351 + $0x68] sm:$0xff]
        %v366 = vld [vmem:[%s351 + $0x70] sm:$0xff]
        %v367 = vld [vmem:[%s351 + $0x78] sm:$0xff]
        %v368 = vlaneseq
        %v369 = vshrl.u32 %v368, 7
        %v370 = vsub.s32 0, %v369
        %v371 = vrot.slane %v330, %v370
        %v372 = vmul.f32 %v371, %v335
        %v373 = vadd.f32 %v372, 0.0
        %v374 = vlaneseq
        %v375 = vshrl.u32 %v374, 7
        %v376 = vsub.s32 0, %v375
        %v377 = vrot.slane %v333, %v376
        %v378 = vmul.f32 %v377, %v352
        %v379 = vsub.f32 %v373, %v378
        %v380 = vmul.f32 %v371, %v352
        %v381 = vadd.f32 %v380, 0.0
        %v382 = vmul.f32 %v377, %v335
        %v383 = vadd.f32 %v381, %v382
        %v384 = vlaneseq
        %v385 = vshrl.u32 %v384, 7
        %v386 = vsub.s32 1, %v385
        %v387 = vrot.slane %v330, %v386
        %v388 = vmul.f32 %v387, %v336
        %v389 = vadd.f32 %v379, %v388
        %v390 = vlaneseq
        %v391 = vshrl.u32 %v390, 7
        %v392 = vsub.s32 1, %v391
        %v393 = vrot.slane %v333, %v392
        %v394 = vmul.f32 %v393, %v353
        %v395 = vsub.f32 %v389, %v394
        %v396 = vmul.f32 %v387, %v353
        %v397 = vadd.f32 %v383, %v396
        %v398 = vmul.f32 %v393, %v336
        %v399 = vadd.f32 %v397, %v398
        %v400 = vlaneseq
        %v401 = vshrl.u32 %v400, 7
        %v402 = vsub.s32 2, %v401
        %v403 = vrot.slane %v330, %v402
        %v404 = vmul.f32 %v403, %v337
        %v405 = vadd.f32 %v395, %v404
        %v406 = vlaneseq
        %v407 = vshrl.u32 %v406, 7
        %v408 = vsub.s32 2, %v407
        %v409 = vrot.slane %v333, %v408
        %v410 = vmul.f32 %v409, %v354
        %v411 = vsub.f32 %v405, %v410
        %v412 = vmul.f32 %v403, %v354
        %v413 = vadd.f32 %v399, %v412
        %v414 = vmul.f32 %v409, %v337
        %v415 = vadd.f32 %v413, %v414
        %v416 = vlaneseq
        %v417 = vshrl.u32 %v416, 7
        %v418 = vsub.s32 3, %v417
        %v419 = vrot.slane %v330, %v418
        %v420 = vmul.f32 %v419, %v338
        %v421 = vadd.f32 %v411, %v420
        %v422 = vlaneseq
        %v423 = vshrl.u32 %v422, 7
        %v424 = vsub.s32 3, %v423
        %v425 = vrot.slane %v333, %v424
        %v426 = vmul.f32 %v425, %v355
        %v427 = vsub.f32 %v421, %v426
        %v428 = vmul.f32 %v419, %v355
        %v429 = vadd.f32 %v415, %v428
        %v430 = vmul.f32 %v425, %v338
        %v431 = vadd.f32 %v429, %v430
        %v432 = vlaneseq
        %v433 = vshrl.u32 %v432, 7
        %v434 = vsub.s32 4, %v433
        %v435 = vrot.slane %v330, %v434
        %v436 = vmul.f32 %v435, %v339
        %v437 = vadd.f32 %v427, %v436
        %v438 = vlaneseq
        %v439 = vshrl.u32 %v438, 7
        %v440 = vsub.s32 4, %v439
        %v441 = vrot.slane %v333, %v440
        %v442 = vmul.f32 %v441, %v356
        %v443 = vsub.f32 %v437, %v442
        %v444 = vmul.f32 %v435, %v356
        %v445 = vadd.f32 %v431, %v444
        %v446 = vmul.f32 %v441, %v339
        %v447 = vadd.f32 %v445, %v446
        %v448 = vlaneseq
        %v449 = vshrl.u32 %v448, 7
        %v450 = vsub.s32 5, %v449
        %v451 = vrot.slane %v330, %v450
        %v452 = vmul.f32 %v451, %v340
        %v453 = vadd.f32 %v443, %v452
        %v454 = vlaneseq
        %v455 = vshrl.u32 %v454, 7
        %v456 = vsub.s32 5, %v455
        %v457 = vrot.slane %v333, %v456
        %v458 = vmul.f32 %v457, %v357
        %v459 = vsub.f32 %v453, %v458
        %v460 = vmul.f32 %v451, %v357
        %v461 = vadd.f32 %v447, %v460
        %v462 = vmul.f32 %v457, %v340
        %v463 = vadd.f32 %v461, %v462
        %v464 = vlaneseq
        %v465 = vshrl.u32 %v464, 7
        %v466 = vsub.s32 6, %v465
        %v467 = vrot.slane %v330, %v466
        %v468 = vmul.f32 %v467, %v341
        %v469 = vadd.f32 %v459, %v468
        %v470 = vlaneseq
        %v471 = vshrl.u32 %v470, 7
        %v472 = vsub.s32 6, %v471
        %v473 = vrot.slane %v333, %v472
        %v474 = vmul.f32 %v473, %v358
        %v475 = vsub.f32 %v469, %v474
        %v476 = vmul.f32 %v467, %v358
        %v477 = vadd.f32 %v463, %v476
        %v478 = vmul.f32 %v473, %v341
        %v479 = vadd.f32 %v477, %v478
        %v480 = vlaneseq
        %v481 = vshrl.u32 %v480, 7
        %v482 = vsub.s32 7, %v481
        %v483 = vrot.slane %v330, %v482
        %v484 = vmul.f32 %v483, %v342
        %v485 = vadd.f32 %v475, %v484
        %v486 = vlaneseq
        %v487 = vshrl.u32 %v486, 7
        %v488 = vsub.s32 7, %v487
        %v489 = vrot.slane %v333, %v488
        %v490 = vmul.f32 %v489, %v359
        %v491 = vsub.f32 %v485, %v490
        %v492 = vmul.f32 %v483, %v359
        %v493 = vadd.f32 %v479, %v492
        %v494 = vmul.f32 %v489, %v342
        %v495 = vadd.f32 %v493, %v494
        %v496 = vlaneseq
        %v497 = vshrl.u32 %v496, 7
        %v498 = vsub.s32 0, %v497
        %v499 = vrot.slane %v331, %v498
        %v500 = vmul.f32 %v499, %v343
        %v501 = vadd.f32 %v491, %v500
        %v502 = vlaneseq
        %v503 = vshrl.u32 %v502, 7
        %v504 = vsub.s32 0, %v503
        %v505 = vrot.slane %v334, %v504
        %v506 = vmul.f32 %v505, %v360
        %v507 = vsub.f32 %v501, %v506
        %v508 = vmul.f32 %v499, %v360
        %v509 = vadd.f32 %v495, %v508
        %v510 = vmul.f32 %v505, %v343
        %v511 = vadd.f32 %v509, %v510
        %v512 = vlaneseq
        %v513 = vshrl.u32 %v512, 7
        %v514 = vsub.s32 1, %v513
        %v515 = vrot.slane %v331, %v514
        %v516 = vmul.f32 %v515, %v344
        %v517 = vadd.f32 %v507, %v516
        %v518 = vlaneseq
        %v519 = vshrl.u32 %v518, 7
        %v520 = vsub.s32 1, %v519
        %v521 = vrot.slane %v334, %v520
        %v522 = vmul.f32 %v521, %v361
        %v523 = vsub.f32 %v517, %v522
        %v524 = vmul.f32 %v515, %v361
        %v525 = vadd.f32 %v511, %v524
        %v526 = vmul.f32 %v521, %v344
        %v527 = vadd.f32 %v525, %v526
        %v528 = vlaneseq
        %v529 = vshrl.u32 %v528, 7
        %v530 = vsub.s32 2, %v529
        %v531 = vrot.slane %v331, %v530
        %v532 = vmul.f32 %v531, %v345
        %v533 = vadd.f32 %v523, %v532
        %v534 = vlaneseq
        %v535 = vshrl.u32 %v534, 7
        %v536 = vsub.s32 2, %v535
        %v537 = vrot.slane %v334, %v536
        %v538 = vmul.f32 %v537, %v362
        %v539 = vsub.f32 %v533, %v538
        %v540 = vmul.f32 %v531, %v362
        %v541 = vadd.f32 %v527, %v540
        %v542 = vmul.f32 %v537, %v345
        %v543 = vadd.f32 %v541, %v542
        %v544 = vlaneseq
        %v545 = vshrl.u32 %v544, 7
        %v546 = vsub.s32 3, %v545
        %v547 = vrot.slane %v331, %v546
        %v548 = vmul.f32 %v547, %v346
        %v549 = vadd.f32 %v539, %v548
        %v550 = vlaneseq
        %v551 = vshrl.u32 %v550, 7
        %v552 = vsub.s32 3, %v551
        %v553 = vrot.slane %v334, %v552
        %v554 = vmul.f32 %v553, %v363
        %v555 = vsub.f32 %v549, %v554
        %v556 = vmul.f32 %v547, %v363
        %v557 = vadd.f32 %v543, %v556
        %v558 = vmul.f32 %v553, %v346
        %v559 = vadd.f32 %v557, %v558
        %v560 = vlaneseq
        %v561 = vshrl.u32 %v560, 7
        %v562 = vsub.s32 4, %v561
        %v563 = vrot.slane %v331, %v562
        %v564 = vmul.f32 %v563, %v347
        %v565 = vadd.f32 %v555, %v564
        %v566 = vlaneseq
        %v567 = vshrl.u32 %v566, 7
        %v568 = vsub.s32 4, %v567
        %v569 = vrot.slane %v334, %v568
        %v570 = vmul.f32 %v569, %v364
        %v571 = vsub.f32 %v565, %v570
        %v572 = vmul.f32 %v563, %v364
        %v573 = vadd.f32 %v559, %v572
        %v574 = vmul.f32 %v569, %v347
        %v575 = vadd.f32 %v573, %v574
        %v576 = vlaneseq
        %v577 = vshrl.u32 %v576, 7
        %v578 = vsub.s32 5, %v577
        %v579 = vrot.slane %v331, %v578
        %v580 = vmul.f32 %v579, %v348
        %v581 = vadd.f32 %v571, %v580
        %v582 = vlaneseq
        %v583 = vshrl.u32 %v582, 7
        %v584 = vsub.s32 5, %v583
        %v585 = vrot.slane %v334, %v584
        %v586 = vmul.f32 %v585, %v365
        %v587 = vsub.f32 %v581, %v586
        %v588 = vmul.f32 %v579, %v365
        %v589 = vadd.f32 %v575, %v588
        %v590 = vmul.f32 %v585, %v348
        %v591 = vadd.f32 %v589, %v590
        %v592 = vlaneseq
        %v593 = vshrl.u32 %v592, 7
        %v594 = vsub.s32 6, %v593
        %v595 = vrot.slane %v331, %v594
        %v596 = vmul.f32 %v595, %v349
        %v597 = vadd.f32 %v587, %v596
        %v598 = vlaneseq
        %v599 = vshrl.u32 %v598, 7
        %v600 = vsub.s32 6, %v599
        %v601 = vrot.slane %v334, %v600
        %v602 = vmul.f32 %v601, %v366
        %v603 = vsub.f32 %v597, %v602
        %v604 = vmul.f32 %v595, %v366
        %v605 = vadd.f32 %v591, %v604
        %v606 = vmul.f32 %v601, %v349
        %v607 = vadd.f32 %v605, %v606
        %v608 = vlaneseq
        %v609 = vshrl.u32 %v608, 7
        %v610 = vsub.s32 7, %v609
        %v611 = vrot.slane %v331, %v610
        %v612 = vmul.f32 %v611, %v350
        %v613 = vadd.f32 %v603, %v612
        %v614 = vlaneseq
        %v615 = vshrl.u32 %v614, 7
        %v616 = vsub.s32 7, %v615
        %v617 = vrot.slane %v334, %v616
        %v618 = vmul.f32 %v617, %v367
        %v619 = vsub.f32 %v613, %v618
        %v620 = vmul.f32 %v611, %v367
        %v621 = vadd.f32 %v607, %v620
        %v622 = vmul.f32 %v617, %v350
        %v623 = vadd.f32 %v621, %v622
        %624 = vst [vmem:[%s325] sm:$0xff] %v619
        %s625 = scalar_lea.vmem %s325, 8 [#allocation3]
        %626 = vst [vmem:[%s625] sm:$0xff] %v623
        %s627 = sand.u32 %s89, 1
        %s628 = sand.u32 %s89, 1
        %s629 = smul.addr %s628, 16
        %s630 = scalar_lea.vmem [#allocation3], %s629
        // Predicated region
        $region67: #{fno3d_forward.11} parent=61 // pred_check
          %p631 = pneg %p99
        $region68: #{fno3d_forward.11} parent=61 // pred_check_branch
          %633 = sbr.rel (%p631) target = $region70
        $region69: #{fno3d_forward.11} parent=61 // pred_region
          %s634 = sadd.s32 %s18, %s17
          %s635 = smul.addr %s634, 8
          %s636 = scalar_lea.vmem %s2, %s635
          // Predicated region
          $region71: #{fno3d_forward.11} parent=69 // pred_check
            _
          $region72: #{fno3d_forward.11} parent=69 // pred_check_branch
            %638 = sbr.rel (0) target = $region74
          $region73: #{fno3d_forward.11} parent=69 // pred_region
            // Predicated region
            $region75: #{fno3d_forward.11} parent=73 // pred_check
              _
            $region76: #{fno3d_forward.11} parent=73 // pred_check_branch
              %640 = sbr.rel (0) target = $region78
            $region77: #{fno3d_forward.11} parent=73 // pred_region
              // Predicated region
              $region90: #{fno3d_forward.11} parent=77 // pred_check
                _
              $region91: #{fno3d_forward.11} parent=77 // pred_check_branch
                %657 = sbr.rel (0) target = $region93
              $region92: #{fno3d_forward.11} parent=77 // pred_region
                loop: start=0, step=1, limit=1
                $region94: #{fno3d_forward.11} parent=92 // loop_pre_header
                  _
                $region95: #{fno3d_forward.11} parent=92 // loop_header
                  %s659 = sphi 0, %s663
                  %p660 = scmp.ge.s32.totalorder %s659, 1
                  %s664 = sphi %s630, %s630
                  %s665 = sphi %s636, %s636
                $region96: #{fno3d_forward.11} parent=92 // loop_header_branch
                  %662 = sbr.rel (%p660) target = $region100
                $region97: #{fno3d_forward.11} parent=92 // loop_body
                  %v666 = vld [vmem:[%s664] sm:$0xff]
                  %667 = vst [vmem:[%s665] sm:$0xff] %v666
                  %v668 = vld [vmem:[%s664 + $0x8] sm:$0xff]
                  %669 = vst [vmem:[%s665 + $0x10] sm:$0xff] %v668
                $region98: #{fno3d_forward.11} parent=92 // loop_footer
                  %s663 = sadd.s32 1, %s659
                $region99: #{fno3d_forward.11} parent=92 // loop_footer_branch
                  %658 = sbr.rel target = $region95
                $region100: #{fno3d_forward.11} parent=92 // loop_exit
                  _
              $region93: #{fno3d_forward.11} parent=77 // pred_fallthru
                _
              // Predicated region
              $region101: #{fno3d_forward.11} parent=77 // pred_check
                _
              $region102: #{fno3d_forward.11} parent=77 // pred_check_branch
                %671 = sbr.rel target = $region104
              $region103: #{fno3d_forward.11} parent=77 // pred_region
                _
              $region104: #{fno3d_forward.11} parent=77 // pred_fallthru
                _
            $region78: #{fno3d_forward.11} parent=73 // pred_fallthru
              _
            // Predicated region
            $region79: #{fno3d_forward.11} parent=73 // pred_check
              _
            $region80: #{fno3d_forward.11} parent=73 // pred_check_branch
              %642 = sbr.rel target = $region82
            $region81: #{fno3d_forward.11} parent=73 // pred_region
              loop: start=0, step=1, limit=1
              $region83: #{fno3d_forward.11} parent=81 // loop_pre_header
                _
              $region84: #{fno3d_forward.11} parent=81 // loop_header
                %s645 = sphi 0, %s649
                %p646 = scmp.ge.s32.totalorder %s645, 1
                %s650 = sphi %s630, %s630
                %s651 = sphi %s636, %s636
              $region85: #{fno3d_forward.11} parent=81 // loop_header_branch
                %648 = sbr.rel (%p646) target = $region89
              $region86: #{fno3d_forward.11} parent=81 // loop_body
                %v652 = vld [vmem:[%s650] sm:$0xff]
                %653 = vst [vmem:[%s651] sm:$0xff] %v652
                %v654 = vld [vmem:[%s650 + $0x8] sm:$0xff]
                %655 = vst [vmem:[%s651 + $0x10] sm:$0xff] %v654
              $region87: #{fno3d_forward.11} parent=81 // loop_footer
                %s649 = sadd.s32 1, %s645
              $region88: #{fno3d_forward.11} parent=81 // loop_footer_branch
                %644 = sbr.rel target = $region84
              $region89: #{fno3d_forward.11} parent=81 // loop_exit
                _
            $region82: #{fno3d_forward.11} parent=73 // pred_fallthru
              _
          $region74: #{fno3d_forward.11} parent=69 // pred_fallthru
            _
          %672 = vnop
        $region70: #{fno3d_forward.11} parent=61 // pred_fallthru
          _
      $region62: #{fno3d_forward.11} parent=5 // pred_fallthru
        _
      %p673 = scmp.le.s32.totalorder 2, %s8
      // Predicated region
      $region105: #{fno3d_forward.11} parent=5 // pred_check
        %p674 = pneg %p673
      $region106: #{fno3d_forward.11} parent=5 // pred_check_branch
        %676 = sbr.rel (%p674) target = $region108
      $region107: #{fno3d_forward.11} parent=5 // pred_region
        %s677 = ssub.s32 %s8, 2
        // Predicated region
        $region109: #{fno3d_forward.11} parent=107 // pred_check
          %p678 = pneg %p105
        $region110: #{fno3d_forward.11} parent=107 // pred_check_branch
          %680 = sbr.rel (%p678) target = $region112
        $region111: #{fno3d_forward.11} parent=107 // pred_region
          %s681 = sand.u32 %s90, 1
          %s682 = sand.u32 %s90, 1
          %s683 = smul.addr %s682, 16
          %s684 = scalar_lea.vmem [#allocation3], %s683
        $region112: #{fno3d_forward.11} parent=107 // pred_fallthru
          _
      $region108: #{fno3d_forward.11} parent=5 // pred_fallthru
        _
    $region6: #{fno3d_forward.11} parent=1 // loop_footer
      %s12 = sadd.s32 1, %s8
    $region7: #{fno3d_forward.11} parent=1 // loop_footer_branch
      %7 = sbr.rel target = $region3
    $region8: #{fno3d_forward.11} parent=1 // loop_exit
      _

// kernel: reverse.8
$region0: #{reverse.8}
  #allocation0 [shape = 's32[1]{0}', space=sflag, size = 0x4, scoped, tag = 'scoped memory for reverse.8']
  %s0 = inlined_call_operand.vmem [shape: f32[16,2,8,8,3], index: 0, kind: input, shape index: {}]
  %s1 = inlined_call_operand.vmem [shape: f32[16,2,8,8,3], index: 1, kind: output, shape index: {}]
  %s2 = scalar_lea.vmem %s0, 128
  %v3 = vld [vmem:[%s2] sm:$0xff]
  %4 = vst [vmem:[%s1] sm:$0xff] %v3
  %s5 = scalar_lea.vmem %s0, 320
  %v6 = vld [vmem:[%s5] sm:$0xff]
  %s7 = scalar_lea.vmem %s1, 192
  %8 = vst [vmem:[%s7] sm:$0xff] %v6
  %s9 = scalar_lea.vmem %s0, 64
  %v10 = vld [vmem:[%s9] sm:$0xff]
  %s11 = scalar_lea.vmem %s1, 64
  %12 = vst [vmem:[%s11] sm:$0xff] %v10
  %s13 = scalar_lea.vmem %s0, 256
  %v14 = vld [vmem:[%s13] sm:$0xff]
  %s15 = scalar_lea.vmem %s1, 256
  %16 = vst [vmem:[%s15] sm:$0xff] %v14
  %v17 = vld [vmem:[%s0] sm:$0xff]
  %s18 = scalar_lea.vmem %s1, 128
  %19 = vst [vmem:[%s18] sm:$0xff] %v17
  %s20 = scalar_lea.vmem %s0, 192
  %v21 = vld [vmem:[%s20] sm:$0xff]
  %s22 = scalar_lea.vmem %s1, 320
  %23 = vst [vmem:[%s22] sm:$0xff] %v21
  %s24 = scalar_lea.vmem %s0, 136
  %v25 = vld [vmem:[%s24] sm:$0xff]
  %s26 = scalar_lea.vmem %s1, 8
  %27 = vst [vmem:[%s26] sm:$0xff] %v25
  %s28 = scalar_lea.vmem %s0, 328
  %v29 = vld [vmem:[%s28] sm:$0xff]
  %s30 = scalar_lea.vmem %s1, 200
  %31 = vst [vmem:[%s30] sm:$0xff] %v29
  %s32 = scalar_lea.vmem %s0, 72
  %v33 = vld [vmem:[%s32] sm:$0xff]
  %s34 = scalar_lea.vmem %s1, 72
  %35 = vst [vmem:[%s34] sm:$0xff] %v33
  %s36 = scalar_lea.vmem %s0, 264
  %v37 = vld [vmem:[%s36] sm:$0xff]
  %s38 = scalar_lea.vmem %s1, 264
  %39 = vst [vmem:[%s38] sm:$0xff] %v37
  %s40 = scalar_lea.vmem %s0, 8
  %v41 = vld [vmem:[%s40] sm:$0xff]
  %s42 = scalar_lea.vmem %s1, 136
  %43 = vst [vmem:[%s42] sm:$0xff] %v41
  %s44 = scalar_lea.vmem %s0, 200
  %v45 = vld [vmem:[%s44] sm:$0xff]
  %s46 = scalar_lea.vmem %s1, 328
  %47 = vst [vmem:[%s46] sm:$0xff] %v45
  %s48 = scalar_lea.vmem %s0, 144
  %v49 = vld [vmem:[%s48] sm:$0xff]
  %s50 = scalar_lea.vmem %s1, 16
  %51 = vst [vmem:[%s50] sm:$0xff] %v49
  %s52 = scalar_lea.vmem %s0, 336
  %v53 = vld [vmem:[%s52] sm:$0xff]
  %s54 = scalar_lea.vmem %s1, 208
  %55 = vst [vmem:[%s54] sm:$0xff] %v53
  %s56 = scalar_lea.vmem %s0, 80
  %v57 = vld [vmem:[%s56] sm:$0xff]
  %s58 = scalar_lea.vmem %s1, 80
  %59 = vst [vmem:[%s58] sm:$0xff] %v57
  %s60 = scalar_lea.vmem %s0, 272
  %v61 = vld [vmem:[%s60] sm:$0xff]
  %s62 = scalar_lea.vmem %s1, 272
  %63 = vst [vmem:[%s62] sm:$0xff] %v61
  %s64 = scalar_lea.vmem %s0, 16
  %v65 = vld [vmem:[%s64] sm:$0xff]
  %s66 = scalar_lea.vmem %s1, 144
  %67 = vst [vmem:[%s66] sm:$0xff] %v65
  %s68 = scalar_lea.vmem %s0, 208
  %v69 = vld [vmem:[%s68] sm:$0xff]
  %s70 = scalar_lea.vmem %s1, 336
  %71 = vst [vmem:[%s70] sm:$0xff] %v69
  %s72 = scalar_lea.vmem %s0, 152
  %v73 = vld [vmem:[%s72] sm:$0xff]
  %s74 = scalar_lea.vmem %s1, 24
  %75 = vst [vmem:[%s74] sm:$0xff] %v73
  %s76 = scalar_lea.vmem %s0, 344
  %v77 = vld [vmem:[%s76] sm:$0xff]
  %s78 = scalar_lea.vmem %s1, 216
  %79 = vst [vmem:[%s78] sm:$0xff] %v77
  %s80 = scalar_lea.vmem %s0, 88
  %v81 = vld [vmem:[%s80] sm:$0xff]
  %s82 = scalar_lea.vmem %s1, 88
  %83 = vst [vmem:[%s82] sm:$0xff] %v81
  %s84 = scalar_lea.vmem %s0, 280
  %v85 = vld [vmem:[%s84] sm:$0xff]
  %s86 = scalar_lea.vmem %s1, 280
  %87 = vst [vmem:[%s86] sm:$0xff] %v85
  %s88 = scalar_lea.vmem %s0, 24
  %v89 = vld [vmem:[%s88] sm:$0xff]
  %s90 = scalar_lea.vmem %s1, 152
  %91 = vst [vmem:[%s90] sm:$0xff] %v89
  %s92 = scalar_lea.vmem %s0, 216
  %v93 = vld [vmem:[%s92] sm:$0xff]
  %s94 = scalar_lea.vmem %s1, 344
  %95 = vst [vmem:[%s94] sm:$0xff] %v93
  %s96 = scalar_lea.vmem %s0, 160
  %v97 = vld [vmem:[%s96] sm:$0xff]
  %s98 = scalar_lea.vmem %s1, 32
  %99 = vst [vmem:[%s98] sm:$0xff] %v97
  %s100 = scalar_lea.vmem %s0, 352
  %v101 = vld [vmem:[%s100] sm:$0xff]
  %s102 = scalar_lea.vmem %s1, 224
  %103 = vst [vmem:[%s102] sm:$0xff] %v101
  %s104 = scalar_lea.vmem %s0, 96
  %v105 = vld [vmem:[%s104] sm:$0xff]
  %s106 = scalar_lea.vmem %s1, 96
  %107 = vst [vmem:[%s106] sm:$0xff] %v105
  %s108 = scalar_lea.vmem %s0, 288
  %v109 = vld [vmem:[%s108] sm:$0xff]
  %s110 = scalar_lea.vmem %s1, 288
  %111 = vst [vmem:[%s110] sm:$0xff] %v109
  %s112 = scalar_lea.vmem %s0, 32
  %v113 = vld [vmem:[%s112] sm:$0xff]
  %s114 = scalar_lea.vmem %s1, 160
  %115 = vst [vmem:[%s114] sm:$0xff] %v113
  %s116 = scalar_lea.vmem %s0, 224
  %v117 = vld [vmem:[%s116] sm:$0xff]
  %s118 = scalar_lea.vmem %s1, 352
  %119 = vst [vmem:[%s118] sm:$0xff] %v117
  %s120 = scalar_lea.vmem %s0, 168
  %v121 = vld [vmem:[%s120] sm:$0xff]
  %s122 = scalar_lea.vmem %s1, 40
  %123 = vst [vmem:[%s122] sm:$0xff] %v121
  %s124 = scalar_lea.vmem %s0, 360
  %v125 = vld [vmem:[%s124] sm:$0xff]
  %s126 = scalar_lea.vmem %s1, 232
  %127 = vst [vmem:[%s126] sm:$0xff] %v125
  %s128 = scalar_lea.vmem %s0, 104
  %v129 = vld [vmem:[%s128] sm:$0xff]
  %s130 = scalar_lea.vmem %s1, 104
  %131 = vst [vmem:[%s130] sm:$0xff] %v129
  %s132 = scalar_lea.vmem %s0, 296
  %v133 = vld [vmem:[%s132] sm:$0xff]
  %s134 = scalar_lea.vmem %s1, 296
  %135 = vst [vmem:[%s134] sm:$0xff] %v133
  %s136 = scalar_lea.vmem %s0, 40
  %v137 = vld [vmem:[%s136] sm:$0xff]
  %s138 = scalar_lea.vmem %s1, 168
  %139 = vst [vmem:[%s138] sm:$0xff] %v137
  %s140 = scalar_lea.vmem %s0, 232
  %v141 = vld [vmem:[%s140] sm:$0xff]
  %s142 = scalar_lea.vmem %s1, 360
  %143 = vst [vmem:[%s142] sm:$0xff] %v141
  %s144 = scalar_lea.vmem %s0, 176
  %v145 = vld [vmem:[%s144] sm:$0xff]
  %s146 = scalar_lea.vmem %s1, 48
  %147 = vst [vmem:[%s146] sm:$0xff] %v145
  %s148 = scalar_lea.vmem %s0, 368
  %v149 = vld [vmem:[%s148] sm:$0xff]
  %s150 = scalar_lea.vmem %s1, 240
  %151 = vst [vmem:[%s150] sm:$0xff] %v149
  %s152 = scalar_lea.vmem %s0, 112
  %v153 = vld [vmem:[%s152] sm:$0xff]
  %s154 = scalar_lea.vmem %s1, 112
  %155 = vst [vmem:[%s154] sm:$0xff] %v153
  %s156 = scalar_lea.vmem %s0, 304
  %v157 = vld [vmem:[%s156] sm:$0xff]
  %s158 = scalar_lea.vmem %s1, 304
  %159 = vst [vmem:[%s158] sm:$0xff] %v157
  %s160 = scalar_lea.vmem %s0, 48
  %v161 = vld [vmem:[%s160] sm:$0xff]
  %s162 = scalar_lea.vmem %s1, 176
  %163 = vst [vmem:[%s162] sm:$0xff] %v161
  %s164 = scalar_lea.vmem %s0, 240
  %v165 = vld [vmem:[%s164] sm:$0xff]
  %s166 = scalar_lea.vmem %s1, 368
  %167 = vst [vmem:[%s166] sm:$0xff] %v165
  %s168 = scalar_lea.vmem %s0, 184
  %v169 = vld [vmem:[%s168] sm:$0xff]
  %s170 = scalar_lea.vmem %s1, 56
  %171 = vst [vmem:[%s170] sm:$0xff] %v169
  %s172 = scalar_lea.vmem %s0, 376
  %v173 = vld [vmem:[%s172] sm:$0xff]
  %s174 = scalar_lea.vmem %s1, 248
  %175 = vst [vmem:[%s174] sm:$0xff] %v173
  %s176 = scalar_lea.vmem %s0, 120
  %v177 = vld [vmem:[%s176] sm:$0xff]
  %s178 = scalar_lea.vmem %s1, 120
  %179 = vst [vmem:[%s178] sm:$0xff] %v177
  %s180 = scalar_lea.vmem %s0, 312
  %v181 = vld [vmem:[%s180] sm:$0xff]
  %s182 = scalar_lea.vmem %s1, 312
  %183 = vst [vmem:[%s182] sm:$0xff] %v181
  %s184 = scalar_lea.vmem %s0, 56
  %v185 = vld [vmem:[%s184] sm:$0xff]
  %s186 = scalar_lea.vmem %s1, 184
  %187 = vst [vmem:[%s186] sm:$0xff] %v185
  %s188 = scalar_lea.vmem %s0, 248
  %v189 = vld [vmem:[%s188] sm:$0xff]
  %s190 = scalar_lea.vmem %s1, 376
  %191 = vst [vmem:[%s190] sm:$0xff] %v189

// kernel: fno3d_forward.12
$region0: #{fno3d_forward.12}
  #allocation0 [shape = 'u32[]', space=smem, size = 0x4, offset = 0x4, fixed_abs, tag = 'smem constant byte address 0x4 - core index']
  #allocation1 [shape = 'u32[144,128]{1,0:T(1,128)}', space=vmem, size = 0x12000, scoped, tag = 'internal scratch']
  %s0 = inlined_call_operand.vmem [shape: f32[16,1024], index: 0, kind: input, shape index: {}]
  %s1 = inlined_call_operand.vmem [shape: bf16[16,1024], index: 1, kind: input, shape index: {}, may-alias: {1,4}]
  %s2 = inlined_call_operand.vmem [shape: f32[16,16], index: 2, kind: input, shape index: {}]
  %s3 = inlined_call_operand.vmem [shape: f32[16,1], index: 3, kind: input, shape index: {}]
  %s4 = inlined_call_operand.vmem [shape: bf16[16,1024], index: 4, kind: output, shape index: {}, may-alias: {1,4}]
  %s5 = sld [smem:[#allocation0]]
  $region114: #{fno3d_forward.12} parent=0
    _
  %s7 = ssub.s32 1, %s5
  %s8 = scalar_select 0, %s7, %s5
  $region1: #{fno3d_forward.12} parent=0
    #allocation2 [shape = 'u8[65536]{0}', space=vmem, size = 0x10000, scoped, tag = 'input window, operand 0']
    #allocation3 [shape = 'u8[32768]{0}', space=vmem, size = 0x8000, scoped, tag = 'input window, operand 1']
    #allocation4 [shape = 'u8[32768]{0}', space=vmem, size = 0x8000, scoped, tag = 'output window, operand 0']
    loop: start=0, step=1, limit=4
    $region2: #{fno3d_forward.12} parent=1 // loop_pre_header
      _
    $region3: #{fno3d_forward.12} parent=1 // loop_header
      %s10 = sphi 0, %s14
      %p11 = scmp.ge.s32.totalorder %s10, 4
      %s20 = sphi 0, %s22
      %s23 = sphi 0, %s20
      %s24 = sphi 0, %s23
      %s40 = sphi 0, %s24
      %s46 = sphi 0, %s48
      %s49 = sphi 0, %s46
      %s50 = sphi 0, %s49
      %s66 = sphi 0, %s50
      %s70 = sphi 0, %s70
      %s72 = sphi 0, %s70
      %s73 = sphi 0, %s72
      %s87 = sphi 0, %s73
      %s91 = sphi 0, %s91
      %s93 = sphi 0, %s91
      %s94 = sphi 0, %s93
      %s108 = sphi 0, %s94
      %s114 = sphi 0, %s116
      %s117 = sphi 0, %s114
      %s118 = sphi 0, %s117
      %s134 = sphi 0, %s118
    $region4: #{fno3d_forward.12} parent=1 // loop_header_branch
      %13 = sbr.rel (%p11) target = $region8
    $region5: #{fno3d_forward.12} parent=1 // loop_body
      %s15 = ssub.s32 %s10, 1
      %s16 = ssub.s32 %s10, 2
      %s17 = sadd.s32 %s10, 1
      %s18 = ssub.s32 %s10, %s17
      %p19 = scmp.eq.s32.totalorder %s18, 0
      %s21 = sadd.s32 %s20, 1
      %s22 = scalar_select %p19, %s20, %s21
      %p25 = pneg %p19
      %p26 = scmp.eq.s32.totalorder %s10, 1
      %p27 = por %p25, %p26
      %p28 = scmp.ne.s32.totalorder %s20, %s23
      %p29 = scmp.eq.s32.totalorder %s10, 0
      %p30 = por %p28, %p29
      %p31 = scmp.ne.s32.totalorder %s20, %s23
      %p32 = scmp.eq.s32.totalorder %s15, 1
      %p33 = por %p31, %p32
      %p34 = scmp.ne.s32.totalorder %s23, %s24
      %p35 = scmp.eq.s32.totalorder %s15, 0
      %p36 = por %p34, %p35
      %p37 = scmp.ne.s32.totalorder %s23, %s24
      %p38 = scmp.eq.s32.totalorder %s16, 1
      %p39 = por %p37, %p38
      %p41 = scmp.ne.s32.totalorder %s24, %s40
      %p42 = scmp.eq.s32.totalorder %s16, 0
      %p43 = por %p41, %p42
      %s44 = ssub.s32 %s10, %s17
      %p45 = scmp.eq.s32.totalorder %s44, 0
      %s47 = sadd.s32 %s46, 1
      %s48 = scalar_select %p45, %s46, %s47
      %p51 = pneg %p45
      %p52 = scmp.eq.s32.totalorder %s10, 1
      %p53 = por %p51, %p52
      %p54 = scmp.ne.s32.totalorder %s46, %s49
      %p55 = scmp.eq.s32.totalorder %s10, 0
      %p56 = por %p54, %p55
      %p57 = scmp.ne.s32.totalorder %s46, %s49
      %p58 = scmp.eq.s32.totalorder %s15, 1
      %p59 = por %p57, %p58
      %p60 = scmp.ne.s32.totalorder %s49, %s50
      %p61 = scmp.eq.s32.totalorder %s15, 0
      %p62 = por %p60, %p61
      %p63 = scmp.ne.s32.totalorder %s49, %s50
      %p64 = scmp.eq.s32.totalorder %s16, 1
      %p65 = por %p63, %p64
      %p67 = scmp.ne.s32.totalorder %s50, %s66
      %p68 = scmp.eq.s32.totalorder %s16, 0
      %p69 = por %p67, %p68
      %s71 = sadd.s32 %s70, 1
      %p74 = scmp.eq.s32.totalorder %s10, 1
      %p75 = scmp.ne.s32.totalorder %s70, %s72
      %p76 = scmp.eq.s32.totalorder %s10, 0
      %p77 = por %p75, %p76
      %p78 = scmp.ne.s32.totalorder %s70, %s72
      %p79 = scmp.eq.s32.totalorder %s15, 1
      %p80 = por %p78, %p79
      %p81 = scmp.ne.s32.totalorder %s72, %s73
      %p82 = scmp.eq.s32.totalorder %s15, 0
      %p83 = por %p81, %p82
      %p84 = scmp.ne.s32.totalorder %s72, %s73
      %p85 = scmp.eq.s32.totalorder %s16, 1
      %p86 = por %p84, %p85
      %p88 = scmp.ne.s32.totalorder %s73, %s87
      %p89 = scmp.eq.s32.totalorder %s16, 0
      %p90 = por %p88, %p89
      %s92 = sadd.s32 %s91, 1
      %p95 = scmp.eq.s32.totalorder %s10, 1
      %p96 = scmp.ne.s32.totalorder %s91, %s93
      %p97 = scmp.eq.s32.totalorder %s10, 0
      %p98 = por %p96, %p97
      %p99 = scmp.ne.s32.totalorder %s91, %s93
      %p100 = scmp.eq.s32.totalorder %s15, 1
      %p101 = por %p99, %p100
      %p102 = scmp.ne.s32.totalorder %s93, %s94
      %p103 = scmp.eq.s32.totalorder %s15, 0
      %p104 = por %p102, %p103
      %p105 = scmp.ne.s32.totalorder %s93, %s94
      %p106 = scmp.eq.s32.totalorder %s16, 1
      %p107 = por %p105, %p106
      %p109 = scmp.ne.s32.totalorder %s94, %s108
      %p110 = scmp.eq.s32.totalorder %s16, 0
      %p111 = por %p109, %p110
      %s112 = ssub.s32 %s10, %s17
      %p113 = scmp.eq.s32.totalorder %s112, 0
      %s115 = sadd.s32 %s114, 1
      %s116 = scalar_select %p113, %s114, %s115
      %p119 = pneg %p113
      %p120 = scmp.eq.s32.totalorder %s10, 1
      %p121 = por %p119, %p120
      %p122 = scmp.ne.s32.totalorder %s114, %s117
      %p123 = scmp.eq.s32.totalorder %s10, 0
      %p124 = por %p122, %p123
      %p125 = scmp.ne.s32.totalorder %s114, %s117
      %p126 = scmp.eq.s32.totalorder %s15, 1
      %p127 = por %p125, %p126
      %p128 = scmp.ne.s32.totalorder %s117, %s118
      %p129 = scmp.eq.s32.totalorder %s15, 0
      %p130 = por %p128, %p129
      %p131 = scmp.ne.s32.totalorder %s117, %s118
      %p132 = scmp.eq.s32.totalorder %s16, 1
      %p133 = por %p131, %p132
      %p135 = scmp.ne.s32.totalorder %s118, %s134
      %p136 = scmp.eq.s32.totalorder %s16, 0
      %p137 = por %p135, %p136
      %p138 = scmp.le.s32.totalorder 1, %s10
      %p139 = scmp.lt.s32.totalorder %s10, 3
      %p140 = pnand %p138, %p139
      %p141 = pneg %p140
      // Predicated region
      $region9: #{fno3d_forward.12} parent=5 // pred_check
        _
      $region10: #{fno3d_forward.12} parent=5 // pred_check_branch
        %143 = sbr.rel (%p140) target = $region12
      $region11: #{fno3d_forward.12} parent=5 // pred_region
        %s144 = ssub.s32 %s10, 1
        // Predicated region
        $region13: #{fno3d_forward.12} parent=11 // pred_check
          %p145 = pneg %p83
        $region14: #{fno3d_forward.12} parent=11 // pred_check_branch
          %147 = sbr.rel (%p145) target = $region16
        $region15: #{fno3d_forward.12} parent=11 // pred_region
          _
        $region16: #{fno3d_forward.12} parent=11 // pred_fallthru
          _
        // Predicated region
        $region17: #{fno3d_forward.12} parent=11 // pred_check
          %p148 = pneg %p104
        $region18: #{fno3d_forward.12} parent=11 // pred_check_branch
          %150 = sbr.rel (%p148) target = $region20
        $region19: #{fno3d_forward.12} parent=11 // pred_region
          _
        $region20: #{fno3d_forward.12} parent=11 // pred_fallthru
          _
      $region12: #{fno3d_forward.12} parent=5 // pred_fallthru
        _
      %p151 = scmp.lt.s32.totalorder %s10, 2
      // Predicated region
      $region21: #{fno3d_forward.12} parent=5 // pred_check
        %p152 = pneg %p151
      $region22: #{fno3d_forward.12} parent=5 // pred_check_branch
        %154 = sbr.rel (%p152) target = $region24
      $region23: #{fno3d_forward.12} parent=5 // pred_region
        // Predicated region
        $region25: #{fno3d_forward.12} parent=23 // pred_check
          %p155 = pneg %p30
        $region26: #{fno3d_forward.12} parent=23 // pred_check_branch
          %157 = sbr.rel (%p155) target = $region28
        $region27: #{fno3d_forward.12} parent=23 // pred_region
          %s158 = sand.u32 %s20, 1
          %s159 = sand.u32 %s20, 1
          %s160 = smul.addr %s159, 64
          %s161 = scalar_lea.vmem [#allocation2], %s160
          %s162 = smul.u32 4, %s10
          %s163 = smul.addr %s162, 8
          %s164 = scalar_lea.vmem %s0, %s163
          // Predicated region
          $region29: #{fno3d_forward.12} parent=27 // pred_check
            _
          $region30: #{fno3d_forward.12} parent=27 // pred_check_branch
            %166 = sbr.rel (0) target = $region32
          $region31: #{fno3d_forward.12} parent=27 // pred_region
            // Predicated region
            $region33: #{fno3d_forward.12} parent=31 // pred_check
              _
            $region34: #{fno3d_forward.12} parent=31 // pred_check_branch
              %168 = sbr.rel (0) target = $region36
            $region35: #{fno3d_forward.12} parent=31 // pred_region
              loop: start=0, step=1, limit=1
              $region37: #{fno3d_forward.12} parent=35 // loop_pre_header
                _
              $region38: #{fno3d_forward.12} parent=35 // loop_header
                %s170 = sphi 0, %s174
                %p171 = scmp.ge.s32.totalorder %s170, 1
                %s175 = sphi %s164, %s164
                %s176 = sphi %s161, %s161
              $region39: #{fno3d_forward.12} parent=35 // loop_header_branch
                %173 = sbr.rel (%p171) target = $region43
              $region40: #{fno3d_forward.12} parent=35 // loop_body
                %v177 = vld [vmem:[%s175] sm:$0xff]
                %178 = vst [vmem:[%s176] sm:$0xff] %v177
                %v179 = vld [vmem:[%s175 + $0x8] sm:$0xff]
                %180 = vst [vmem:[%s176 + $0x8] sm:$0xff] %v179
                %v181 = vld [vmem:[%s175 + $0x10] sm:$0xff]
                %182 = vst [vmem:[%s176 + $0x10] sm:$0xff] %v181
                %v183 = vld [vmem:[%s175 + $0x18] sm:$0xff]
                %184 = vst [vmem:[%s176 + $0x18] sm:$0xff] %v183
                %v185 = vld [vmem:[%s175 + $0x40] sm:$0xff]
                %186 = vst [vmem:[%s176 + $0x20] sm:$0xff] %v185
                %v187 = vld [vmem:[%s175 + $0x48] sm:$0xff]
                %188 = vst [vmem:[%s176 + $0x28] sm:$0xff] %v187
                %v189 = vld [vmem:[%s175 + $0x50] sm:$0xff]
                %190 = vst [vmem:[%s176 + $0x30] sm:$0xff] %v189
                %v191 = vld [vmem:[%s175 + $0x58] sm:$0xff]
                %192 = vst [vmem:[%s176 + $0x38] sm:$0xff] %v191
              $region41: #{fno3d_forward.12} parent=35 // loop_footer
                %s174 = sadd.s32 1, %s170
              $region42: #{fno3d_forward.12} parent=35 // loop_footer_branch
                %169 = sbr.rel target = $region38
              $region43: #{fno3d_forward.12} parent=35 // loop_exit
                _
            $region36: #{fno3d_forward.12} parent=31 // pred_fallthru
              _
            // Predicated region
            $region44: #{fno3d_forward.12} parent=31 // pred_check
              _
            $region45: #{fno3d_forward.12} parent=31 // pred_check_branch
              %194 = sbr.rel target = $region47
            $region46: #{fno3d_forward.12} parent=31 // pred_region
              _
            $region47: #{fno3d_forward.12} parent=31 // pred_fallthru
              _
          $region32: #{fno3d_forward.12} parent=27 // pred_fallthru
            _
          %195 = vnop
        $region28: #{fno3d_forward.12} parent=23 // pred_fallthru
          _
        // Predicated region
        $region48: #{fno3d_forward.12} parent=23 // pred_check
          %p196 = pneg %p56
        $region49: #{fno3d_forward.12} parent=23 // pred_check_branch
          %198 = sbr.rel (%p196) target = $region51
        $region50: #{fno3d_forward.12} parent=23 // pred_region
          %s199 = sand.u32 %s46, 1
          %s200 = sand.u32 %s46, 1
          %s201 = smul.addr %s200, 32
          %s202 = scalar_lea.vmem [#allocation3], %s201
          %s203 = smul.u32 4, %s10
          %s204 = smul.addr %s203, 4
          %s205 = scalar_lea.vmem %s1, %s204
          // Predicated region
          $region52: #{fno3d_forward.12} parent=50 // pred_check
            _
          $region53: #{fno3d_forward.12} parent=50 // pred_check_branch
            %207 = sbr.rel (0) target = $region55
          $region54: #{fno3d_forward.12} parent=50 // pred_region
            // Predicated region
            $region56: #{fno3d_forward.12} parent=54 // pred_check
              _
            $region57: #{fno3d_forward.12} parent=54 // pred_check_branch
              %209 = sbr.rel (0) target = $region59
            $region58: #{fno3d_forward.12} parent=54 // pred_region
              loop: start=0, step=1, limit=1
              $region60: #{fno3d_forward.12} parent=58 // loop_pre_header
                _
              $region61: #{fno3d_forward.12} parent=58 // loop_header
                %s211 = sphi 0, %s215
                %p212 = scmp.ge.s32.totalorder %s211, 1
                %s216 = sphi %s205, %s205
                %s217 = sphi %s202, %s202
              $region62: #{fno3d_forward.12} parent=58 // loop_header_branch
                %214 = sbr.rel (%p212) target = $region66
              $region63: #{fno3d_forward.12} parent=58 // loop_body
                %v218 = vld [vmem:[%s216] sm:$0xff]
                %219 = vst [vmem:[%s217] sm:$0xff] %v218
                %v220 = vld [vmem:[%s216 + $0x8] sm:$0xff]
                %221 = vst [vmem:[%s217 + $0x8] sm:$0xff] %v220
                %v222 = vld [vmem:[%s216 + $0x20] sm:$0xff]
                %223 = vst [vmem:[%s217 + $0x10] sm:$0xff] %v222
                %v224 = vld [vmem:[%s216 + $0x28] sm:$0xff]
                %225 = vst [vmem:[%s217 + $0x18] sm:$0xff] %v224
              $region64: #{fno3d_forward.12} parent=58 // loop_footer
                %s215 = sadd.s32 1, %s211
              $region65: #{fno3d_forward.12} parent=58 // loop_footer_branch
                %210 = sbr.rel target = $region61
              $region66: #{fno3d_forward.12} parent=58 // loop_exit
                _
            $region59: #{fno3d_forward.12} parent=54 // pred_fallthru
              _
            // Predicated region
            $region67: #{fno3d_forward.12} parent=54 // pred_check
              _
            $region68: #{fno3d_forward.12} parent=54 // pred_check_branch
              %227 = sbr.rel target = $region70
            $region69: #{fno3d_forward.12} parent=54 // pred_region
              _
            $region70: #{fno3d_forward.12} parent=54 // pred_fallthru
              _
          $region55: #{fno3d_forward.12} parent=50 // pred_fallthru
            _
          %228 = vnop
        $region51: #{fno3d_forward.12} parent=23 // pred_fallthru
          _
      $region24: #{fno3d_forward.12} parent=5 // pred_fallthru
        _
      %p229 = scmp.le.s32.totalorder 1, %s10
      %p230 = scmp.lt.s32.totalorder %s10, 3
      %p231 = pnand %p229, %p230
      %p232 = pneg %p231
      // Predicated region
      $region71: #{fno3d_forward.12} parent=5 // pred_check
        _
      $region72: #{fno3d_forward.12} parent=5 // pred_check_branch
        %234 = sbr.rel (%p231) target = $region74
      $region73: #{fno3d_forward.12} parent=5 // pred_region
        %s235 = ssub.s32 %s10, 1
        %s236 = sand.u32 %s23, 1
        %s237 = sand.u32 %s23, 1
        %s238 = smul.addr %s237, 64
        %s239 = scalar_lea.vmem [#allocation2], %s238
        // Predicated region
        $region75: #{fno3d_forward.12} parent=73 // pred_check
          %p240 = pneg %p36
        $region76: #{fno3d_forward.12} parent=73 // pred_check_branch
          %242 = sbr.rel (%p240) target = $region78
        $region77: #{fno3d_forward.12} parent=73 // pred_region
          _
        $region78: #{fno3d_forward.12} parent=73 // pred_fallthru
          _
        %s243 = sand.u32 %s49, 1
        %s244 = sand.u32 %s49, 1
        %s245 = smul.addr %s244, 32
        %s246 = scalar_lea.vmem [#allocation3], %s245
        // Predicated region
        $region79: #{fno3d_forward.12} parent=73 // pred_check
          %p247 = pneg %p62
        $region80: #{fno3d_forward.12} parent=73 // pred_check_branch
          %249 = sbr.rel (%p247) target = $region82
        $region81: #{fno3d_forward.12} parent=73 // pred_region
          _
        $region82: #{fno3d_forward.12} parent=73 // pred_fallthru
          _
        %s250 = sand.u32 %s23, 1
        %s251 = sand.u32 %s23, 1
        %s252 = smul.addr %s251, 64
        %s253 = scalar_lea.vmem [#allocation2], %s252
        %p254 = pneg %p36
        %p255 = pneg %p33
        %s256 = sand.u32 %s49, 1
        %s257 = sand.u32 %s49, 1
        %s258 = smul.addr %s257, 32
        %s259 = scalar_lea.vmem [#allocation3], %s258
        %p260 = pneg %p62
        %p261 = pneg %p59
        %p262 = pneg %p83
        %p263 = pneg %p80
        %p264 = pneg %p104
        %p265 = pneg %p101
        %p266 = pneg %p130
        %p267 = pneg %p127
        %s268 = sand.u32 %s117, 1
        %s269 = sand.u32 %s117, 1
        %s270 = smul.addr %s269, 32
        %s271 = scalar_lea.vmem [#allocation4], %s270
        %s272 = smul.u32 4, %s15
        %s273 = smul.u32 4, %s15
        %s274 = smul.u32 4, %s15
        %v275 = vld [vmem:[%s246] sm:$0xff]
        %v276 = vld [vmem:[%s246 + $0x8] sm:$0xff]
        %v277 = vld [vmem:[%s246 + $0x10] sm:$0xff]
        %v278 = vld [vmem:[%s246 + $0x18] sm:$0xff]
        %v279 = vunpack.c.l.bf16 %v275
        %v280 = vunpack.c.h.bf16 %v275
        %v281 = vunpack.c.l.bf16 %v276
        %v282 = vunpack.c.h.bf16 %v276
        %v283 = vunpack.c.l.bf16 %v277
        %v284 = vunpack.c.h.bf16 %v277
        %v285 = vunpack.c.l.bf16 %v278
        %v286 = vunpack.c.h.bf16 %v278
        %v287 = vld [vmem:[%s2] sm:$0xff]
        %v288 = vld [vmem:[%s2 + $0x8] sm:$0xff]
        %v289 = vld [vmem:[%s3] sm:$0xff]
        %v290 = vld [vmem:[%s3 + $0x8] sm:$0xff]
        %292 = vset.pattern.permute.xlu0 0
        %293 = vperm.xlu0 %292, %v289
        %v294 = vpop.permute.xlu0 %293
        %297 = vset.pattern.permute.xlu0 0
        %298 = vperm.xlu0 %297, %v290
        %v299 = vpop.permute.xlu0 %298
        %vm301 = vcmask 130048
        %v303 = vsel %vm301, %v287, 0
        %v306 = vsel %vm301, %v288, 0
        %308 = vmatprep.subr.mxu0 %v280
        %309 = vmatpush1.msra.mxu0 %v279
        %310 = vmatprep.subr.mxu0 %v284
        %311 = vmatpush1.msra.mxu0 %v283
        %312 = vmatprep.subr.mxu0 0.0
        %313 = vmatpush1.msra.mxu0 0.0
        %314 = vmatprep.subr.mxu0 0.0
        %315 = vmatpush1.msra.mxu0 0.0
        %316 = vmatprep.subr.mxu0 0.0
        %317 = vmatpush1.msra.mxu0 0.0
        %318 = vmatprep.subr.mxu0 0.0
        %319 = vmatpush1.msra.mxu0 0.0
        %320 = vmatprep.subr.mxu0 0.0
        %321 = vmatpush1.msra.mxu0 0.0
        %322 = vmatprep.subr.mxu0 0.0
        %323 = vmatpush1.msra.mxu0 0.0
        %324 = vmatprep.subr.mxu0 0.0
        %325 = vmatpush1.msra.mxu0 0.0
        %326 = vmatprep.subr.mxu0 0.0
        %327 = vmatpush1.msra.mxu0 0.0
        %328 = vmatprep.subr.mxu0 0.0
        %329 = vmatpush1.msra.mxu0 0.0
        %330 = vmatprep.subr.mxu0 0.0
        %331 = vmatpush1.msra.mxu0 0.0
        %332 = vmatprep.subr.mxu0 0.0
        %333 = vmatpush1.msra.mxu0 0.0
        %334 = vmatprep.subr.mxu0 0.0
        %335 = vmatpush1.msra.mxu0 0.0
        %336 = vmatprep.subr.mxu0 0.0
        %337 = vmatpush1.msra.mxu0 0.0
        %338 = vmatprep.subr.mxu0 0.0
        %339 = vmatpush1.msra.mxu0 0.0
        %340 = vmatprep.subr.mxu0 0.0
        %341 = vmatpush1.msra.mxu0 0.0
        %342 = vmatprep.subr.mxu0 0.0
        %343 = vmatpush1.msra.mxu0 0.0
        %344 = vmatprep.subr.mxu0 0.0
        %345 = vmatpush1.msra.mxu0 0.0
        %346 = vmatprep.subr.mxu0 0.0
        %347 = vmatpush1.msra.mxu0 0.0
        %348 = vmatprep.subr.mxu0 0.0
        %349 = vmatpush1.msra.mxu0 0.0
        %350 = vmatprep.subr.mxu0 0.0
        %351 = vmatpush1.msra.mxu0 0.0
        %352 = vmatprep.subr.mxu0 0.0
        %353 = vmatpush1.msra.mxu0 0.0
        %354 = vmatprep.subr.mxu0 0.0
        %355 = vmatpush1.msra.mxu0 0.0
        %356 = vmatprep.subr.mxu0 0.0
        %357 = vmatpush1.msra.mxu0 0.0
        %358 = vmatprep.subr.mxu0 0.0
        %359 = vmatpush1.msra.mxu0 0.0
        %360 = vmatprep.subr.mxu0 0.0
        %361 = vmatpush1.msra.mxu0 0.0
        %362 = vmatprep.subr.mxu0 0.0
        %363 = vmatpush1.msra.mxu0 0.0
        %364 = vmatprep.subr.mxu0 0.0
        %365 = vmatpush1.msra.mxu0 0.0
        %366 = vmatprep.subr.mxu0 0.0
        %367 = vmatpush1.msra.mxu0 0.0
        %368 = vmatprep.subr.mxu0 0.0
        %369 = vmatpush1.msra.mxu0 0.0
        %370 = vmatprep.subr.mxu0 0.0
        %371 = vmatpush1.msra.mxu0 0.0
        %372 = vmatprep.mubr.f32.mxu0 0.0
        %373 = vmatmul.mubr.f32.gmra.mrb[0].mxu0 %v303
        %v374 = vpop.f32.mrb[0].mxu0
        %v375 = vadd.f32 %v294, %v374
        %v376 = vpop.f32.mrb[0].mxu0
        %v377 = vadd.f32 %v294, %v376
        %378 = vmatprep.mubr.f32.mxu0 0.0
        %379 = vmatmul.mubr.f32.gmra.mrb[0].mxu0 %v306
        %v380 = vpop.f32.mrb[0].mxu0
        %v381 = vadd.f32 %v299, %v380
        %v382 = vpop.f32.mrb[0].mxu0
        %v383 = vadd.f32 %v299, %v382
        %384 = vdwg.mxu0
        %385 = vmatprep.subr.mxu0 %v282
        %386 = vmatpush1.msra.mxu0 %v281
        %387 = vmatprep.subr.mxu0 %v286
        %388 = vmatpush1.msra.mxu0 %v285
        %389 = vmatprep.subr.mxu0 0.0
        %390 = vmatpush1.msra.mxu0 0.0
        %391 = vmatprep.subr.mxu0 0.0
        %392 = vmatpush1.msra.mxu0 0.0
        %393 = vmatprep.subr.mxu0 0.0
        %394 = vmatpush1.msra.mxu0 0.0
        %395 = vmatprep.subr.mxu0 0.0
        %396 = vmatpush1.msra.mxu0 0.0
        %397 = vmatprep.subr.mxu0 0.0
        %398 = vmatpush1.msra.mxu0 0.0
        %399 = vmatprep.subr.mxu0 0.0
        %400 = vmatpush1.msra.mxu0 0.0
        %401 = vmatprep.subr.mxu0 0.0
        %402 = vmatpush1.msra.mxu0 0.0
        %403 = vmatprep.subr.mxu0 0.0
        %404 = vmatpush1.msra.mxu0 0.0
        %405 = vmatprep.subr.mxu0 0.0
        %406 = vmatpush1.msra.mxu0 0.0
        %407 = vmatprep.subr.mxu0 0.0
        %408 = vmatpush1.msra.mxu0 0.0
        %409 = vmatprep.subr.mxu0 0.0
        %410 = vmatpush1.msra.mxu0 0.0
        %411 = vmatprep.subr.mxu0 0.0
        %412 = vmatpush1.msra.mxu0 0.0
        %413 = vmatprep.subr.mxu0 0.0
        %414 = vmatpush1.msra.mxu0 0.0
        %415 = vmatprep.subr.mxu0 0.0
        %416 = vmatpush1.msra.mxu0 0.0
        %417 = vmatprep.subr.mxu0 0.0
        %418 = vmatpush1.msra.mxu0 0.0
        %419 = vmatprep.subr.mxu0 0.0
        %420 = vmatpush1.msra.mxu0 0.0
        %421 = vmatprep.subr.mxu0 0.0
        %422 = vmatpush1.msra.mxu0 0.0
        %423 = vmatprep.subr.mxu0 0.0
        %424 = vmatpush1.msra.mxu0 0.0
        %425 = vmatprep.subr.mxu0 0.0
        %426 = vmatpush1.msra.mxu0 0.0
        %427 = vmatprep.subr.mxu0 0.0
        %428 = vmatpush1.msra.mxu0 0.0
        %429 = vmatprep.subr.mxu0 0.0
        %430 = vmatpush1.msra.mxu0 0.0
        %431 = vmatprep.subr.mxu0 0.0
        %432 = vmatpush1.msra.mxu0 0.0
        %433 = vmatprep.subr.mxu0 0.0
        %434 = vmatpush1.msra.mxu0 0.0
        %435 = vmatprep.subr.mxu0 0.0
        %436 = vmatpush1.msra.mxu0 0.0
        %437 = vmatprep.subr.mxu0 0.0
        %438 = vmatpush1.msra.mxu0 0.0
        %439 = vmatprep.subr.mxu0 0.0
        %440 = vmatpush1.msra.mxu0 0.0
        %441 = vmatprep.subr.mxu0 0.0
        %442 = vmatpush1.msra.mxu0 0.0
        %443 = vmatprep.subr.mxu0 0.0
        %444 = vmatpush1.msra.mxu0 0.0
        %445 = vmatprep.subr.mxu0 0.0
        %446 = vmatpush1.msra.mxu0 0.0
        %447 = vmatprep.subr.mxu0 0.0
        %448 = vmatpush1.msra.mxu0 0.0
        %449 = vmatprep.mubr.f32.mxu0 0.0
        %450 = vmatmul.mubr.f32.gmra.mrb[0].mxu0 %v303
        %v451 = vpop.f32.mrb[0].mxu0
        %v452 = vadd.f32 %v294, %v451
        %v453 = vpop.f32.mrb[0].mxu0
        %v454 = vadd.f32 %v294, %v453
        %455 = vmatprep.mubr.f32.mxu0 0.0
        %456 = vmatmul.mubr.f32.gmra.mrb[0].mxu0 %v306
        %v457 = vpop.f32.mrb[0].mxu0
        %v458 = vadd.f32 %v299, %v457
        %v459 = vpop.f32.mrb[0].mxu0
        %v460 = vadd.f32 %v299, %v459
        %461 = vdwg.mxu0
        %v462 = vld [vmem:[%s239] sm:$0xff]
        %v463 = vld [vmem:[%s239 + $0x8] sm:$0xff]
        %v464 = vld [vmem:[%s239 + $0x10] sm:$0xff]
        %v465 = vld [vmem:[%s239 + $0x18] sm:$0xff]
        %v466 = vld [vmem:[%s239 + $0x20] sm:$0xff]
        %v467 = vld [vmem:[%s239 + $0x28] sm:$0xff]
        %v468 = vld [vmem:[%s239 + $0x30] sm:$0xff]
        %v469 = vld [vmem:[%s239 + $0x38] sm:$0xff]
        %v470 = vadd.f32 %v375, %v462
        %v471 = vadd.f32 %v377, %v463
        %v472 = vadd.f32 %v452, %v464
        %v473 = vadd.f32 %v454, %v465
        %v474 = vadd.f32 %v381, %v466
        %v475 = vadd.f32 %v383, %v467
        %v476 = vadd.f32 %v458, %v468
        %v477 = vadd.f32 %v460, %v469
        %v478 = vmax.f32 %v470, 0.0
        %v479 = vmax.f32 %v471, 0.0
        %v480 = vmax.f32 %v472, 0.0
        %v481 = vmax.f32 %v473, 0.0
        %v482 = vmax.f32 %v474, 0.0
        %v483 = vmax.f32 %v475, 0.0
        %v484 = vmax.f32 %v476, 0.0
        %v485 = vmax.f32 %v477, 0.0
        %v486 = vpack.c.bf16 %v482, %v478
        %v487 = vpack.c.bf16 %v483, %v479
        %v488 = vpack.c.bf16 %v484, %v480
        %v489 = vpack.c.bf16 %v485, %v481
        %v494 = vunpack.c.l.b16 %v486
        %v495 = vunpack.c.l.b16 %v487
        %v496 = vunpack.c.l.b16 %v488
        %v497 = vunpack.c.l.b16 %v489
        %v498 = vunpack.c.h.b16 %v486
        %v499 = vunpack.c.h.b16 %v487
        %v500 = vunpack.c.h.b16 %v488
        %v501 = vunpack.c.h.b16 %v489
        %v502 = vpack.c.b16 %v495, %v494
        %v503 = vpack.c.b16 %v497, %v496
        %v504 = vpack.c.b16 %v499, %v498
        %v505 = vpack.c.b16 %v501, %v500
        %510 = vst [vmem:[%s271] sm:$0xff] %v502
        %511 = vst [vmem:[%s271 + $0x8] sm:$0xff] %v503
        %512 = vst [vmem:[%s271 + $0x10] sm:$0xff] %v504
        %513 = vst [vmem:[%s271 + $0x18] sm:$0xff] %v505
        %s514 = sand.u32 %s117, 1
        %s515 = sand.u32 %s117, 1
        %s516 = smul.addr %s515, 32
        %s517 = scalar_lea.vmem [#allocation4], %s516
        // Predicated region
        $region83: #{fno3d_forward.12} parent=73 // pred_check
          %p518 = pneg %p127
        $region84: #{fno3d_forward.12} parent=73 // pred_check_branch
          %520 = sbr.rel (%p518) target = $region86
        $region85: #{fno3d_forward.12} parent=73 // pred_region
          %s521 = smul.u32 4, %s15
          %s522 = smul.addr %s521, 4
          %s523 = scalar_lea.vmem %s4, %s522
          // Predicated region
          $region87: #{fno3d_forward.12} parent=85 // pred_check
            _
          $region88: #{fno3d_forward.12} parent=85 // pred_check_branch
            %525 = sbr.rel (0) target = $region90
          $region89: #{fno3d_forward.12} parent=85 // pred_region
            // Predicated region
            $region91: #{fno3d_forward.12} parent=89 // pred_check
              _
            $region92: #{fno3d_forward.12} parent=89 // pred_check_branch
              %527 = sbr.rel (0) target = $region94
            $region93: #{fno3d_forward.12} parent=89 // pred_region
              loop: start=0, step=1, limit=1
              $region95: #{fno3d_forward.12} parent=93 // loop_pre_header
                _
              $region96: #{fno3d_forward.12} parent=93 // loop_header
                %s529 = sphi 0, %s533
                %p530 = scmp.ge.s32.totalorder %s529, 1
                %s534 = sphi %s517, %s517
                %s535 = sphi %s523, %s523
              $region97: #{fno3d_forward.12} parent=93 // loop_header_branch
                %532 = sbr.rel (%p530) target = $region101
              $region98: #{fno3d_forward.12} parent=93 // loop_body
                %v536 = vld [vmem:[%s534] sm:$0xff]
                %537 = vst [vmem:[%s535] sm:$0xff] %v536
                %v538 = vld [vmem:[%s534 + $0x8] sm:$0xff]
                %539 = vst [vmem:[%s535 + $0x8] sm:$0xff] %v538
                %v540 = vld [vmem:[%s534 + $0x10] sm:$0xff]
                %541 = vst [vmem:[%s535 + $0x20] sm:$0xff] %v540
                %v542 = vld [vmem:[%s534 + $0x18] sm:$0xff]
                %543 = vst [vmem:[%s535 + $0x28] sm:$0xff] %v542
              $region99: #{fno3d_forward.12} parent=93 // loop_footer
                %s533 = sadd.s32 1, %s529
              $region100: #{fno3d_forward.12} parent=93 // loop_footer_branch
                %528 = sbr.rel target = $region96
              $region101: #{fno3d_forward.12} parent=93 // loop_exit
                _
            $region94: #{fno3d_forward.12} parent=89 // pred_fallthru
              _
            // Predicated region
            $region102: #{fno3d_forward.12} parent=89 // pred_check
              _
            $region103: #{fno3d_forward.12} parent=89 // pred_check_branch
              %545 = sbr.rel target = $region105
            $region104: #{fno3d_forward.12} parent=89 // pred_region
              _
            $region105: #{fno3d_forward.12} parent=89 // pred_fallthru
              _
          $region90: #{fno3d_forward.12} parent=85 // pred_fallthru
            _
          %546 = vnop
        $region86: #{fno3d_forward.12} parent=73 // pred_fallthru
          _
      $region74: #{fno3d_forward.12} parent=5 // pred_fallthru
        _
      %p547 = scmp.le.s32.totalorder 2, %s10
      // Predicated region
      $region106: #{fno3d_forward.12} parent=5 // pred_check
        %p548 = pneg %p547
      $region107: #{fno3d_forward.12} parent=5 // pred_check_branch
        %550 = sbr.rel (%p548) target = $region109
      $region108: #{fno3d_forward.12} parent=5 // pred_region
        %s551 = ssub.s32 %s10, 2
        // Predicated region
        $region110: #{fno3d_forward.12} parent=108 // pred_check
          %p552 = pneg %p133
        $region111: #{fno3d_forward.12} parent=108 // pred_check_branch
          %554 = sbr.rel (%p552) target = $region113
        $region112: #{fno3d_forward.12} parent=108 // pred_region
          %s555 = sand.u32 %s118, 1
          %s556 = sand.u32 %s118, 1
          %s557 = smul.addr %s556, 32
          %s558 = scalar_lea.vmem [#allocation4], %s557
        $region113: #{fno3d_forward.12} parent=108 // pred_fallthru
          _
      $region109: #{fno3d_forward.12} parent=5 // pred_fallthru
        _
    $region6: #{fno3d_forward.12} parent=1 // loop_footer
      %s14 = sadd.s32 1, %s10
    $region7: #{fno3d_forward.12} parent=1 // loop_footer_branch
      %9 = sbr.rel target = $region3
    $region8: #{fno3d_forward.12} parent=1 // loop_exit
      _

// kernel: fno3d_forward.19
$region0: #{fno3d_forward.19}
  #allocation0 [shape = 'u32[]', space=smem, size = 0x4, offset = 0x4, fixed_abs, tag = 'smem constant byte address 0x4 - core index']
  #allocation1 [shape = 'u32[144,128]{1,0:T(1,128)}', space=vmem, size = 0x12000, scoped, tag = 'internal scratch']
  #allocation2 [shape = 'f32[1,1]{1,0:T(1,128)S(1)}', space=vmem, size = 0x200, scoped, tag = 'scoped memory for fno3d_forward.19']
  %s0 = inlined_call_operand.vmem [shape: bf16[16,1024], index: 0, kind: input, shape index: {}]
  %s1 = inlined_call_operand.vmem [shape: f32[128,16], index: 1, kind: input, shape index: {}]
  %s2 = inlined_call_operand.vmem [shape: f32[128,1], index: 2, kind: input, shape index: {}]
  %s3 = inlined_call_operand.vmem [shape: f32[1,128], index: 3, kind: input, shape index: {}]
  %s4 = inlined_call_operand.<no memory space> [shape: f32[1,1], index: 4, kind: input, shape index: {}]
  %s5 = inlined_call_operand.vmem [shape: f32[1,1024], index: 5, kind: output, shape index: {}]
  %s6 = sld [smem:[#allocation0]]
  $region76: #{fno3d_forward.19} parent=0
    _
  %s8 = ssub.s32 1, %s6
  %s9 = scalar_select 0, %s8, %s6
  %v10 = vstv %s4
  %11 = vst [vmem:[#allocation2] sm:$0x1] %v10
  $region1: #{fno3d_forward.19} parent=0
    #allocation3 [shape = 'u8[32768]{0}', space=vmem, size = 0x8000, scoped, tag = 'input window, operand 0']
    loop: start=0, step=1, limit=4
    $region2: #{fno3d_forward.19} parent=1 // loop_pre_header
      _
    $region3: #{fno3d_forward.19} parent=1 // loop_header
      %s13 = sphi 0, %s17
      %p14 = scmp.ge.s32.totalorder %s13, 4
      %s23 = sphi 0, %s25
      %s26 = sphi 0, %s23
      %s27 = sphi 0, %s26
      %s43 = sphi 0, %s27
      %s47 = sphi 0, %s47
      %s49 = sphi 0, %s47
      %s50 = sphi 0, %s49
      %s64 = sphi 0, %s50
      %s68 = sphi 0, %s68
      %s70 = sphi 0, %s68
      %s71 = sphi 0, %s70
      %s85 = sphi 0, %s71
      %s89 = sphi 0, %s89
      %s91 = sphi 0, %s89
      %s92 = sphi 0, %s91
      %s106 = sphi 0, %s92
      %s110 = sphi 0, %s110
      %s112 = sphi 0, %s110
      %s113 = sphi 0, %s112
      %s127 = sphi 0, %s113
      %s133 = sphi 0, %s135
      %s136 = sphi 0, %s133
      %s137 = sphi 0, %s136
      %s153 = sphi 0, %s137
    $region4: #{fno3d_forward.19} parent=1 // loop_header_branch
      %16 = sbr.rel (%p14) target = $region8
    $region5: #{fno3d_forward.19} parent=1 // loop_body
      %s18 = ssub.s32 %s13, 1
      %s19 = ssub.s32 %s13, 2
      %s20 = sadd.s32 %s13, 1
      %s21 = ssub.s32 %s13, %s20
      %p22 = scmp.eq.s32.totalorder %s21, 0
      %s24 = sadd.s32 %s23, 1
      %s25 = scalar_select %p22, %s23, %s24
      %p28 = pneg %p22
      %p29 = scmp.eq.s32.totalorder %s13, 1
      %p30 = por %p28, %p29
      %p31 = scmp.ne.s32.totalorder %s23, %s26
      %p32 = scmp.eq.s32.totalorder %s13, 0
      %p33 = por %p31, %p32
      %p34 = scmp.ne.s32.totalorder %s23, %s26
      %p35 = scmp.eq.s32.totalorder %s18, 1
      %p36 = por %p34, %p35
      %p37 = scmp.ne.s32.totalorder %s26, %s27
      %p38 = scmp.eq.s32.totalorder %s18, 0
      %p39 = por %p37, %p38
      %p40 = scmp.ne.s32.totalorder %s26, %s27
      %p41 = scmp.eq.s32.totalorder %s19, 1
      %p42 = por %p40, %p41
      %p44 = scmp.ne.s32.totalorder %s27, %s43
      %p45 = scmp.eq.s32.totalorder %s19, 0
      %p46 = por %p44, %p45
      %s48 = sadd.s32 %s47, 1
      %p51 = scmp.eq.s32.totalorder %s13, 1
      %p52 = scmp.ne.s32.totalorder %s47, %s49
      %p53 = scmp.eq.s32.totalorder %s13, 0
      %p54 = por %p52, %p53
      %p55 = scmp.ne.s32.totalorder %s47, %s49
      %p56 = scmp.eq.s32.totalorder %s18, 1
      %p57 = por %p55, %p56
      %p58 = scmp.ne.s32.totalorder %s49, %s50
      %p59 = scmp.eq.s32.totalorder %s18, 0
      %p60 = por %p58, %p59
      %p61 = scmp.ne.s32.totalorder %s49, %s50
      %p62 = scmp.eq.s32.totalorder %s19, 1
      %p63 = por %p61, %p62
      %p65 = scmp.ne.s32.totalorder %s50, %s64
      %p66 = scmp.eq.s32.totalorder %s19, 0
      %p67 = por %p65, %p66
      %s69 = sadd.s32 %s68, 1
      %p72 = scmp.eq.s32.totalorder %s13, 1
      %p73 = scmp.ne.s32.totalorder %s68, %s70
      %p74 = scmp.eq.s32.totalorder %s13, 0
      %p75 = por %p73, %p74
      %p76 = scmp.ne.s32.totalorder %s68, %s70
      %p77 = scmp.eq.s32.totalorder %s18, 1
      %p78 = por %p76, %p77
      %p79 = scmp.ne.s32.totalorder %s70, %s71
      %p80 = scmp.eq.s32.totalorder %s18, 0
      %p81 = por %p79, %p80
      %p82 = scmp.ne.s32.totalorder %s70, %s71
      %p83 = scmp.eq.s32.totalorder %s19, 1
      %p84 = por %p82, %p83
      %p86 = scmp.ne.s32.totalorder %s71, %s85
      %p87 = scmp.eq.s32.totalorder %s19, 0
      %p88 = por %p86, %p87
      %s90 = sadd.s32 %s89, 1
      %p93 = scmp.eq.s32.totalorder %s13, 1
      %p94 = scmp.ne.s32.totalorder %s89, %s91
      %p95 = scmp.eq.s32.totalorder %s13, 0
      %p96 = por %p94, %p95
      %p97 = scmp.ne.s32.totalorder %s89, %s91
      %p98 = scmp.eq.s32.totalorder %s18, 1
      %p99 = por %p97, %p98
      %p100 = scmp.ne.s32.totalorder %s91, %s92
      %p101 = scmp.eq.s32.totalorder %s18, 0
      %p102 = por %p100, %p101
      %p103 = scmp.ne.s32.totalorder %s91, %s92
      %p104 = scmp.eq.s32.totalorder %s19, 1
      %p105 = por %p103, %p104
      %p107 = scmp.ne.s32.totalorder %s92, %s106
      %p108 = scmp.eq.s32.totalorder %s19, 0
      %p109 = por %p107, %p108
      %s111 = sadd.s32 %s110, 1
      %p114 = scmp.eq.s32.totalorder %s13, 1
      %p115 = scmp.ne.s32.totalorder %s110, %s112
      %p116 = scmp.eq.s32.totalorder %s13, 0
      %p117 = por %p115, %p116
      %p118 = scmp.ne.s32.totalorder %s110, %s112
      %p119 = scmp.eq.s32.totalorder %s18, 1
      %p120 = por %p118, %p119
      %p121 = scmp.ne.s32.totalorder %s112, %s113
      %p122 = scmp.eq.s32.totalorder %s18, 0
      %p123 = por %p121, %p122
      %p124 = scmp.ne.s32.totalorder %s112, %s113
      %p125 = scmp.eq.s32.totalorder %s19, 1
      %p126 = por %p124, %p125
      %p128 = scmp.ne.s32.totalorder %s113, %s127
      %p129 = scmp.eq.s32.totalorder %s19, 0
      %p130 = por %p128, %p129
      %s131 = ssub.s32 %s13, %s20
      %p132 = scmp.eq.s32.totalorder %s131, 0
      %s134 = sadd.s32 %s133, 1
      %s135 = scalar_select %p132, %s133, %s134
      %p138 = pneg %p132
      %p139 = scmp.eq.s32.totalorder %s13, 1
      %p140 = por %p138, %p139
      %p141 = scmp.ne.s32.totalorder %s133, %s136
      %p142 = scmp.eq.s32.totalorder %s13, 0
      %p143 = por %p141, %p142
      %p144 = scmp.ne.s32.totalorder %s133, %s136
      %p145 = scmp.eq.s32.totalorder %s18, 1
      %p146 = por %p144, %p145
      %p147 = scmp.ne.s32.totalorder %s136, %s137
      %p148 = scmp.eq.s32.totalorder %s18, 0
      %p149 = por %p147, %p148
      %p150 = scmp.ne.s32.totalorder %s136, %s137
      %p151 = scmp.eq.s32.totalorder %s19, 1
      %p152 = por %p150, %p151
      %p154 = scmp.ne.s32.totalorder %s137, %s153
      %p155 = scmp.eq.s32.totalorder %s19, 0
      %p156 = por %p154, %p155
      %p157 = scmp.le.s32.totalorder 1, %s13
      %p158 = scmp.lt.s32.totalorder %s13, 3
      %p159 = pnand %p157, %p158
      %p160 = pneg %p159
      // Predicated region
      $region9: #{fno3d_forward.19} parent=5 // pred_check
        _
      $region10: #{fno3d_forward.19} parent=5 // pred_check_branch
        %162 = sbr.rel (%p159) target = $region12
      $region11: #{fno3d_forward.19} parent=5 // pred_region
        %s163 = ssub.s32 %s13, 1
        // Predicated region
        $region13: #{fno3d_forward.19} parent=11 // pred_check
          %p164 = pneg %p60
        $region14: #{fno3d_forward.19} parent=11 // pred_check_branch
          %166 = sbr.rel (%p164) target = $region16
        $region15: #{fno3d_forward.19} parent=11 // pred_region
          _
        $region16: #{fno3d_forward.19} parent=11 // pred_fallthru
          _
        // Predicated region
        $region17: #{fno3d_forward.19} parent=11 // pred_check
          %p167 = pneg %p81
        $region18: #{fno3d_forward.19} parent=11 // pred_check_branch
          %169 = sbr.rel (%p167) target = $region20
        $region19: #{fno3d_forward.19} parent=11 // pred_region
          _
        $region20: #{fno3d_forward.19} parent=11 // pred_fallthru
          _
        // Predicated region
        $region21: #{fno3d_forward.19} parent=11 // pred_check
          %p170 = pneg %p102
        $region22: #{fno3d_forward.19} parent=11 // pred_check_branch
          %172 = sbr.rel (%p170) target = $region24
        $region23: #{fno3d_forward.19} parent=11 // pred_region
          _
        $region24: #{fno3d_forward.19} parent=11 // pred_fallthru
          _
        // Predicated region
        $region25: #{fno3d_forward.19} parent=11 // pred_check
          %p173 = pneg %p123
        $region26: #{fno3d_forward.19} parent=11 // pred_check_branch
          %175 = sbr.rel (%p173) target = $region28
        $region27: #{fno3d_forward.19} parent=11 // pred_region
          _
        $region28: #{fno3d_forward.19} parent=11 // pred_fallthru
          _
      $region12: #{fno3d_forward.19} parent=5 // pred_fallthru
        _
      %p176 = scmp.lt.s32.totalorder %s13, 2
      // Predicated region
      $region29: #{fno3d_forward.19} parent=5 // pred_check
        %p177 = pneg %p176
      $region30: #{fno3d_forward.19} parent=5 // pred_check_branch
        %179 = sbr.rel (%p177) target = $region32
      $region31: #{fno3d_forward.19} parent=5 // pred_region
        // Predicated region
        $region33: #{fno3d_forward.19} parent=31 // pred_check
          %p180 = pneg %p33
        $region34: #{fno3d_forward.19} parent=31 // pred_check_branch
          %182 = sbr.rel (%p180) target = $region36
        $region35: #{fno3d_forward.19} parent=31 // pred_region
          %s183 = sand.u32 %s23, 1
          %s184 = sand.u32 %s23, 1
          %s185 = smul.addr %s184, 32
          %s186 = scalar_lea.vmem [#allocation3], %s185
          %s187 = smul.u32 4, %s13
          %s188 = smul.addr %s187, 4
          %s189 = scalar_lea.vmem %s0, %s188
          // Predicated region
          $region37: #{fno3d_forward.19} parent=35 // pred_check
            _
          $region38: #{fno3d_forward.19} parent=35 // pred_check_branch
            %191 = sbr.rel (0) target = $region40
          $region39: #{fno3d_forward.19} parent=35 // pred_region
            // Predicated region
            $region41: #{fno3d_forward.19} parent=39 // pred_check
              _
            $region42: #{fno3d_forward.19} parent=39 // pred_check_branch
              %193 = sbr.rel (0) target = $region44
            $region43: #{fno3d_forward.19} parent=39 // pred_region
              loop: start=0, step=1, limit=1
              $region45: #{fno3d_forward.19} parent=43 // loop_pre_header
                _
              $region46: #{fno3d_forward.19} parent=43 // loop_header
                %s195 = sphi 0, %s199
                %p196 = scmp.ge.s32.totalorder %s195, 1
                %s200 = sphi %s189, %s189
                %s201 = sphi %s186, %s186
              $region47: #{fno3d_forward.19} parent=43 // loop_header_branch
                %198 = sbr.rel (%p196) target = $region51
              $region48: #{fno3d_forward.19} parent=43 // loop_body
                %v202 = vld [vmem:[%s200] sm:$0xff]
                %203 = vst [vmem:[%s201] sm:$0xff] %v202
                %v204 = vld [vmem:[%s200 + $0x8] sm:$0xff]
                %205 = vst [vmem:[%s201 + $0x8] sm:$0xff] %v204
                %v206 = vld [vmem:[%s200 + $0x20] sm:$0xff]
                %207 = vst [vmem:[%s201 + $0x10] sm:$0xff] %v206
                %v208 = vld [vmem:[%s200 + $0x28] sm:$0xff]
                %209 = vst [vmem:[%s201 + $0x18] sm:$0xff] %v208
              $region49: #{fno3d_forward.19} parent=43 // loop_footer
                %s199 = sadd.s32 1, %s195
              $region50: #{fno3d_forward.19} parent=43 // loop_footer_branch
                %194 = sbr.rel target = $region46
              $region51: #{fno3d_forward.19} parent=43 // loop_exit
                _
            $region44: #{fno3d_forward.19} parent=39 // pred_fallthru
              _
            // Predicated region
            $region52: #{fno3d_forward.19} parent=39 // pred_check
              _
            $region53: #{fno3d_forward.19} parent=39 // pred_check_branch
              %211 = sbr.rel target = $region55
            $region54: #{fno3d_forward.19} parent=39 // pred_region
              _
            $region55: #{fno3d_forward.19} parent=39 // pred_fallthru
              _
          $region40: #{fno3d_forward.19} parent=35 // pred_fallthru
            _
          %212 = vnop
        $region36: #{fno3d_forward.19} parent=31 // pred_fallthru
          _
      $region32: #{fno3d_forward.19} parent=5 // pred_fallthru
        _
      %p213 = scmp.le.s32.totalorder 1, %s13
      %p214 = scmp.lt.s32.totalorder %s13, 3
      %p215 = pnand %p213, %p214
      %p216 = pneg %p215
      // Predicated region
      $region56: #{fno3d_forward.19} parent=5 // pred_check
        _
      $region57: #{fno3d_forward.19} parent=5 // pred_check_branch
        %218 = sbr.rel (%p215) target = $region59
      $region58: #{fno3d_forward.19} parent=5 // pred_region
        %s219 = ssub.s32 %s13, 1
        %s220 = sand.u32 %s26, 1
        %s221 = sand.u32 %s26, 1
        %s222 = smul.addr %s221, 32
        %s223 = scalar_lea.vmem [#allocation3], %s222
        // Predicated region
        $region60: #{fno3d_forward.19} parent=58 // pred_check
          %p224 = pneg %p39
        $region61: #{fno3d_forward.19} parent=58 // pred_check_branch
          %226 = sbr.rel (%p224) target = $region63
        $region62: #{fno3d_forward.19} parent=58 // pred_region
          _
        $region63: #{fno3d_forward.19} parent=58 // pred_fallthru
          _
        %s227 = sand.u32 %s26, 1
        %s228 = sand.u32 %s26, 1
        %s229 = smul.addr %s228, 32
        %s230 = scalar_lea.vmem [#allocation3], %s229
        %p231 = pneg %p39
        %p232 = pneg %p36
        %p233 = pneg %p60
        %p234 = pneg %p57
        %p235 = pneg %p81
        %p236 = pneg %p78
        %p237 = pneg %p102
        %p238 = pneg %p99
        %p239 = pneg %p123
        %p240 = pneg %p120
        %p241 = pneg %p149
        %p242 = pneg %p146
        %s243 = smul.u32 4, %s18
        %p244 = scmp.lt.s32.totalorder %s243, 7
        %s245 = scalar_select %p244, %s243, 7
        %s246 = scalar_lea.vmem %s5, %s245
        %s247 = smul.u32 4, %s18
        %s248 = smul.u32 4, %s18
        %p249 = scmp.lt.s32.totalorder %s248, 7
        %s250 = scalar_select %p249, %s248, 7
        %s251 = scalar_lea.vmem %s5, %s250
        %s252 = smul.u32 4, %s18
        %v253 = vld [vmem:[%s223] sm:$0xff]
        %v254 = vld [vmem:[%s223 + $0x8] sm:$0xff]
        %v255 = vld [vmem:[%s223 + $0x10] sm:$0xff]
        %v256 = vld [vmem:[%s223 + $0x18] sm:$0xff]
        %v257 = vunpack.c.l.bf16 %v253
        %v258 = vunpack.c.h.bf16 %v253
        %v259 = vunpack.c.l.bf16 %v254
        %v260 = vunpack.c.h.bf16 %v254
        %v261 = vunpack.c.l.bf16 %v255
        %v262 = vunpack.c.h.bf16 %v255
        %v263 = vunpack.c.l.bf16 %v256
        %v264 = vunpack.c.h.bf16 %v256
        %v265 = vld [vmem:[%s1] sm:$0xff]
        %v266 = vld [vmem:[%s1 + $0x8] sm:$0xff]
        %v267 = vld [vmem:[%s1 + $0x10] sm:$0xff]
        %v268 = vld [vmem:[%s1 + $0x18] sm:$0xff]
        %v269 = vld [vmem:[%s1 + $0x20] sm:$0xff]
        %v270 = vld [vmem:[%s1 + $0x28] sm:$0xff]
        %v271 = vld [vmem:[%s1 + $0x30] sm:$0xff]
        %v272 = vld [vmem:[%s1 + $0x38] sm:$0xff]
        %v273 = vld [vmem:[%s1 + $0x40] sm:$0xff]
        %v274 = vld [vmem:[%s1 + $0x48] sm:$0xff]
        %v275 = vld [vmem:[%s1 + $0x50] sm:$0xff]
        %v276 = vld [vmem:[%s1 + $0x58] sm:$0xff]
        %v277 = vld [vmem:[%s1 + $0x60] sm:$0xff]
        %v278 = vld [vmem:[%s1 + $0x68] sm:$0xff]
        %v279 = vld [vmem:[%s1 + $0x70] sm:$0xff]
        %v280 = vld [vmem:[%s1 + $0x78] sm:$0xff]
        %v281 = vld [vmem:[%s2] sm:$0xff]
        %v282 = vld [vmem:[%s2 + $0x8] sm:$0xff]
        %v283 = vld [vmem:[%s2 + $0x10] sm:$0xff]
        %v284 = vld [vmem:[%s2 + $0x18] sm:$0xff]
        %v285 = vld [vmem:[%s2 + $0x20] sm:$0xff]
        %v286 = vld [vmem:[%s2 + $0x28] sm:$0xff]
        %v287 = vld [vmem:[%s2 + $0x30] sm:$0xff]
        %v288 = vld [vmem:[%s2 + $0x38] sm:$0xff]
        %v289 = vld [vmem:[%s2 + $0x40] sm:$0xff]
        %v290 = vld [vmem:[%s2 + $0x48] sm:$0xff]
        %v291 = vld [vmem:[%s2 + $0x50] sm:$0xff]
        %v292 = vld [vmem:[%s2 + $0x58] sm:$0xff]
        %v293 = vld [vmem:[%s2 + $0x60] sm:$0xff]
        %v294 = vld [vmem:[%s2 + $0x68] sm:$0xff]
        %v295 = vld [vmem:[%s2 + $0x70] sm:$0xff]
        %v296 = vld [vmem:[%s2 + $0x78] sm:$0xff]
        %298 = vset.pattern.permute.xlu0 0
        %299 = vperm.xlu0 %298, %v281
        %v300 = vpop.permute.xlu0 %299
        %303 = vset.pattern.permute.xlu0 0
        %304 = vperm.xlu0 %303, %v282
        %v305 = vpop.permute.xlu0 %304
        %308 = vset.pattern.permute.xlu0 0
        %309 = vperm.xlu0 %308, %v283
        %v310 = vpop.permute.xlu0 %309
        %313 = vset.pattern.permute.xlu0 0
        %314 = vperm.xlu0 %313, %v284
        %v315 = vpop.permute.xlu0 %314
        %318 = vset.pattern.permute.xlu0 0
        %319 = vperm.xlu0 %318, %v285
        %v320 = vpop.permute.xlu0 %319
        %323 = vset.pattern.permute.xlu0 0
        %324 = vperm.xlu0 %323, %v286
        %v325 = vpop.permute.xlu0 %324
        %328 = vset.pattern.permute.xlu0 0
        %329 = vperm.xlu0 %328, %v287
        %v330 = vpop.permute.xlu0 %329
        %333 = vset.pattern.permute.xlu0 0
        %334 = vperm.xlu0 %333, %v288
        %v335 = vpop.permute.xlu0 %334
        %338 = vset.pattern.permute.xlu0 0
        %339 = vperm.xlu0 %338, %v289
        %v340 = vpop.permute.xlu0 %339
        %343 = vset.pattern.permute.xlu0 0
        %344 = vperm.xlu0 %343, %v290
        %v345 = vpop.permute.xlu0 %344
        %348 = vset.pattern.permute.xlu0 0
        %349 = vperm.xlu0 %348, %v291
        %v350 = vpop.permute.xlu0 %349
        %353 = vset.pattern.permute.xlu0 0
        %354 = vperm.xlu0 %353, %v292
        %v355 = vpop.permute.xlu0 %354
        %358 = vset.pattern.permute.xlu0 0
        %359 = vperm.xlu0 %358, %v293
        %v360 = vpop.permute.xlu0 %359
        %363 = vset.pattern.permute.xlu0 0
        %364 = vperm.xlu0 %363, %v294
        %v365 = vpop.permute.xlu0 %364
        %368 = vset.pattern.permute.xlu0 0
        %369 = vperm.xlu0 %368, %v295
        %v370 = vpop.permute.xlu0 %369
        %373 = vset.pattern.permute.xlu0 0
        %374 = vperm.xlu0 %373, %v296
        %v375 = vpop.permute.xlu0 %374
        %vm377 = vcmask 130048
        %v379 = vsel %vm377, %v265, 0
        %v382 = vsel %vm377, %v266, 0
        %v385 = vsel %vm377, %v267, 0
        %v388 = vsel %vm377, %v268, 0
        %v391 = vsel %vm377, %v269, 0
        %v394 = vsel %vm377, %v270, 0
        %v397 = vsel %vm377, %v271, 0
        %v400 = vsel %vm377, %v272, 0
        %v403 = vsel %vm377, %v273, 0
        %v406 = vsel %vm377, %v274, 0
        %v409 = vsel %vm377, %v275, 0
        %v412 = vsel %vm377, %v276, 0
        %v415 = vsel %vm377, %v277, 0
        %v418 = vsel %vm377, %v278, 0
        %v421 = vsel %vm377, %v279, 0
        %v424 = vsel %vm377, %v280, 0
        %426 = vmatprep.subr.mxu0 %v258
        %427 = vmatpush1.msra.mxu0 %v257
        %428 = vmatprep.subr.mxu0 %v262
        %429 = vmatpush1.msra.mxu0 %v261
        %430 = vmatprep.subr.mxu0 0.0
        %431 = vmatpush1.msra.mxu0 0.0
        %432 = vmatprep.subr.mxu0 0.0
        %433 = vmatpush1.msra.mxu0 0.0
        %434 = vmatprep.subr.mxu0 0.0
        %435 = vmatpush1.msra.mxu0 0.0
        %436 = vmatprep.subr.mxu0 0.0
        %437 = vmatpush1.msra.mxu0 0.0
        %438 = vmatprep.subr.mxu0 0.0
        %439 = vmatpush1.msra.mxu0 0.0
        %440 = vmatprep.subr.mxu0 0.0
        %441 = vmatpush1.msra.mxu0 0.0
        %442 = vmatprep.subr.mxu0 0.0
        %443 = vmatpush1.msra.mxu0 0.0
        %444 = vmatprep.subr.mxu0 0.0
        %445 = vmatpush1.msra.mxu0 0.0
        %446 = vmatprep.subr.mxu0 0.0
        %447 = vmatpush1.msra.mxu0 0.0
        %448 = vmatprep.subr.mxu0 0.0
        %449 = vmatpush1.msra.mxu0 0.0
        %450 = vmatprep.subr.mxu0 0.0
        %451 = vmatpush1.msra.mxu0 0.0
        %452 = vmatprep.subr.mxu0 0.0
        %453 = vmatpush1.msra.mxu0 0.0
        %454 = vmatprep.subr.mxu0 0.0
        %455 = vmatpush1.msra.mxu0 0.0
        %456 = vmatprep.subr.mxu0 0.0
        %457 = vmatpush1.msra.mxu0 0.0
        %458 = vmatprep.subr.mxu0 0.0
        %459 = vmatpush1.msra.mxu0 0.0
        %460 = vmatprep.subr.mxu0 0.0
        %461 = vmatpush1.msra.mxu0 0.0
        %462 = vmatprep.subr.mxu0 0.0
        %463 = vmatpush1.msra.mxu0 0.0
        %464 = vmatprep.subr.mxu0 0.0
        %465 = vmatpush1.msra.mxu0 0.0
        %466 = vmatprep.subr.mxu0 0.0
        %467 = vmatpush1.msra.mxu0 0.0
        %468 = vmatprep.subr.mxu0 0.0
        %469 = vmatpush1.msra.mxu0 0.0
        %470 = vmatprep.subr.mxu0 0.0
        %471 = vmatpush1.msra.mxu0 0.0
        %472 = vmatprep.subr.mxu0 0.0
        %473 = vmatpush1.msra.mxu0 0.0
        %474 = vmatprep.subr.mxu0 0.0
        %475 = vmatpush1.msra.mxu0 0.0
        %476 = vmatprep.subr.mxu0 0.0
        %477 = vmatpush1.msra.mxu0 0.0
        %478 = vmatprep.subr.mxu0 0.0
        %479 = vmatpush1.msra.mxu0 0.0
        %480 = vmatprep.subr.mxu0 0.0
        %481 = vmatpush1.msra.mxu0 0.0
        %482 = vmatprep.subr.mxu0 0.0
        %483 = vmatpush1.msra.mxu0 0.0
        %484 = vmatprep.subr.mxu0 0.0
        %485 = vmatpush1.msra.mxu0 0.0
        %486 = vmatprep.subr.mxu0 0.0
        %487 = vmatpush1.msra.mxu0 0.0
        %488 = vmatprep.subr.mxu0 0.0
        %489 = vmatpush1.msra.mxu0 0.0
        %490 = vmatprep.mubr.f32.mxu0 0.0
        %491 = vmatmul.mubr.f32.gmra.mrb[0].mxu0 %v379
        %v492 = vpop.f32.mrb[0].mxu0
        %v493 = vadd.f32 %v300, %v492
        %v494 = vpop.f32.mrb[0].mxu0
        %v495 = vadd.f32 %v300, %v494
        %496 = vmatprep.mubr.f32.mxu0 0.0
        %497 = vmatmul.mubr.f32.gmra.mrb[0].mxu0 %v382
        %v498 = vpop.f32.mrb[0].mxu0
        %v499 = vadd.f32 %v305, %v498
        %v500 = vpop.f32.mrb[0].mxu0
        %v501 = vadd.f32 %v305, %v500
        %502 = vmatprep.mubr.f32.mxu0 0.0
        %503 = vmatmul.mubr.f32.gmra.mrb[0].mxu0 %v385
        %v504 = vpop.f32.mrb[0].mxu0
        %v505 = vadd.f32 %v310, %v504
        %v506 = vpop.f32.mrb[0].mxu0
        %v507 = vadd.f32 %v310, %v506
        %508 = vmatprep.mubr.f32.mxu0 0.0
        %509 = vmatmul.mubr.f32.gmra.mrb[0].mxu0 %v388
        %v510 = vpop.f32.mrb[0].mxu0
        %v511 = vadd.f32 %v315, %v510
        %v512 = vpop.f32.mrb[0].mxu0
        %v513 = vadd.f32 %v315, %v512
        %514 = vmatprep.mubr.f32.mxu0 0.0
        %515 = vmatmul.mubr.f32.gmra.mrb[0].mxu0 %v391
        %v516 = vpop.f32.mrb[0].mxu0
        %v517 = vadd.f32 %v320, %v516
        %v518 = vpop.f32.mrb[0].mxu0
        %v519 = vadd.f32 %v320, %v518
        %520 = vmatprep.mubr.f32.mxu0 0.0
        %521 = vmatmul.mubr.f32.gmra.mrb[0].mxu0 %v394
        %v522 = vpop.f32.mrb[0].mxu0
        %v523 = vadd.f32 %v325, %v522
        %v524 = vpop.f32.mrb[0].mxu0
        %v525 = vadd.f32 %v325, %v524
        %526 = vmatprep.mubr.f32.mxu0 0.0
        %527 = vmatmul.mubr.f32.gmra.mrb[0].mxu0 %v397
        %v528 = vpop.f32.mrb[0].mxu0
        %v529 = vadd.f32 %v330, %v528
        %v530 = vpop.f32.mrb[0].mxu0
        %v531 = vadd.f32 %v330, %v530
        %532 = vmatprep.mubr.f32.mxu0 0.0
        %533 = vmatmul.mubr.f32.gmra.mrb[0].mxu0 %v400
        %v534 = vpop.f32.mrb[0].mxu0
        %v535 = vadd.f32 %v335, %v534
        %v536 = vpop.f32.mrb[0].mxu0
        %v537 = vadd.f32 %v335, %v536
        %538 = vmatprep.mubr.f32.mxu0 0.0
        %539 = vmatmul.mubr.f32.gmra.mrb[0].mxu0 %v403
        %v540 = vpop.f32.mrb[0].mxu0
        %v541 = vadd.f32 %v340, %v540
        %v542 = vpop.f32.mrb[0].mxu0
        %v543 = vadd.f32 %v340, %v542
        %544 = vmatprep.mubr.f32.mxu0 0.0
        %545 = vmatmul.mubr.f32.gmra.mrb[0].mxu0 %v406
        %v546 = vpop.f32.mrb[0].mxu0
        %v547 = vadd.f32 %v345, %v546
        %v548 = vpop.f32.mrb[0].mxu0
        %v549 = vadd.f32 %v345, %v548
        %550 = vmatprep.mubr.f32.mxu0 0.0
        %551 = vmatmul.mubr.f32.gmra.mrb[0].mxu0 %v409
        %v552 = vpop.f32.mrb[0].mxu0
        %v553 = vadd.f32 %v350, %v552
        %v554 = vpop.f32.mrb[0].mxu0
        %v555 = vadd.f32 %v350, %v554
        %556 = vmatprep.mubr.f32.mxu0 0.0
        %557 = vmatmul.mubr.f32.gmra.mrb[0].mxu0 %v412
        %v558 = vpop.f32.mrb[0].mxu0
        %v559 = vadd.f32 %v355, %v558
        %v560 = vpop.f32.mrb[0].mxu0
        %v561 = vadd.f32 %v355, %v560
        %562 = vmatprep.mubr.f32.mxu0 0.0
        %563 = vmatmul.mubr.f32.gmra.mrb[0].mxu0 %v415
        %v564 = vpop.f32.mrb[0].mxu0
        %v565 = vadd.f32 %v360, %v564
        %v566 = vpop.f32.mrb[0].mxu0
        %v567 = vadd.f32 %v360, %v566
        %568 = vmatprep.mubr.f32.mxu0 0.0
        %569 = vmatmul.mubr.f32.gmra.mrb[0].mxu0 %v418
        %v570 = vpop.f32.mrb[0].mxu0
        %v571 = vadd.f32 %v365, %v570
        %v572 = vpop.f32.mrb[0].mxu0
        %v573 = vadd.f32 %v365, %v572
        %574 = vmatprep.mubr.f32.mxu0 0.0
        %575 = vmatmul.mubr.f32.gmra.mrb[0].mxu0 %v421
        %v576 = vpop.f32.mrb[0].mxu0
        %v577 = vadd.f32 %v370, %v576
        %v578 = vpop.f32.mrb[0].mxu0
        %v579 = vadd.f32 %v370, %v578
        %580 = vmatprep.mubr.f32.mxu0 0.0
        %581 = vmatmul.mubr.f32.gmra.mrb[0].mxu0 %v424
        %v582 = vpop.f32.mrb[0].mxu0
        %v583 = vadd.f32 %v375, %v582
        %v584 = vpop.f32.mrb[0].mxu0
        %v585 = vadd.f32 %v375, %v584
        %586 = vdwg.mxu0
        %587 = vmatprep.subr.mxu0 %v260
        %588 = vmatpush1.msra.mxu0 %v259
        %589 = vmatprep.subr.mxu0 %v264
        %590 = vmatpush1.msra.mxu0 %v263
        %591 = vmatprep.subr.mxu0 0.0
        %592 = vmatpush1.msra.mxu0 0.0
        %593 = vmatprep.subr.mxu0 0.0
        %594 = vmatpush1.msra.mxu0 0.0
        %595 = vmatprep.subr.mxu0 0.0
        %596 = vmatpush1.msra.mxu0 0.0
        %597 = vmatprep.subr.mxu0 0.0
        %598 = vmatpush1.msra.mxu0 0.0
        %599 = vmatprep.subr.mxu0 0.0
        %600 = vmatpush1.msra.mxu0 0.0
        %601 = vmatprep.subr.mxu0 0.0
        %602 = vmatpush1.msra.mxu0 0.0
        %603 = vmatprep.subr.mxu0 0.0
        %604 = vmatpush1.msra.mxu0 0.0
        %605 = vmatprep.subr.mxu0 0.0
        %606 = vmatpush1.msra.mxu0 0.0
        %607 = vmatprep.subr.mxu0 0.0
        %608 = vmatpush1.msra.mxu0 0.0
        %609 = vmatprep.subr.mxu0 0.0
        %610 = vmatpush1.msra.mxu0 0.0
        %611 = vmatprep.subr.mxu0 0.0
        %612 = vmatpush1.msra.mxu0 0.0
        %613 = vmatprep.subr.mxu0 0.0
        %614 = vmatpush1.msra.mxu0 0.0
        %615 = vmatprep.subr.mxu0 0.0
        %616 = vmatpush1.msra.mxu0 0.0
        %617 = vmatprep.subr.mxu0 0.0
        %618 = vmatpush1.msra.mxu0 0.0
        %619 = vmatprep.subr.mxu0 0.0
        %620 = vmatpush1.msra.mxu0 0.0
        %621 = vmatprep.subr.mxu0 0.0
        %622 = vmatpush1.msra.mxu0 0.0
        %623 = vmatprep.subr.mxu0 0.0
        %624 = vmatpush1.msra.mxu0 0.0
        %625 = vmatprep.subr.mxu0 0.0
        %626 = vmatpush1.msra.mxu0 0.0
        %627 = vmatprep.subr.mxu0 0.0
        %628 = vmatpush1.msra.mxu0 0.0
        %629 = vmatprep.subr.mxu0 0.0
        %630 = vmatpush1.msra.mxu0 0.0
        %631 = vmatprep.subr.mxu0 0.0
        %632 = vmatpush1.msra.mxu0 0.0
        %633 = vmatprep.subr.mxu0 0.0
        %634 = vmatpush1.msra.mxu0 0.0
        %635 = vmatprep.subr.mxu0 0.0
        %636 = vmatpush1.msra.mxu0 0.0
        %637 = vmatprep.subr.mxu0 0.0
        %638 = vmatpush1.msra.mxu0 0.0
        %639 = vmatprep.subr.mxu0 0.0
        %640 = vmatpush1.msra.mxu0 0.0
        %641 = vmatprep.subr.mxu0 0.0
        %642 = vmatpush1.msra.mxu0 0.0
        %643 = vmatprep.subr.mxu0 0.0
        %644 = vmatpush1.msra.mxu0 0.0
        %645 = vmatprep.subr.mxu0 0.0
        %646 = vmatpush1.msra.mxu0 0.0
        %647 = vmatprep.subr.mxu0 0.0
        %648 = vmatpush1.msra.mxu0 0.0
        %649 = vmatprep.subr.mxu0 0.0
        %650 = vmatpush1.msra.mxu0 0.0
        %651 = vmatprep.mubr.f32.mxu0 0.0
        %652 = vmatmul.mubr.f32.gmra.mrb[0].mxu0 %v379
        %v653 = vpop.f32.mrb[0].mxu0
        %v654 = vadd.f32 %v300, %v653
        %v655 = vpop.f32.mrb[0].mxu0
        %v656 = vadd.f32 %v300, %v655
        %657 = vmatprep.mubr.f32.mxu0 0.0
        %658 = vmatmul.mubr.f32.gmra.mrb[0].mxu0 %v382
        %v659 = vpop.f32.mrb[0].mxu0
        %v660 = vadd.f32 %v305, %v659
        %v661 = vpop.f32.mrb[0].mxu0
        %v662 = vadd.f32 %v305, %v661
        %663 = vmatprep.mubr.f32.mxu0 0.0
        %664 = vmatmul.mubr.f32.gmra.mrb[0].mxu0 %v385
        %v665 = vpop.f32.mrb[0].mxu0
        %v666 = vadd.f32 %v310, %v665
        %v667 = vpop.f32.mrb[0].mxu0
        %v668 = vadd.f32 %v310, %v667
        %669 = vmatprep.mubr.f32.mxu0 0.0
        %670 = vmatmul.mubr.f32.gmra.mrb[0].mxu0 %v388
        %v671 = vpop.f32.mrb[0].mxu0
        %v672 = vadd.f32 %v315, %v671
        %v673 = vpop.f32.mrb[0].mxu0
        %v674 = vadd.f32 %v315, %v673
        %675 = vmatprep.mubr.f32.mxu0 0.0
        %676 = vmatmul.mubr.f32.gmra.mrb[0].mxu0 %v391
        %v677 = vpop.f32.mrb[0].mxu0
        %v678 = vadd.f32 %v320, %v677
        %v679 = vpop.f32.mrb[0].mxu0
        %v680 = vadd.f32 %v320, %v679
        %681 = vmatprep.mubr.f32.mxu0 0.0
        %682 = vmatmul.mubr.f32.gmra.mrb[0].mxu0 %v394
        %v683 = vpop.f32.mrb[0].mxu0
        %v684 = vadd.f32 %v325, %v683
        %v685 = vpop.f32.mrb[0].mxu0
        %v686 = vadd.f32 %v325, %v685
        %687 = vmatprep.mubr.f32.mxu0 0.0
        %688 = vmatmul.mubr.f32.gmra.mrb[0].mxu0 %v397
        %v689 = vpop.f32.mrb[0].mxu0
        %v690 = vadd.f32 %v330, %v689
        %v691 = vpop.f32.mrb[0].mxu0
        %v692 = vadd.f32 %v330, %v691
        %693 = vmatprep.mubr.f32.mxu0 0.0
        %694 = vmatmul.mubr.f32.gmra.mrb[0].mxu0 %v400
        %v695 = vpop.f32.mrb[0].mxu0
        %v696 = vadd.f32 %v335, %v695
        %v697 = vpop.f32.mrb[0].mxu0
        %v698 = vadd.f32 %v335, %v697
        %699 = vmatprep.mubr.f32.mxu0 0.0
        %700 = vmatmul.mubr.f32.gmra.mrb[0].mxu0 %v403
        %v701 = vpop.f32.mrb[0].mxu0
        %v702 = vadd.f32 %v340, %v701
        %v703 = vpop.f32.mrb[0].mxu0
        %v704 = vadd.f32 %v340, %v703
        %705 = vmatprep.mubr.f32.mxu0 0.0
        %706 = vmatmul.mubr.f32.gmra.mrb[0].mxu0 %v406
        %v707 = vpop.f32.mrb[0].mxu0
        %v708 = vadd.f32 %v345, %v707
        %v709 = vpop.f32.mrb[0].mxu0
        %v710 = vadd.f32 %v345, %v709
        %711 = vmatprep.mubr.f32.mxu0 0.0
        %712 = vmatmul.mubr.f32.gmra.mrb[0].mxu0 %v409
        %v713 = vpop.f32.mrb[0].mxu0
        %v714 = vadd.f32 %v350, %v713
        %v715 = vpop.f32.mrb[0].mxu0
        %v716 = vadd.f32 %v350, %v715
        %717 = vmatprep.mubr.f32.mxu0 0.0
        %718 = vmatmul.mubr.f32.gmra.mrb[0].mxu0 %v412
        %v719 = vpop.f32.mrb[0].mxu0
        %v720 = vadd.f32 %v355, %v719
        %v721 = vpop.f32.mrb[0].mxu0
        %v722 = vadd.f32 %v355, %v721
        %723 = vmatprep.mubr.f32.mxu0 0.0
        %724 = vmatmul.mubr.f32.gmra.mrb[0].mxu0 %v415
        %v725 = vpop.f32.mrb[0].mxu0
        %v726 = vadd.f32 %v360, %v725
        %v727 = vpop.f32.mrb[0].mxu0
        %v728 = vadd.f32 %v360, %v727
        %729 = vmatprep.mubr.f32.mxu0 0.0
        %730 = vmatmul.mubr.f32.gmra.mrb[0].mxu0 %v418
        %v731 = vpop.f32.mrb[0].mxu0
        %v732 = vadd.f32 %v365, %v731
        %v733 = vpop.f32.mrb[0].mxu0
        %v734 = vadd.f32 %v365, %v733
        %735 = vmatprep.mubr.f32.mxu0 0.0
        %736 = vmatmul.mubr.f32.gmra.mrb[0].mxu0 %v421
        %v737 = vpop.f32.mrb[0].mxu0
        %v738 = vadd.f32 %v370, %v737
        %v739 = vpop.f32.mrb[0].mxu0
        %v740 = vadd.f32 %v370, %v739
        %741 = vmatprep.mubr.f32.mxu0 0.0
        %742 = vmatmul.mubr.f32.gmra.mrb[0].mxu0 %v424
        %v743 = vpop.f32.mrb[0].mxu0
        %v744 = vadd.f32 %v375, %v743
        %v745 = vpop.f32.mrb[0].mxu0
        %v746 = vadd.f32 %v375, %v745
        %747 = vdwg.mxu0
        %v748 = vmax.f32 %v493, 0.0
        %v749 = vmax.f32 %v495, 0.0
        %v750 = vmax.f32 %v654, 0.0
        %v751 = vmax.f32 %v656, 0.0
        %v752 = vmax.f32 %v499, 0.0
        %v753 = vmax.f32 %v501, 0.0
        %v754 = vmax.f32 %v660, 0.0
        %v755 = vmax.f32 %v662, 0.0
        %v756 = vmax.f32 %v505, 0.0
        %v757 = vmax.f32 %v507, 0.0
        %v758 = vmax.f32 %v666, 0.0
        %v759 = vmax.f32 %v668, 0.0
        %v760 = vmax.f32 %v511, 0.0
        %v761 = vmax.f32 %v513, 0.0
        %v762 = vmax.f32 %v672, 0.0
        %v763 = vmax.f32 %v674, 0.0
        %v764 = vmax.f32 %v517, 0.0
        %v765 = vmax.f32 %v519, 0.0
        %v766 = vmax.f32 %v678, 0.0
        %v767 = vmax.f32 %v680, 0.0
        %v768 = vmax.f32 %v523, 0.0
        %v769 = vmax.f32 %v525, 0.0
        %v770 = vmax.f32 %v684, 0.0
        %v771 = vmax.f32 %v686, 0.0
        %v772 = vmax.f32 %v529, 0.0
        %v773 = vmax.f32 %v531, 0.0
        %v774 = vmax.f32 %v690, 0.0
        %v775 = vmax.f32 %v692, 0.0
        %v776 = vmax.f32 %v535, 0.0
        %v777 = vmax.f32 %v537, 0.0
        %v778 = vmax.f32 %v696, 0.0
        %v779 = vmax.f32 %v698, 0.0
        %v780 = vmax.f32 %v541, 0.0
        %v781 = vmax.f32 %v543, 0.0
        %v782 = vmax.f32 %v702, 0.0
        %v783 = vmax.f32 %v704, 0.0
        %v784 = vmax.f32 %v547, 0.0
        %v785 = vmax.f32 %v549, 0.0
        %v786 = vmax.f32 %v708, 0.0
        %v787 = vmax.f32 %v710, 0.0
        %v788 = vmax.f32 %v553, 0.0
        %v789 = vmax.f32 %v555, 0.0
        %v790 = vmax.f32 %v714, 0.0
        %v791 = vmax.f32 %v716, 0.0
        %v792 = vmax.f32 %v559, 0.0
        %v793 = vmax.f32 %v561, 0.0
        %v794 = vmax.f32 %v720, 0.0
        %v795 = vmax.f32 %v722, 0.0
        %v796 = vmax.f32 %v565, 0.0
        %v797 = vmax.f32 %v567, 0.0
        %v798 = vmax.f32 %v726, 0.0
        %v799 = vmax.f32 %v728, 0.0
        %v800 = vmax.f32 %v571, 0.0
        %v801 = vmax.f32 %v573, 0.0
        %v802 = vmax.f32 %v732, 0.0
        %v803 = vmax.f32 %v734, 0.0
        %v804 = vmax.f32 %v577, 0.0
        %v805 = vmax.f32 %v579, 0.0
        %v806 = vmax.f32 %v738, 0.0
        %v807 = vmax.f32 %v740, 0.0
        %v808 = vmax.f32 %v583, 0.0
        %v809 = vmax.f32 %v585, 0.0
        %v810 = vmax.f32 %v744, 0.0
        %v811 = vmax.f32 %v746, 0.0
        %v812 = vld [vmem:[%s3] sm:$0x1]
        %v813 = vld [vmem:[#allocation2] sm:$0x1]
        %815 = vset.pattern.permute.xlu0 0
        %816 = vperm.xlu0 %815, %v813
        %v817 = vpop.permute.xlu0 %816
        %v819 = vlaneseq
        %v820 = vshrl.u32 %v819, 7
        %v821 = vsub.s32 0, %v820
        %v822 = vrot.slane %v817, %v821
        %823 = vmatprep.subr.mxu0 %v749
        %824 = vmatpush1.msra.mxu0 %v748
        %825 = vmatprep.subr.mxu0 %v753
        %826 = vmatpush1.msra.mxu0 %v752
        %827 = vmatprep.subr.mxu0 %v757
        %828 = vmatpush1.msra.mxu0 %v756
        %829 = vmatprep.subr.mxu0 %v761
        %830 = vmatpush1.msra.mxu0 %v760
        %831 = vmatprep.subr.mxu0 %v765
        %832 = vmatpush1.msra.mxu0 %v764
        %833 = vmatprep.subr.mxu0 %v769
        %834 = vmatpush1.msra.mxu0 %v768
        %835 = vmatprep.subr.mxu0 %v773
        %836 = vmatpush1.msra.mxu0 %v772
        %837 = vmatprep.subr.mxu0 %v777
        %838 = vmatpush1.msra.mxu0 %v776
        %839 = vmatprep.subr.mxu0 %v781
        %840 = vmatpush1.msra.mxu0 %v780
        %841 = vmatprep.subr.mxu0 %v785
        %842 = vmatpush1.msra.mxu0 %v784
        %843 = vmatprep.subr.mxu0 %v789
        %844 = vmatpush1.msra.mxu0 %v788
        %845 = vmatprep.subr.mxu0 %v793
        %846 = vmatpush1.msra.mxu0 %v792
        %847 = vmatprep.subr.mxu0 %v797
        %848 = vmatpush1.msra.mxu0 %v796
        %849 = vmatprep.subr.mxu0 %v801
        %850 = vmatpush1.msra.mxu0 %v800
        %851 = vmatprep.subr.mxu0 %v805
        %852 = vmatpush1.msra.mxu0 %v804
        %853 = vmatprep.subr.mxu0 %v809
        %854 = vmatpush1.msra.mxu0 %v808
        %855 = vmatprep.subr.mxu0 0.0
        %856 = vmatpush1.msra.mxu0 0.0
        %857 = vmatprep.subr.mxu0 0.0
        %858 = vmatpush1.msra.mxu0 0.0
        %859 = vmatprep.subr.mxu0 0.0
        %860 = vmatpush1.msra.mxu0 0.0
        %861 = vmatprep.subr.mxu0 0.0
        %862 = vmatpush1.msra.mxu0 0.0
        %863 = vmatprep.subr.mxu0 0.0
        %864 = vmatpush1.msra.mxu0 0.0
        %865 = vmatprep.subr.mxu0 0.0
        %866 = vmatpush1.msra.mxu0 0.0
        %867 = vmatprep.subr.mxu0 0.0
        %868 = vmatpush1.msra.mxu0 0.0
        %869 = vmatprep.subr.mxu0 0.0
        %870 = vmatpush1.msra.mxu0 0.0
        %871 = vmatprep.subr.mxu0 0.0
        %872 = vmatpush1.msra.mxu0 0.0
        %873 = vmatprep.subr.mxu0 0.0
        %874 = vmatpush1.msra.mxu0 0.0
        %875 = vmatprep.subr.mxu0 0.0
        %876 = vmatpush1.msra.mxu0 0.0
        %877 = vmatprep.subr.mxu0 0.0
        %878 = vmatpush1.msra.mxu0 0.0
        %879 = vmatprep.subr.mxu0 0.0
        %880 = vmatpush1.msra.mxu0 0.0
        %881 = vmatprep.subr.mxu0 0.0
        %882 = vmatpush1.msra.mxu0 0.0
        %883 = vmatprep.subr.mxu0 0.0
        %884 = vmatpush1.msra.mxu0 0.0
        %885 = vmatprep.subr.mxu0 0.0
        %886 = vmatpush1.msra.mxu0 0.0
        %887 = vmatprep.mubr.f32.mxu0 0.0
        %888 = vmatmul.mubr.f32.gmra.mrb[0].mxu0 %v812
        %v889 = vpop.f32.mrb[0].mxu0
        %v890 = vadd.f32 %v822, %v889
        %v891 = vpop.f32.mrb[0].mxu0
        %v892 = vadd.f32 %v822, %v891
        %893 = vdwg.mxu0
        %894 = vmatprep.subr.mxu0 %v751
        %895 = vmatpush1.msra.mxu0 %v750
        %896 = vmatprep.subr.mxu0 %v755
        %897 = vmatpush1.msra.mxu0 %v754
        %898 = vmatprep.subr.mxu0 %v759
        %899 = vmatpush1.msra.mxu0 %v758
        %900 = vmatprep.subr.mxu0 %v763
        %901 = vmatpush1.msra.mxu0 %v762
        %902 = vmatprep.subr.mxu0 %v767
        %903 = vmatpush1.msra.mxu0 %v766
        %904 = vmatprep.subr.mxu0 %v771
        %905 = vmatpush1.msra.mxu0 %v770
        %906 = vmatprep.subr.mxu0 %v775
        %907 = vmatpush1.msra.mxu0 %v774
        %908 = vmatprep.subr.mxu0 %v779
        %909 = vmatpush1.msra.mxu0 %v778
        %910 = vmatprep.subr.mxu0 %v783
        %911 = vmatpush1.msra.mxu0 %v782
        %912 = vmatprep.subr.mxu0 %v787
        %913 = vmatpush1.msra.mxu0 %v786
        %914 = vmatprep.subr.mxu0 %v791
        %915 = vmatpush1.msra.mxu0 %v790
        %916 = vmatprep.subr.mxu0 %v795
        %917 = vmatpush1.msra.mxu0 %v794
        %918 = vmatprep.subr.mxu0 %v799
        %919 = vmatpush1.msra.mxu0 %v798
        %920 = vmatprep.subr.mxu0 %v803
        %921 = vmatpush1.msra.mxu0 %v802
        %922 = vmatprep.subr.mxu0 %v807
        %923 = vmatpush1.msra.mxu0 %v806
        %924 = vmatprep.subr.mxu0 %v811
        %925 = vmatpush1.msra.mxu0 %v810
        %926 = vmatprep.subr.mxu0 0.0
        %927 = vmatpush1.msra.mxu0 0.0
        %928 = vmatprep.subr.mxu0 0.0
        %929 = vmatpush1.msra.mxu0 0.0
        %930 = vmatprep.subr.mxu0 0.0
        %931 = vmatpush1.msra.mxu0 0.0
        %932 = vmatprep.subr.mxu0 0.0
        %933 = vmatpush1.msra.mxu0 0.0
        %934 = vmatprep.subr.mxu0 0.0
        %935 = vmatpush1.msra.mxu0 0.0
        %936 = vmatprep.subr.mxu0 0.0
        %937 = vmatpush1.msra.mxu0 0.0
        %938 = vmatprep.subr.mxu0 0.0
        %939 = vmatpush1.msra.mxu0 0.0
        %940 = vmatprep.subr.mxu0 0.0
        %941 = vmatpush1.msra.mxu0 0.0
        %942 = vmatprep.subr.mxu0 0.0
        %943 = vmatpush1.msra.mxu0 0.0
        %944 = vmatprep.subr.mxu0 0.0
        %945 = vmatpush1.msra.mxu0 0.0
        %946 = vmatprep.subr.mxu0 0.0
        %947 = vmatpush1.msra.mxu0 0.0
        %948 = vmatprep.subr.mxu0 0.0
        %949 = vmatpush1.msra.mxu0 0.0
        %950 = vmatprep.subr.mxu0 0.0
        %951 = vmatpush1.msra.mxu0 0.0
        %952 = vmatprep.subr.mxu0 0.0
        %953 = vmatpush1.msra.mxu0 0.0
        %954 = vmatprep.subr.mxu0 0.0
        %955 = vmatpush1.msra.mxu0 0.0
        %956 = vmatprep.subr.mxu0 0.0
        %957 = vmatpush1.msra.mxu0 0.0
        %958 = vmatprep.mubr.f32.mxu0 0.0
        %959 = vmatmul.mubr.f32.gmra.mrb[0].mxu0 %v812
        %v960 = vpop.f32.mrb[0].mxu0
        %v961 = vadd.f32 %v822, %v960
        %v962 = vpop.f32.mrb[0].mxu0
        %v963 = vadd.f32 %v822, %v962
        %964 = vdwg.mxu0
        %v969 = vcombine.low %v890, %v892
        %v970 = vcombine.low %v961, %v963
        %v972 = vunpack.c.l.s4 1966171168
        %v973 = vunpack.c.0.s8 %v972
        %v974 = vlaneseq
        %v975 = vshrl.u32 %v974, 7
        %v976 = vsub.s32 %v973, %v975
        %v977 = vrot.slane %v969, %v976
        %v979 = vunpack.c.l.s4 1966171168
        %v980 = vunpack.c.0.s8 %v979
        %v981 = vlaneseq
        %v982 = vshrl.u32 %v981, 7
        %v983 = vsub.s32 %v980, %v982
        %v984 = vrot.slane %v970, %v983
        %v985 = vcombine.low %v977, %v984
        %v987 = vunpack.c.l.s4 1966171168
        %v988 = vunpack.c.0.s8 %v987
        %v989 = vlaneseq
        %v990 = vshrl.u32 %v989, 7
        %v991 = vsub.s32 %v988, %v990
        %v992 = vrot.slane %v985, %v991
        %v994 = vlaneseq
        %vm995 = vcmp.ge.s32.totalorder %v994, 0
        %vm996 = vcmp.lt.s32.totalorder %v994, 512
        %vm997 = vmand %vm995, %vm996
        %998 = vst.msk [vmem:[%s251] sm:$0xf] %vm997, %v992
        %s999 = smul.u32 4, %s18
        %p1000 = scmp.lt.s32.totalorder %s999, 7
        %s1001 = scalar_select %p1000, %s999, 7
        %s1002 = scalar_lea.vmem %s5, %s1001
        // Predicated region
        $region64: #{fno3d_forward.19} parent=58 // pred_check
          %p1003 = pneg %p146
        $region65: #{fno3d_forward.19} parent=58 // pred_check_branch
          %1005 = sbr.rel (%p1003) target = $region67
        $region66: #{fno3d_forward.19} parent=58 // pred_region
          %s1006 = smul.u32 4, %s18
        $region67: #{fno3d_forward.19} parent=58 // pred_fallthru
          _
      $region59: #{fno3d_forward.19} parent=5 // pred_fallthru
        _
      %p1007 = scmp.le.s32.totalorder 2, %s13
      // Predicated region
      $region68: #{fno3d_forward.19} parent=5 // pred_check
        %p1008 = pneg %p1007
      $region69: #{fno3d_forward.19} parent=5 // pred_check_branch
        %1010 = sbr.rel (%p1008) target = $region71
      $region70: #{fno3d_forward.19} parent=5 // pred_region
        %s1011 = ssub.s32 %s13, 2
        // Predicated region
        $region72: #{fno3d_forward.19} parent=70 // pred_check
          %p1012 = pneg %p152
        $region73: #{fno3d_forward.19} parent=70 // pred_check_branch
          %1014 = sbr.rel (%p1012) target = $region75
        $region74: #{fno3d_forward.19} parent=70 // pred_region
          %s1015 = smul.u32 4, %s19
          %p1016 = scmp.lt.s32.totalorder %s1015, 7
          %s1017 = scalar_select %p1016, %s1015, 7
          %s1018 = scalar_lea.vmem %s5, %s1017
        $region75: #{fno3d_forward.19} parent=70 // pred_fallthru
          _
      $region71: #{fno3d_forward.19} parent=5 // pred_fallthru
        _
    $region6: #{fno3d_forward.19} parent=1 // loop_footer
      %s17 = sadd.s32 1, %s13
    $region7: #{fno3d_forward.19} parent=1 // loop_footer_branch
      %12 = sbr.rel target = $region3
    $region8: #{fno3d_forward.19} parent=1 // loop_exit
      _

</llo_original>
